<compile_context>
chip_gen: v7x
topology: tpu7x:2x2x1
jax: 0.10.0
libtpu: 0.0.40
codegen_flags: <defaults>
</compile_context>

<pallas_src>
import math
import functools

import numpy as np
import jax
import jax.numpy as jnp
from jax.experimental import pallas as pl
from jax.experimental.pallas import tpu as pltpu


def _layer_norm(v, g, b, eps=1e-5):
    mu = jnp.mean(v, axis=-1, keepdims=True)
    var = jnp.mean((v - mu) ** 2, axis=-1, keepdims=True)   # biased var, like torch
    return (v - mu) * jax.lax.rsqrt(var + eps) * g + b


def _bf16(x):
    return x.astype(jnp.bfloat16)


def fused_decoder_kernel(
    x_ref, maskb_ref, mem_ref, smaskb_ref,
    wq1_ref, wk1_ref, wo1_ref,
    wq2_ref, wk2_ref, wo2_ref,
    w1_ref, bw1_ref, w2_ref, vecs_ref,
    out_ref, *, n_head):
    """One grid step = one (batch element, decoder layer)."""
    l = pl.program_id(1)

    # Layer 0: seed the VMEM-resident output block with the embedded input.
    # The output block index is constant along the layer axis, so it acts as
    # the carried activation between layers (no HBM round-trips).
    @pl.when(l == 0)
    def _():
        out_ref[0] = x_ref[0]

    x = out_ref[0]            # (S, D)  float32 running activation
    mem_bf = mem_ref[0]       # (Sm, D) encoder memory, already bf16
    mask_b = maskb_ref[0]     # (S, S)  additive bias (0 / -1e9)
    smask_b = smaskb_ref[0]   # (S, Sm) additive bias
    vecs = vecs_ref[0]        # (8, D)  packed LN gammas/betas + FFN out bias

    d_model = x.shape[-1]
    d_k = d_model // n_head

    g1, b1 = vecs[0:1], vecs[1:2]
    g2, b2 = vecs[2:3], vecs[3:4]
    g3, b3 = vecs[4:5], vecs[5:6]
    bw2 = vecs[6:7]

    def mha(q_in, bias, wq, wk_scaled, wo, g, b, kv_bf=None):
        """kv_bf=None -> self-attention (K/V from q_in; V shares the Q matmul,
        since the module computes V with W_Q and the 1/sqrt(d_k) scale has
        been folded into W_K)."""
        residual = q_in
        q_bf = _bf16(q_in)
        self_attn = kv_bf is None
        if self_attn:
            kv_bf = q_bf
        # Full-width projections: bf16 in / f32 accumulation on the MXU,
        # weights already (in, out) so no in-kernel weight transpose.
        Q = jnp.dot(q_bf, wq, preferred_element_type=jnp.float32)
        K = jnp.dot(kv_bf, wk_scaled, preferred_element_type=jnp.float32)
        V = Q if self_attn else jnp.dot(kv_bf, wq,
                                        preferred_element_type=jnp.float32)
        Qb, Kb, Vb = _bf16(Q), _bf16(K), _bf16(V)
        out = jnp.zeros_like(residual)
        for h in range(n_head):                       # small, static unroll
            sl = slice(h * d_k, (h + 1) * d_k)
            s = jax.lax.dot_general(                  # Qh @ Kh.T
                Qb[:, sl], Kb[:, sl], (((1,), (1,)), ((), ())),
                preferred_element_type=jnp.float32)
            s = s + bias
            m = jnp.max(s, axis=-1, keepdims=True)
            e = jnp.exp(s - m)
            p = e * pl.reciprocal(jnp.sum(e, axis=-1, keepdims=True), approx=True)
            ctx = jnp.dot(_bf16(p), Vb[:, sl], preferred_element_type=jnp.float32)
            # Project this head's context with its W_O row-slice and accumulate:
            # replaces the concatenate + single big projection (no relayout copy).
            out = out + jnp.dot(_bf16(ctx), wo[sl, :],
                                preferred_element_type=jnp.float32)
        return _layer_norm(out + residual, g, b)

    # masked self-attention
    x = mha(x, mask_b, wq1_ref[0], wk1_ref[0], wo1_ref[0], g1, b1)
    # cross-attention over encoder memory
    x = mha(x, smask_b, wq2_ref[0], wk2_ref[0], wo2_ref[0], g2, b2, kv_bf=mem_bf)
    # position-wise feed-forward
    h1 = jnp.dot(_bf16(x), w1_ref[0], preferred_element_type=jnp.float32) + bw1_ref[0]
    h1 = jnp.maximum(h1, 0.0)
    h2 = jnp.dot(_bf16(h1), w2_ref[0], preferred_element_type=jnp.float32) + bw2
    out_ref[0] = _layer_norm(h2 + x, g3, b3)


def decoder_forward(tokens, mask, memory, src_mask, params, n_head):
    """Embedding + positional encoding in plain JAX, then one fused pallas_call
    that runs every decoder layer for every batch element."""
    d_model = params["emb"].shape[1]
    S = tokens.shape[1]
    d_k = d_model // n_head
    # TODO(synk): embedding gather + positional add stay as plain-JAX glue (a
    # data-dependent row gather has no cheap BlockSpec form at this size).
    x = (params["emb"][tokens] * math.sqrt(d_model)
         + params["pe"][:S][None]).astype(jnp.float32)

    layers = params["layers"]
    L = len(layers)
    B, _, D = x.shape
    Sm = memory.shape[1]
    Dff = layers[0]["w1"].shape[0]

    # --- wrapper-side weight plumbing (free): transpose to (in,out), cast the
    # matmul weights to bf16, stack along a leading layer axis ---------------
    def w_t(name, scale=1.0):
        return jnp.stack([lp[name].T * scale for lp in layers]).astype(jnp.bfloat16)

    inv_sqrt_dk = 1.0 / math.sqrt(d_k)
    wq1, wk1, wo1 = w_t("wq1"), w_t("wk1", inv_sqrt_dk), w_t("wo1")
    wq2, wk2, wo2 = w_t("wq2"), w_t("wk2", inv_sqrt_dk), w_t("wo2")
    w1, w2 = w_t("w1"), w_t("w2")
    bw1 = jnp.stack([lp["b1"] for lp in layers]).astype(jnp.float32)   # (L, 1, Dff)

    # pack the seven D-length per-layer vectors into one (L, 8, D) tensor
    def pack_vecs(lp):
        rows = [lp["ln1_g"], lp["ln1_b"], lp["ln2_g"], lp["ln2_b"],
                lp["ln3_g"], lp["ln3_b"], lp["b2"],
                jnp.zeros((1, d_model), jnp.float32)]
        return jnp.concatenate(rows, axis=0)
    vecs = jnp.stack([pack_vecs(lp) for lp in layers]).astype(jnp.float32)

    # masks -> finite additive biases (avoids -inf/NaN and the in-kernel select)
    neg = jnp.float32(-1e9)
    mask_bias = (mask == 1.0).astype(jnp.float32) * neg
    smask_bias = (src_mask == 1.0).astype(jnp.float32) * neg

    mem_bf = memory.astype(jnp.bfloat16)   # kernel consumes it in bf16 anyway

    bmap = lambda b, l: (b, 0, 0)   # batch-indexed, constant over the layer axis
    lmap = lambda b, l: (l, 0, 0)   # layer-indexed weight pipeline

    in_specs = [
        pl.BlockSpec((1, S, D), bmap),      # x (embedded input)
        pl.BlockSpec((1, S, S), bmap),      # self-attn additive bias
        pl.BlockSpec((1, Sm, D), bmap),     # encoder memory (bf16)
        pl.BlockSpec((1, S, Sm), bmap),     # cross-attn additive bias
        pl.BlockSpec((1, D, D), lmap), pl.BlockSpec((1, D, D), lmap),
        pl.BlockSpec((1, D, D), lmap),
        pl.BlockSpec((1, D, D), lmap), pl.BlockSpec((1, D, D), lmap),
        pl.BlockSpec((1, D, D), lmap),
        pl.BlockSpec((1, D, Dff), lmap), pl.BlockSpec((1, 1, Dff), lmap),
        pl.BlockSpec((1, Dff, D), lmap),
        pl.BlockSpec((1, 8, D), lmap),      # packed LN/bias vectors
    ]

    # Explicit scoped-VMEM budget: 2x (double-buffer) per-step block bytes + headroom,
    # clamped so it is safe on v5e/v6e (128 MiB) and v7x (64 MiB) alike.
    f32b, bf16b = 4, 2
    step_bytes = ((2 * S * D + S * S + S * Sm + 8 * D + Dff) * f32b
                  + (Sm * D + 6 * D * D + 2 * D * Dff) * bf16b)
    vmem_limit = int(min(max(2 * step_bytes + (2 << 20), 8 << 20), 64 << 20))

    kernel = functools.partial(fused_decoder_kernel, n_head=n_head)
    return pl.pallas_call(
        kernel,
        out_shape=jax.ShapeDtypeStruct((B, S, D), jnp.float32),
        grid=(B, L),
        in_specs=in_specs,
        out_specs=pl.BlockSpec((1, S, D), bmap),
        compiler_params=pltpu.CompilerParams(
            dimension_semantics=("parallel", "arbitrary"),
            vmem_limit_bytes=vmem_limit,
        ),
    )(x, mask_bias, mem_bf, smask_bias,
      wq1, wk1, wo1,
      wq2, wk2, wo2,
      w1, bw1, w2, vecs)


# -------- pure-JAX reference (for verification only) --------
def ref_decoder(tokens, mask, memory, src_mask, params, n_head):
    d_model = params["emb"].shape[1]
    S = tokens.shape[1]
    x = params["emb"][tokens] * math.sqrt(d_model) + params["pe"][:S][None]

    def ln(v, g, b):
        mu = v.mean(-1, keepdims=True)
        var = ((v - mu) ** 2).mean(-1, keepdims=True)
        return (v - mu) / jnp.sqrt(var + 1e-5) * g + b

    def mha(q_in, kv_in, msk, wq, wk, wo, g, b):
        B, Sq, D = q_in.shape
        d_k = D // n_head
        Q, K, V = q_in @ wq.T, kv_in @ wk.T, kv_in @ wq.T

        def split(t):
            return t.reshape(B, -1, n_head, d_k).transpose(0, 2, 1, 3)

        Qh, Kh, Vh = split(Q), split(K), split(V)
        scores = jnp.einsum("bhqd,bhkd->bhqk", Qh, Kh) / math.sqrt(d_k)
        scores = jnp.where(msk[:, None] == 1.0, -jnp.inf, scores)
        p = jax.nn.softmax(scores, axis=-1)
        ctx = jnp.einsum("bhqk,bhkd->bhqd", p, Vh)
        concat = ctx.transpose(0, 2, 1, 3).reshape(B, Sq, D)
        return ln(concat @ wo.T + q_in, g, b)

    for lp in params["layers"]:
        x = mha(x, x, mask, lp["wq1"], lp["wk1"], lp["wo1"], lp["ln1_g"], lp["ln1_b"])
        x = mha(x, memory, src_mask, lp["wq2"], lp["wk2"], lp["wo2"],
                lp["ln2_g"], lp["ln2_b"])
        h = jnp.maximum(x @ lp["w1"].T + lp["b1"], 0.0)
        x = ln(h @ lp["w2"].T + lp["b2"] + x, lp["ln3_g"], lp["ln3_b"])
    return x


if __name__ == "__main__":
    vocab, d_model, n_head, d_ff, N = 50, 32, 4, 64, 2
    B, S, Sm, max_len = 2, 8, 8, 64

    key = jax.random.PRNGKey(0)
    keys = iter(jax.random.split(key, 64))

    def nrm(shape, scale=0.02):
        return jax.random.normal(next(keys), shape, jnp.float32) * scale

    # fixed positional encoding (same formula as the PyTorch module)
    position = np.arange(max_len, dtype=np.float64)[:, None]
    div_term = np.exp(np.arange(0, d_model, 2, dtype=np.float64)
                      * -(np.log(10000.0) / d_model))
    pe = np.zeros((max_len, d_model), np.float32)
    pe[:, 0::2] = np.sin(position * div_term)
    pe[:, 1::2] = np.cos(position * div_term)

    layers = []
    for _ in range(N):
        layers.append(dict(
            wq1=nrm((d_model, d_model)), wk1=nrm((d_model, d_model)),
            wo1=nrm((d_model, d_model)),
            ln1_g=jnp.ones((1, d_model), jnp.float32),
            ln1_b=jnp.zeros((1, d_model), jnp.float32),
            wq2=nrm((d_model, d_model)), wk2=nrm((d_model, d_model)),
            wo2=nrm((d_model, d_model)),
            ln2_g=jnp.ones((1, d_model), jnp.float32),
            ln2_b=jnp.zeros((1, d_model), jnp.float32),
            w1=nrm((d_ff, d_model)), b1=nrm((1, d_ff)),
            w2=nrm((d_model, d_ff)), b2=nrm((1, d_model)),
            ln3_g=jnp.ones((1, d_model), jnp.float32),
            ln3_b=jnp.zeros((1, d_model), jnp.float32),
        ))
        # W_V is declared in the PyTorch module but never used (V = W_Q(V)); omitted.
    params = dict(emb=nrm((vocab, d_model), 1.0), pe=jnp.asarray(pe), layers=layers)

    tokens = jax.random.randint(next(keys), (B, S), 0, vocab, jnp.int32)
    memory = nrm((B, Sm, d_model), 1.0)
    causal = jnp.triu(jnp.ones((S, S), jnp.float32), k=1)   # 1 above diag => masked
    mask = jnp.broadcast_to(causal, (B, S, S))
    src_mask = jnp.zeros((B, S, Sm), jnp.float32)

    out = decoder_forward(tokens, mask, memory, src_mask, params, n_head)
    out = jax.block_until_ready(out)

    ref = ref_decoder(tokens, mask, memory, src_mask, params, n_head)
    np.testing.assert_allclose(np.asarray(out), np.asarray(ref), rtol=2e-2, atol=2e-2)
    print("KERNEL_OK")
</pallas_src>

<mosaic_0001>
module attributes {stable_mosaic.version = 11 : i64} {
  func.func @fused_decoder_kernel(%arg0: i32, %arg1: i32, %arg2: memref<1x8x32xf32, #tpu.memory_space<vmem>>, %arg3: memref<1x8x8xf32, #tpu.memory_space<vmem>>, %arg4: memref<1x8x32xbf16, #tpu.memory_space<vmem>>, %arg5: memref<1x8x8xf32, #tpu.memory_space<vmem>>, %arg6: memref<1x32x32xbf16, #tpu.memory_space<vmem>>, %arg7: memref<1x32x32xbf16, #tpu.memory_space<vmem>>, %arg8: memref<1x32x32xbf16, #tpu.memory_space<vmem>>, %arg9: memref<1x32x32xbf16, #tpu.memory_space<vmem>>, %arg10: memref<1x32x32xbf16, #tpu.memory_space<vmem>>, %arg11: memref<1x32x32xbf16, #tpu.memory_space<vmem>>, %arg12: memref<1x32x64xbf16, #tpu.memory_space<vmem>>, %arg13: memref<1x1x64xf32, #tpu.memory_space<vmem>>, %arg14: memref<1x64x32xbf16, #tpu.memory_space<vmem>>, %arg15: memref<1x8x32xf32, #tpu.memory_space<vmem>>, %arg16: memref<1x8x32xf32, #tpu.memory_space<vmem>>) attributes {dimension_semantics = [#tpu.dimension_semantics<parallel>, #tpu.dimension_semantics<arbitrary>], iteration_bounds = array<i64: 2, 2>, scalar_prefetch = 0 : i64, scratch_operands = 0 : i64, tpu.core_type = #tpu.core_type<tc>, window_params = [{transform_indices = @transform_0, window_bounds = array<i64: 1, 8, 32>}, {transform_indices = @transform_1, window_bounds = array<i64: 1, 8, 8>}, {transform_indices = @transform_2, window_bounds = array<i64: 1, 8, 32>}, {transform_indices = @transform_3, window_bounds = array<i64: 1, 8, 8>}, {transform_indices = @transform_4, window_bounds = array<i64: 1, 32, 32>}, {transform_indices = @transform_5, window_bounds = array<i64: 1, 32, 32>}, {transform_indices = @transform_6, window_bounds = array<i64: 1, 32, 32>}, {transform_indices = @transform_7, window_bounds = array<i64: 1, 32, 32>}, {transform_indices = @transform_8, window_bounds = array<i64: 1, 32, 32>}, {transform_indices = @transform_9, window_bounds = array<i64: 1, 32, 32>}, {transform_indices = @transform_10, window_bounds = array<i64: 1, 32, 64>}, {transform_indices = @transform_11, window_bounds = array<i64: 1, 1, 64>}, {transform_indices = @transform_12, window_bounds = array<i64: 1, 64, 32>}, {transform_indices = @transform_13, window_bounds = array<i64: 1, 8, 32>}, {transform_indices = @transform_14, window_bounds = array<i64: 1, 8, 32>}]} {
    %c0_i32 = arith.constant 0 : i32
    %0 = arith.cmpi eq, %arg1, %c0_i32 : i32
    %1 = arith.extui %0 : i1 to i32
    %c0_i32_0 = arith.constant 0 : i32
    %2 = arith.cmpi ne, %1, %c0_i32_0 : i32
    scf.if %2 {
      %c0_109 = arith.constant 0 : index
      %c0_110 = arith.constant 0 : index
      %c0_111 = arith.constant 0 : index
      %303 = vector.load %arg2[%c0_109, %c0_110, %c0_111] : memref<1x8x32xf32, #tpu.memory_space<vmem>>, vector<1x8x32xf32>
      %304 = vector.shape_cast %303 : vector<1x8x32xf32> to vector<8x32xf32>
      %c0_112 = arith.constant 0 : index
      %c0_113 = arith.constant 0 : index
      %c0_114 = arith.constant 0 : index
      %305 = vector.load %arg16[%c0_112, %c0_113, %c0_114] : memref<1x8x32xf32, #tpu.memory_space<vmem>>, vector<1x8x32xf32>
      %306 = vector.shape_cast %305 : vector<1x8x32xf32> to vector<8x32xf32>
      %307 = vector.shape_cast %304 : vector<8x32xf32> to vector<1x8x32xf32>
      tpu.vector_store %arg16[%c0_112, %c0_113, %c0_114], %307 {strides = array<i32>} : memref<1x8x32xf32, #tpu.memory_space<vmem>>, vector<1x8x32xf32>,
    } else {
    }
    %c0 = arith.constant 0 : index
    %c0_1 = arith.constant 0 : index
    %c0_2 = arith.constant 0 : index
    %3 = vector.load %arg16[%c0, %c0_1, %c0_2] : memref<1x8x32xf32, #tpu.memory_space<vmem>>, vector<1x8x32xf32>
    %4 = vector.shape_cast %3 : vector<1x8x32xf32> to vector<8x32xf32>
    %c0_3 = arith.constant 0 : index
    %c0_4 = arith.constant 0 : index
    %c0_5 = arith.constant 0 : index
    %5 = vector.load %arg4[%c0_3, %c0_4, %c0_5] : memref<1x8x32xbf16, #tpu.memory_space<vmem>>, vector<1x8x32xbf16>
    %6 = vector.shape_cast %5 : vector<1x8x32xbf16> to vector<8x32xbf16>
    %c0_6 = arith.constant 0 : index
    %c0_7 = arith.constant 0 : index
    %c0_8 = arith.constant 0 : index
    %7 = vector.load %arg3[%c0_6, %c0_7, %c0_8] : memref<1x8x8xf32, #tpu.memory_space<vmem>>, vector<1x8x8xf32>
    %8 = vector.shape_cast %7 : vector<1x8x8xf32> to vector<8x8xf32>
    %c0_9 = arith.constant 0 : index
    %c0_10 = arith.constant 0 : index
    %c0_11 = arith.constant 0 : index
    %9 = vector.load %arg5[%c0_9, %c0_10, %c0_11] : memref<1x8x8xf32, #tpu.memory_space<vmem>>, vector<1x8x8xf32>
    %10 = vector.shape_cast %9 : vector<1x8x8xf32> to vector<8x8xf32>
    %c0_12 = arith.constant 0 : index
    %c0_13 = arith.constant 0 : index
    %c0_14 = arith.constant 0 : index
    %11 = vector.load %arg15[%c0_12, %c0_13, %c0_14] : memref<1x8x32xf32, #tpu.memory_space<vmem>>, vector<1x8x32xf32>
    %12 = vector.shape_cast %11 : vector<1x8x32xf32> to vector<8x32xf32>
    %13 = vector.extract_strided_slice %12 {offsets = [0, 0], sizes = [1, 32], strides = [1, 1]} : vector<8x32xf32> to vector<1x32xf32>
    %14 = vector.extract_strided_slice %12 {offsets = [1, 0], sizes = [1, 32], strides = [1, 1]} : vector<8x32xf32> to vector<1x32xf32>
    %15 = vector.extract_strided_slice %12 {offsets = [2, 0], sizes = [1, 32], strides = [1, 1]} : vector<8x32xf32> to vector<1x32xf32>
    %16 = vector.extract_strided_slice %12 {offsets = [3, 0], sizes = [1, 32], strides = [1, 1]} : vector<8x32xf32> to vector<1x32xf32>
    %17 = vector.extract_strided_slice %12 {offsets = [4, 0], sizes = [1, 32], strides = [1, 1]} : vector<8x32xf32> to vector<1x32xf32>
    %18 = vector.extract_strided_slice %12 {offsets = [5, 0], sizes = [1, 32], strides = [1, 1]} : vector<8x32xf32> to vector<1x32xf32>
    %19 = vector.extract_strided_slice %12 {offsets = [6, 0], sizes = [1, 32], strides = [1, 1]} : vector<8x32xf32> to vector<1x32xf32>
    %c0_15 = arith.constant 0 : index
    %c0_16 = arith.constant 0 : index
    %c0_17 = arith.constant 0 : index
    %20 = vector.load %arg6[%c0_15, %c0_16, %c0_17] : memref<1x32x32xbf16, #tpu.memory_space<vmem>>, vector<1x32x32xbf16>
    %21 = vector.shape_cast %20 : vector<1x32x32xbf16> to vector<32x32xbf16>
    %c0_18 = arith.constant 0 : index
    %c0_19 = arith.constant 0 : index
    %c0_20 = arith.constant 0 : index
    %22 = vector.load %arg7[%c0_18, %c0_19, %c0_20] : memref<1x32x32xbf16, #tpu.memory_space<vmem>>, vector<1x32x32xbf16>
    %23 = vector.shape_cast %22 : vector<1x32x32xbf16> to vector<32x32xbf16>
    %c0_21 = arith.constant 0 : index
    %c0_22 = arith.constant 0 : index
    %c0_23 = arith.constant 0 : index
    %24 = vector.load %arg8[%c0_21, %c0_22, %c0_23] : memref<1x32x32xbf16, #tpu.memory_space<vmem>>, vector<1x32x32xbf16>
    %25 = vector.shape_cast %24 : vector<1x32x32xbf16> to vector<32x32xbf16>
    %26 = arith.truncf %4 : vector<8x32xf32> to vector<8x32xbf16>
    %cst = arith.constant dense<0.000000e+00> : vector<8x32xf32>
    %27 = tpu.matmul %26, %21, %cst {dimension_numbers = #tpu.dot_dimension_numbers<[1], [0], [0], [1], [0, 0, 1, 1], [], []>} : vector<8x32xbf16>, vector<32x32xbf16>, vector<8x32xf32> -> vector<8x32xf32>
    %cst_24 = arith.constant dense<0.000000e+00> : vector<8x32xf32>
    %28 = tpu.matmul %26, %23, %cst_24 {dimension_numbers = #tpu.dot_dimension_numbers<[1], [0], [0], [1], [0, 0, 1, 1], [], []>} : vector<8x32xbf16>, vector<32x32xbf16>, vector<8x32xf32> -> vector<8x32xf32>
    %29 = arith.truncf %27 : vector<8x32xf32> to vector<8x32xbf16>
    %30 = arith.truncf %28 : vector<8x32xf32> to vector<8x32xbf16>
    %31 = arith.truncf %27 : vector<8x32xf32> to vector<8x32xbf16>
    %cst_25 = arith.constant 0.000000e+00 : f32
    %32 = vector.broadcast %cst_25 : f32 to vector<8x32xf32>
    %33 = vector.extract_strided_slice %29 {offsets = [0, 0], sizes = [8, 8], strides = [1, 1]} : vector<8x32xbf16> to vector<8x8xbf16>
    %34 = vector.extract_strided_slice %30 {offsets = [0, 0], sizes = [8, 8], strides = [1, 1]} : vector<8x32xbf16> to vector<8x8xbf16>
    %cst_26 = arith.constant dense<0.000000e+00> : vector<8x8xf32>
    %35 = tpu.matmul %33, %34, %cst_26 {dimension_numbers = #tpu.dot_dimension_numbers<[1], [1], [0], [0], [0, 0, 1, 0], [], []>} : vector<8x8xbf16>, vector<8x8xbf16>, vector<8x8xf32> -> vector<8x8xf32>
    %36 = arith.addf %35, %8 : vector<8x8xf32>
    %cst_27 = arith.constant dense<0xFF800000> : vector<8xf32>
    %37 = vector.multi_reduction <maximumf>, %36, %cst_27 [1] : vector<8x8xf32> to vector<8xf32>
    %38 = vector.shape_cast %37 : vector<8xf32> to vector<8x1xf32>
    %39 = vector.broadcast %38 : vector<8x1xf32> to vector<8x8xf32>
    %40 = arith.subf %36, %39 : vector<8x8xf32>
    %41 = math.exp %40 : vector<8x8xf32>
    %cst_28 = arith.constant dense<0.000000e+00> : vector<8xf32>
    %42 = vector.multi_reduction <add>, %41, %cst_28 [1] : vector<8x8xf32> to vector<8xf32>
    %43 = vector.shape_cast %42 : vector<8xf32> to vector<8x1xf32>
    %44 = tpu.reciprocal %43 {approx = true} : vector<8x1xf32> -> vector<8x1xf32>
    %45 = vector.broadcast %44 : vector<8x1xf32> to vector<8x8xf32>
    %46 = arith.mulf %41, %45 : vector<8x8xf32>
    %47 = arith.truncf %46 : vector<8x8xf32> to vector<8x8xbf16>
    %48 = vector.extract_strided_slice %31 {offsets = [0, 0], sizes = [8, 8], strides = [1, 1]} : vector<8x32xbf16> to vector<8x8xbf16>
    %cst_29 = arith.constant dense<0.000000e+00> : vector<8x8xf32>
    %49 = tpu.matmul %47, %48, %cst_29 {dimension_numbers = #tpu.dot_dimension_numbers<[1], [0], [0], [1], [0, 0, 1, 1], [], []>} : vector<8x8xbf16>, vector<8x8xbf16>, vector<8x8xf32> -> vector<8x8xf32>
    %50 = arith.truncf %49 : vector<8x8xf32> to vector<8x8xbf16>
    %51 = vector.extract_strided_slice %25 {offsets = [0, 0], sizes = [8, 32], strides = [1, 1]} : vector<32x32xbf16> to vector<8x32xbf16>
    %cst_30 = arith.constant dense<0.000000e+00> : vector<8x32xf32>
    %52 = tpu.matmul %50, %51, %cst_30 {dimension_numbers = #tpu.dot_dimension_numbers<[1], [0], [0], [1], [0, 0, 1, 1], [], []>} : vector<8x8xbf16>, vector<8x32xbf16>, vector<8x32xf32> -> vector<8x32xf32>
    %53 = arith.addf %32, %52 : vector<8x32xf32>
    %54 = vector.extract_strided_slice %29 {offsets = [0, 8], sizes = [8, 8], strides = [1, 1]} : vector<8x32xbf16> to vector<8x8xbf16>
    %55 = vector.extract_strided_slice %30 {offsets = [0, 8], sizes = [8, 8], strides = [1, 1]} : vector<8x32xbf16> to vector<8x8xbf16>
    %cst_31 = arith.constant dense<0.000000e+00> : vector<8x8xf32>
    %56 = tpu.matmul %54, %55, %cst_31 {dimension_numbers = #tpu.dot_dimension_numbers<[1], [1], [0], [0], [0, 0, 1, 0], [], []>} : vector<8x8xbf16>, vector<8x8xbf16>, vector<8x8xf32> -> vector<8x8xf32>
    %57 = arith.addf %56, %8 : vector<8x8xf32>
    %cst_32 = arith.constant dense<0xFF800000> : vector<8xf32>
    %58 = vector.multi_reduction <maximumf>, %57, %cst_32 [1] : vector<8x8xf32> to vector<8xf32>
    %59 = vector.shape_cast %58 : vector<8xf32> to vector<8x1xf32>
    %60 = vector.broadcast %59 : vector<8x1xf32> to vector<8x8xf32>
    %61 = arith.subf %57, %60 : vector<8x8xf32>
    %62 = math.exp %61 : vector<8x8xf32>
    %cst_33 = arith.constant dense<0.000000e+00> : vector<8xf32>
    %63 = vector.multi_reduction <add>, %62, %cst_33 [1] : vector<8x8xf32> to vector<8xf32>
    %64 = vector.shape_cast %63 : vector<8xf32> to vector<8x1xf32>
    %65 = tpu.reciprocal %64 {approx = true} : vector<8x1xf32> -> vector<8x1xf32>
    %66 = vector.broadcast %65 : vector<8x1xf32> to vector<8x8xf32>
    %67 = arith.mulf %62, %66 : vector<8x8xf32>
    %68 = arith.truncf %67 : vector<8x8xf32> to vector<8x8xbf16>
    %69 = vector.extract_strided_slice %31 {offsets = [0, 8], sizes = [8, 8], strides = [1, 1]} : vector<8x32xbf16> to vector<8x8xbf16>
    %cst_34 = arith.constant dense<0.000000e+00> : vector<8x8xf32>
    %70 = tpu.matmul %68, %69, %cst_34 {dimension_numbers = #tpu.dot_dimension_numbers<[1], [0], [0], [1], [0, 0, 1, 1], [], []>} : vector<8x8xbf16>, vector<8x8xbf16>, vector<8x8xf32> -> vector<8x8xf32>
    %71 = arith.truncf %70 : vector<8x8xf32> to vector<8x8xbf16>
    %72 = vector.extract_strided_slice %25 {offsets = [8, 0], sizes = [8, 32], strides = [1, 1]} : vector<32x32xbf16> to vector<8x32xbf16>
    %cst_35 = arith.constant dense<0.000000e+00> : vector<8x32xf32>
    %73 = tpu.matmul %71, %72, %cst_35 {dimension_numbers = #tpu.dot_dimension_numbers<[1], [0], [0], [1], [0, 0, 1, 1], [], []>} : vector<8x8xbf16>, vector<8x32xbf16>, vector<8x32xf32> -> vector<8x32xf32>
    %74 = arith.addf %53, %73 : vector<8x32xf32>
    %75 = vector.extract_strided_slice %29 {offsets = [0, 16], sizes = [8, 8], strides = [1, 1]} : vector<8x32xbf16> to vector<8x8xbf16>
    %76 = vector.extract_strided_slice %30 {offsets = [0, 16], sizes = [8, 8], strides = [1, 1]} : vector<8x32xbf16> to vector<8x8xbf16>
    %cst_36 = arith.constant dense<0.000000e+00> : vector<8x8xf32>
    %77 = tpu.matmul %75, %76, %cst_36 {dimension_numbers = #tpu.dot_dimension_numbers<[1], [1], [0], [0], [0, 0, 1, 0], [], []>} : vector<8x8xbf16>, vector<8x8xbf16>, vector<8x8xf32> -> vector<8x8xf32>
    %78 = arith.addf %77, %8 : vector<8x8xf32>
    %cst_37 = arith.constant dense<0xFF800000> : vector<8xf32>
    %79 = vector.multi_reduction <maximumf>, %78, %cst_37 [1] : vector<8x8xf32> to vector<8xf32>
    %80 = vector.shape_cast %79 : vector<8xf32> to vector<8x1xf32>
    %81 = vector.broadcast %80 : vector<8x1xf32> to vector<8x8xf32>
    %82 = arith.subf %78, %81 : vector<8x8xf32>
    %83 = math.exp %82 : vector<8x8xf32>
    %cst_38 = arith.constant dense<0.000000e+00> : vector<8xf32>
    %84 = vector.multi_reduction <add>, %83, %cst_38 [1] : vector<8x8xf32> to vector<8xf32>
    %85 = vector.shape_cast %84 : vector<8xf32> to vector<8x1xf32>
    %86 = tpu.reciprocal %85 {approx = true} : vector<8x1xf32> -> vector<8x1xf32>
    %87 = vector.broadcast %86 : vector<8x1xf32> to vector<8x8xf32>
    %88 = arith.mulf %83, %87 : vector<8x8xf32>
    %89 = arith.truncf %88 : vector<8x8xf32> to vector<8x8xbf16>
    %90 = vector.extract_strided_slice %31 {offsets = [0, 16], sizes = [8, 8], strides = [1, 1]} : vector<8x32xbf16> to vector<8x8xbf16>
    %cst_39 = arith.constant dense<0.000000e+00> : vector<8x8xf32>
    %91 = tpu.matmul %89, %90, %cst_39 {dimension_numbers = #tpu.dot_dimension_numbers<[1], [0], [0], [1], [0, 0, 1, 1], [], []>} : vector<8x8xbf16>, vector<8x8xbf16>, vector<8x8xf32> -> vector<8x8xf32>
    %92 = arith.truncf %91 : vector<8x8xf32> to vector<8x8xbf16>
    %93 = vector.extract_strided_slice %25 {offsets = [16, 0], sizes = [8, 32], strides = [1, 1]} : vector<32x32xbf16> to vector<8x32xbf16>
    %cst_40 = arith.constant dense<0.000000e+00> : vector<8x32xf32>
    %94 = tpu.matmul %92, %93, %cst_40 {dimension_numbers = #tpu.dot_dimension_numbers<[1], [0], [0], [1], [0, 0, 1, 1], [], []>} : vector<8x8xbf16>, vector<8x32xbf16>, vector<8x32xf32> -> vector<8x32xf32>
    %95 = arith.addf %74, %94 : vector<8x32xf32>
    %96 = vector.extract_strided_slice %29 {offsets = [0, 24], sizes = [8, 8], strides = [1, 1]} : vector<8x32xbf16> to vector<8x8xbf16>
    %97 = vector.extract_strided_slice %30 {offsets = [0, 24], sizes = [8, 8], strides = [1, 1]} : vector<8x32xbf16> to vector<8x8xbf16>
    %cst_41 = arith.constant dense<0.000000e+00> : vector<8x8xf32>
    %98 = tpu.matmul %96, %97, %cst_41 {dimension_numbers = #tpu.dot_dimension_numbers<[1], [1], [0], [0], [0, 0, 1, 0], [], []>} : vector<8x8xbf16>, vector<8x8xbf16>, vector<8x8xf32> -> vector<8x8xf32>
    %99 = arith.addf %98, %8 : vector<8x8xf32>
    %cst_42 = arith.constant dense<0xFF800000> : vector<8xf32>
    %100 = vector.multi_reduction <maximumf>, %99, %cst_42 [1] : vector<8x8xf32> to vector<8xf32>
    %101 = vector.shape_cast %100 : vector<8xf32> to vector<8x1xf32>
    %102 = vector.broadcast %101 : vector<8x1xf32> to vector<8x8xf32>
    %103 = arith.subf %99, %102 : vector<8x8xf32>
    %104 = math.exp %103 : vector<8x8xf32>
    %cst_43 = arith.constant dense<0.000000e+00> : vector<8xf32>
    %105 = vector.multi_reduction <add>, %104, %cst_43 [1] : vector<8x8xf32> to vector<8xf32>
    %106 = vector.shape_cast %105 : vector<8xf32> to vector<8x1xf32>
    %107 = tpu.reciprocal %106 {approx = true} : vector<8x1xf32> -> vector<8x1xf32>
    %108 = vector.broadcast %107 : vector<8x1xf32> to vector<8x8xf32>
    %109 = arith.mulf %104, %108 : vector<8x8xf32>
    %110 = arith.truncf %109 : vector<8x8xf32> to vector<8x8xbf16>
    %111 = vector.extract_strided_slice %31 {offsets = [0, 24], sizes = [8, 8], strides = [1, 1]} : vector<8x32xbf16> to vector<8x8xbf16>
    %cst_44 = arith.constant dense<0.000000e+00> : vector<8x8xf32>
    %112 = tpu.matmul %110, %111, %cst_44 {dimension_numbers = #tpu.dot_dimension_numbers<[1], [0], [0], [1], [0, 0, 1, 1], [], []>} : vector<8x8xbf16>, vector<8x8xbf16>, vector<8x8xf32> -> vector<8x8xf32>
    %113 = arith.truncf %112 : vector<8x8xf32> to vector<8x8xbf16>
    %114 = vector.extract_strided_slice %25 {offsets = [24, 0], sizes = [8, 32], strides = [1, 1]} : vector<32x32xbf16> to vector<8x32xbf16>
    %cst_45 = arith.constant dense<0.000000e+00> : vector<8x32xf32>
    %115 = tpu.matmul %113, %114, %cst_45 {dimension_numbers = #tpu.dot_dimension_numbers<[1], [0], [0], [1], [0, 0, 1, 1], [], []>} : vector<8x8xbf16>, vector<8x32xbf16>, vector<8x32xf32> -> vector<8x32xf32>
    %116 = arith.addf %95, %115 : vector<8x32xf32>
    %117 = arith.addf %116, %4 : vector<8x32xf32>
    %cst_46 = arith.constant dense<0.000000e+00> : vector<8xf32>
    %118 = vector.multi_reduction <add>, %117, %cst_46 [1] : vector<8x32xf32> to vector<8xf32>
    %119 = vector.shape_cast %118 : vector<8xf32> to vector<8x1xf32>
    %cst_47 = arith.constant 3.200000e+01 : f32
    %120 = vector.broadcast %cst_47 : f32 to vector<8x1xf32>
    %121 = arith.divf %119, %120 : vector<8x1xf32>
    %122 = vector.broadcast %121 : vector<8x1xf32> to vector<8x32xf32>
    %123 = arith.subf %117, %122 : vector<8x32xf32>
    %124 = arith.mulf %123, %123 : vector<8x32xf32>
    %cst_48 = arith.constant dense<0.000000e+00> : vector<8xf32>
    %125 = vector.multi_reduction <add>, %124, %cst_48 [1] : vector<8x32xf32> to vector<8xf32>
    %126 = vector.shape_cast %125 : vector<8xf32> to vector<8x1xf32>
    %cst_49 = arith.constant 3.200000e+01 : f32
    %127 = vector.broadcast %cst_49 : f32 to vector<8x1xf32>
    %128 = arith.divf %126, %127 : vector<8x1xf32>
    %129 = vector.broadcast %121 : vector<8x1xf32> to vector<8x32xf32>
    %130 = arith.subf %117, %129 : vector<8x32xf32>
    %cst_50 = arith.constant 9.99999974E-6 : f32
    %131 = vector.broadcast %cst_50 : f32 to vector<8x1xf32>
    %132 = arith.addf %128, %131 : vector<8x1xf32>
    %133 = math.rsqrt %132 : vector<8x1xf32>
    %134 = vector.broadcast %133 : vector<8x1xf32> to vector<8x32xf32>
    %135 = arith.mulf %130, %134 : vector<8x32xf32>
    %136 = vector.broadcast %13 : vector<1x32xf32> to vector<8x32xf32>
    %137 = arith.mulf %135, %136 : vector<8x32xf32>
    %138 = vector.broadcast %14 : vector<1x32xf32> to vector<8x32xf32>
    %139 = arith.addf %137, %138 : vector<8x32xf32>
    %c0_51 = arith.constant 0 : index
    %c0_52 = arith.constant 0 : index
    %c0_53 = arith.constant 0 : index
    %140 = vector.load %arg9[%c0_51, %c0_52, %c0_53] : memref<1x32x32xbf16, #tpu.memory_space<vmem>>, vector<1x32x32xbf16>
    %141 = vector.shape_cast %140 : vector<1x32x32xbf16> to vector<32x32xbf16>
    %c0_54 = arith.constant 0 : index
    %c0_55 = arith.constant 0 : index
    %c0_56 = arith.constant 0 : index
    %142 = vector.load %arg10[%c0_54, %c0_55, %c0_56] : memref<1x32x32xbf16, #tpu.memory_space<vmem>>, vector<1x32x32xbf16>
    %143 = vector.shape_cast %142 : vector<1x32x32xbf16> to vector<32x32xbf16>
    %c0_57 = arith.constant 0 : index
    %c0_58 = arith.constant 0 : index
    %c0_59 = arith.constant 0 : index
    %144 = vector.load %arg11[%c0_57, %c0_58, %c0_59] : memref<1x32x32xbf16, #tpu.memory_space<vmem>>, vector<1x32x32xbf16>
    %145 = vector.shape_cast %144 : vector<1x32x32xbf16> to vector<32x32xbf16>
    %146 = arith.truncf %139 : vector<8x32xf32> to vector<8x32xbf16>
    %cst_60 = arith.constant dense<0.000000e+00> : vector<8x32xf32>
    %147 = tpu.matmul %146, %141, %cst_60 {dimension_numbers = #tpu.dot_dimension_numbers<[1], [0], [0], [1], [0, 0, 1, 1], [], []>} : vector<8x32xbf16>, vector<32x32xbf16>, vector<8x32xf32> -> vector<8x32xf32>
    %cst_61 = arith.constant dense<0.000000e+00> : vector<8x32xf32>
    %148 = tpu.matmul %6, %143, %cst_61 {dimension_numbers = #tpu.dot_dimension_numbers<[1], [0], [0], [1], [0, 0, 1, 1], [], []>} : vector<8x32xbf16>, vector<32x32xbf16>, vector<8x32xf32> -> vector<8x32xf32>
    %cst_62 = arith.constant dense<0.000000e+00> : vector<8x32xf32>
    %149 = tpu.matmul %6, %141, %cst_62 {dimension_numbers = #tpu.dot_dimension_numbers<[1], [0], [0], [1], [0, 0, 1, 1], [], []>} : vector<8x32xbf16>, vector<32x32xbf16>, vector<8x32xf32> -> vector<8x32xf32>
    %150 = arith.truncf %147 : vector<8x32xf32> to vector<8x32xbf16>
    %151 = arith.truncf %148 : vector<8x32xf32> to vector<8x32xbf16>
    %152 = arith.truncf %149 : vector<8x32xf32> to vector<8x32xbf16>
    %cst_63 = arith.constant 0.000000e+00 : f32
    %153 = vector.broadcast %cst_63 : f32 to vector<8x32xf32>
    %154 = vector.extract_strided_slice %150 {offsets = [0, 0], sizes = [8, 8], strides = [1, 1]} : vector<8x32xbf16> to vector<8x8xbf16>
    %155 = vector.extract_strided_slice %151 {offsets = [0, 0], sizes = [8, 8], strides = [1, 1]} : vector<8x32xbf16> to vector<8x8xbf16>
    %cst_64 = arith.constant dense<0.000000e+00> : vector<8x8xf32>
    %156 = tpu.matmul %154, %155, %cst_64 {dimension_numbers = #tpu.dot_dimension_numbers<[1], [1], [0], [0], [0, 0, 1, 0], [], []>} : vector<8x8xbf16>, vector<8x8xbf16>, vector<8x8xf32> -> vector<8x8xf32>
    %157 = arith.addf %156, %10 : vector<8x8xf32>
    %cst_65 = arith.constant dense<0xFF800000> : vector<8xf32>
    %158 = vector.multi_reduction <maximumf>, %157, %cst_65 [1] : vector<8x8xf32> to vector<8xf32>
    %159 = vector.shape_cast %158 : vector<8xf32> to vector<8x1xf32>
    %160 = vector.broadcast %159 : vector<8x1xf32> to vector<8x8xf32>
    %161 = arith.subf %157, %160 : vector<8x8xf32>
    %162 = math.exp %161 : vector<8x8xf32>
    %cst_66 = arith.constant dense<0.000000e+00> : vector<8xf32>
    %163 = vector.multi_reduction <add>, %162, %cst_66 [1] : vector<8x8xf32> to vector<8xf32>
    %164 = vector.shape_cast %163 : vector<8xf32> to vector<8x1xf32>
    %165 = tpu.reciprocal %164 {approx = true} : vector<8x1xf32> -> vector<8x1xf32>
    %166 = vector.broadcast %165 : vector<8x1xf32> to vector<8x8xf32>
    %167 = arith.mulf %162, %166 : vector<8x8xf32>
    %168 = arith.truncf %167 : vector<8x8xf32> to vector<8x8xbf16>
    %169 = vector.extract_strided_slice %152 {offsets = [0, 0], sizes = [8, 8], strides = [1, 1]} : vector<8x32xbf16> to vector<8x8xbf16>
    %cst_67 = arith.constant dense<0.000000e+00> : vector<8x8xf32>
    %170 = tpu.matmul %168, %169, %cst_67 {dimension_numbers = #tpu.dot_dimension_numbers<[1], [0], [0], [1], [0, 0, 1, 1], [], []>} : vector<8x8xbf16>, vector<8x8xbf16>, vector<8x8xf32> -> vector<8x8xf32>
    %171 = arith.truncf %170 : vector<8x8xf32> to vector<8x8xbf16>
    %172 = vector.extract_strided_slice %145 {offsets = [0, 0], sizes = [8, 32], strides = [1, 1]} : vector<32x32xbf16> to vector<8x32xbf16>
    %cst_68 = arith.constant dense<0.000000e+00> : vector<8x32xf32>
    %173 = tpu.matmul %171, %172, %cst_68 {dimension_numbers = #tpu.dot_dimension_numbers<[1], [0], [0], [1], [0, 0, 1, 1], [], []>} : vector<8x8xbf16>, vector<8x32xbf16>, vector<8x32xf32> -> vector<8x32xf32>
    %174 = arith.addf %153, %173 : vector<8x32xf32>
    %175 = vector.extract_strided_slice %150 {offsets = [0, 8], sizes = [8, 8], strides = [1, 1]} : vector<8x32xbf16> to vector<8x8xbf16>
    %176 = vector.extract_strided_slice %151 {offsets = [0, 8], sizes = [8, 8], strides = [1, 1]} : vector<8x32xbf16> to vector<8x8xbf16>
    %cst_69 = arith.constant dense<0.000000e+00> : vector<8x8xf32>
    %177 = tpu.matmul %175, %176, %cst_69 {dimension_numbers = #tpu.dot_dimension_numbers<[1], [1], [0], [0], [0, 0, 1, 0], [], []>} : vector<8x8xbf16>, vector<8x8xbf16>, vector<8x8xf32> -> vector<8x8xf32>
    %178 = arith.addf %177, %10 : vector<8x8xf32>
    %cst_70 = arith.constant dense<0xFF800000> : vector<8xf32>
    %179 = vector.multi_reduction <maximumf>, %178, %cst_70 [1] : vector<8x8xf32> to vector<8xf32>
    %180 = vector.shape_cast %179 : vector<8xf32> to vector<8x1xf32>
    %181 = vector.broadcast %180 : vector<8x1xf32> to vector<8x8xf32>
    %182 = arith.subf %178, %181 : vector<8x8xf32>
    %183 = math.exp %182 : vector<8x8xf32>
    %cst_71 = arith.constant dense<0.000000e+00> : vector<8xf32>
    %184 = vector.multi_reduction <add>, %183, %cst_71 [1] : vector<8x8xf32> to vector<8xf32>
    %185 = vector.shape_cast %184 : vector<8xf32> to vector<8x1xf32>
    %186 = tpu.reciprocal %185 {approx = true} : vector<8x1xf32> -> vector<8x1xf32>
    %187 = vector.broadcast %186 : vector<8x1xf32> to vector<8x8xf32>
    %188 = arith.mulf %183, %187 : vector<8x8xf32>
    %189 = arith.truncf %188 : vector<8x8xf32> to vector<8x8xbf16>
    %190 = vector.extract_strided_slice %152 {offsets = [0, 8], sizes = [8, 8], strides = [1, 1]} : vector<8x32xbf16> to vector<8x8xbf16>
    %cst_72 = arith.constant dense<0.000000e+00> : vector<8x8xf32>
    %191 = tpu.matmul %189, %190, %cst_72 {dimension_numbers = #tpu.dot_dimension_numbers<[1], [0], [0], [1], [0, 0, 1, 1], [], []>} : vector<8x8xbf16>, vector<8x8xbf16>, vector<8x8xf32> -> vector<8x8xf32>
    %192 = arith.truncf %191 : vector<8x8xf32> to vector<8x8xbf16>
    %193 = vector.extract_strided_slice %145 {offsets = [8, 0], sizes = [8, 32], strides = [1, 1]} : vector<32x32xbf16> to vector<8x32xbf16>
    %cst_73 = arith.constant dense<0.000000e+00> : vector<8x32xf32>
    %194 = tpu.matmul %192, %193, %cst_73 {dimension_numbers = #tpu.dot_dimension_numbers<[1], [0], [0], [1], [0, 0, 1, 1], [], []>} : vector<8x8xbf16>, vector<8x32xbf16>, vector<8x32xf32> -> vector<8x32xf32>
    %195 = arith.addf %174, %194 : vector<8x32xf32>
    %196 = vector.extract_strided_slice %150 {offsets = [0, 16], sizes = [8, 8], strides = [1, 1]} : vector<8x32xbf16> to vector<8x8xbf16>
    %197 = vector.extract_strided_slice %151 {offsets = [0, 16], sizes = [8, 8], strides = [1, 1]} : vector<8x32xbf16> to vector<8x8xbf16>
    %cst_74 = arith.constant dense<0.000000e+00> : vector<8x8xf32>
    %198 = tpu.matmul %196, %197, %cst_74 {dimension_numbers = #tpu.dot_dimension_numbers<[1], [1], [0], [0], [0, 0, 1, 0], [], []>} : vector<8x8xbf16>, vector<8x8xbf16>, vector<8x8xf32> -> vector<8x8xf32>
    %199 = arith.addf %198, %10 : vector<8x8xf32>
    %cst_75 = arith.constant dense<0xFF800000> : vector<8xf32>
    %200 = vector.multi_reduction <maximumf>, %199, %cst_75 [1] : vector<8x8xf32> to vector<8xf32>
    %201 = vector.shape_cast %200 : vector<8xf32> to vector<8x1xf32>
    %202 = vector.broadcast %201 : vector<8x1xf32> to vector<8x8xf32>
    %203 = arith.subf %199, %202 : vector<8x8xf32>
    %204 = math.exp %203 : vector<8x8xf32>
    %cst_76 = arith.constant dense<0.000000e+00> : vector<8xf32>
    %205 = vector.multi_reduction <add>, %204, %cst_76 [1] : vector<8x8xf32> to vector<8xf32>
    %206 = vector.shape_cast %205 : vector<8xf32> to vector<8x1xf32>
    %207 = tpu.reciprocal %206 {approx = true} : vector<8x1xf32> -> vector<8x1xf32>
    %208 = vector.broadcast %207 : vector<8x1xf32> to vector<8x8xf32>
    %209 = arith.mulf %204, %208 : vector<8x8xf32>
    %210 = arith.truncf %209 : vector<8x8xf32> to vector<8x8xbf16>
    %211 = vector.extract_strided_slice %152 {offsets = [0, 16], sizes = [8, 8], strides = [1, 1]} : vector<8x32xbf16> to vector<8x8xbf16>
    %cst_77 = arith.constant dense<0.000000e+00> : vector<8x8xf32>
    %212 = tpu.matmul %210, %211, %cst_77 {dimension_numbers = #tpu.dot_dimension_numbers<[1], [0], [0], [1], [0, 0, 1, 1], [], []>} : vector<8x8xbf16>, vector<8x8xbf16>, vector<8x8xf32> -> vector<8x8xf32>
    %213 = arith.truncf %212 : vector<8x8xf32> to vector<8x8xbf16>
    %214 = vector.extract_strided_slice %145 {offsets = [16, 0], sizes = [8, 32], strides = [1, 1]} : vector<32x32xbf16> to vector<8x32xbf16>
    %cst_78 = arith.constant dense<0.000000e+00> : vector<8x32xf32>
    %215 = tpu.matmul %213, %214, %cst_78 {dimension_numbers = #tpu.dot_dimension_numbers<[1], [0], [0], [1], [0, 0, 1, 1], [], []>} : vector<8x8xbf16>, vector<8x32xbf16>, vector<8x32xf32> -> vector<8x32xf32>
    %216 = arith.addf %195, %215 : vector<8x32xf32>
    %217 = vector.extract_strided_slice %150 {offsets = [0, 24], sizes = [8, 8], strides = [1, 1]} : vector<8x32xbf16> to vector<8x8xbf16>
    %218 = vector.extract_strided_slice %151 {offsets = [0, 24], sizes = [8, 8], strides = [1, 1]} : vector<8x32xbf16> to vector<8x8xbf16>
    %cst_79 = arith.constant dense<0.000000e+00> : vector<8x8xf32>
    %219 = tpu.matmul %217, %218, %cst_79 {dimension_numbers = #tpu.dot_dimension_numbers<[1], [1], [0], [0], [0, 0, 1, 0], [], []>} : vector<8x8xbf16>, vector<8x8xbf16>, vector<8x8xf32> -> vector<8x8xf32>
    %220 = arith.addf %219, %10 : vector<8x8xf32>
    %cst_80 = arith.constant dense<0xFF800000> : vector<8xf32>
    %221 = vector.multi_reduction <maximumf>, %220, %cst_80 [1] : vector<8x8xf32> to vector<8xf32>
    %222 = vector.shape_cast %221 : vector<8xf32> to vector<8x1xf32>
    %223 = vector.broadcast %222 : vector<8x1xf32> to vector<8x8xf32>
    %224 = arith.subf %220, %223 : vector<8x8xf32>
    %225 = math.exp %224 : vector<8x8xf32>
    %cst_81 = arith.constant dense<0.000000e+00> : vector<8xf32>
    %226 = vector.multi_reduction <add>, %225, %cst_81 [1] : vector<8x8xf32> to vector<8xf32>
    %227 = vector.shape_cast %226 : vector<8xf32> to vector<8x1xf32>
    %228 = tpu.reciprocal %227 {approx = true} : vector<8x1xf32> -> vector<8x1xf32>
    %229 = vector.broadcast %228 : vector<8x1xf32> to vector<8x8xf32>
    %230 = arith.mulf %225, %229 : vector<8x8xf32>
    %231 = arith.truncf %230 : vector<8x8xf32> to vector<8x8xbf16>
    %232 = vector.extract_strided_slice %152 {offsets = [0, 24], sizes = [8, 8], strides = [1, 1]} : vector<8x32xbf16> to vector<8x8xbf16>
    %cst_82 = arith.constant dense<0.000000e+00> : vector<8x8xf32>
    %233 = tpu.matmul %231, %232, %cst_82 {dimension_numbers = #tpu.dot_dimension_numbers<[1], [0], [0], [1], [0, 0, 1, 1], [], []>} : vector<8x8xbf16>, vector<8x8xbf16>, vector<8x8xf32> -> vector<8x8xf32>
    %234 = arith.truncf %233 : vector<8x8xf32> to vector<8x8xbf16>
    %235 = vector.extract_strided_slice %145 {offsets = [24, 0], sizes = [8, 32], strides = [1, 1]} : vector<32x32xbf16> to vector<8x32xbf16>
    %cst_83 = arith.constant dense<0.000000e+00> : vector<8x32xf32>
    %236 = tpu.matmul %234, %235, %cst_83 {dimension_numbers = #tpu.dot_dimension_numbers<[1], [0], [0], [1], [0, 0, 1, 1], [], []>} : vector<8x8xbf16>, vector<8x32xbf16>, vector<8x32xf32> -> vector<8x32xf32>
    %237 = arith.addf %216, %236 : vector<8x32xf32>
    %238 = arith.addf %237, %139 : vector<8x32xf32>
    %cst_84 = arith.constant dense<0.000000e+00> : vector<8xf32>
    %239 = vector.multi_reduction <add>, %238, %cst_84 [1] : vector<8x32xf32> to vector<8xf32>
    %240 = vector.shape_cast %239 : vector<8xf32> to vector<8x1xf32>
    %cst_85 = arith.constant 3.200000e+01 : f32
    %241 = vector.broadcast %cst_85 : f32 to vector<8x1xf32>
    %242 = arith.divf %240, %241 : vector<8x1xf32>
    %243 = vector.broadcast %242 : vector<8x1xf32> to vector<8x32xf32>
    %244 = arith.subf %238, %243 : vector<8x32xf32>
    %245 = arith.mulf %244, %244 : vector<8x32xf32>
    %cst_86 = arith.constant dense<0.000000e+00> : vector<8xf32>
    %246 = vector.multi_reduction <add>, %245, %cst_86 [1] : vector<8x32xf32> to vector<8xf32>
    %247 = vector.shape_cast %246 : vector<8xf32> to vector<8x1xf32>
    %cst_87 = arith.constant 3.200000e+01 : f32
    %248 = vector.broadcast %cst_87 : f32 to vector<8x1xf32>
    %249 = arith.divf %247, %248 : vector<8x1xf32>
    %250 = vector.broadcast %242 : vector<8x1xf32> to vector<8x32xf32>
    %251 = arith.subf %238, %250 : vector<8x32xf32>
    %cst_88 = arith.constant 9.99999974E-6 : f32
    %252 = vector.broadcast %cst_88 : f32 to vector<8x1xf32>
    %253 = arith.addf %249, %252 : vector<8x1xf32>
    %254 = math.rsqrt %253 : vector<8x1xf32>
    %255 = vector.broadcast %254 : vector<8x1xf32> to vector<8x32xf32>
    %256 = arith.mulf %251, %255 : vector<8x32xf32>
    %257 = vector.broadcast %15 : vector<1x32xf32> to vector<8x32xf32>
    %258 = arith.mulf %256, %257 : vector<8x32xf32>
    %259 = vector.broadcast %16 : vector<1x32xf32> to vector<8x32xf32>
    %260 = arith.addf %258, %259 : vector<8x32xf32>
    %261 = arith.truncf %260 : vector<8x32xf32> to vector<8x32xbf16>
    %c0_89 = arith.constant 0 : index
    %c0_90 = arith.constant 0 : index
    %c0_91 = arith.constant 0 : index
    %262 = vector.load %arg12[%c0_89, %c0_90, %c0_91] : memref<1x32x64xbf16, #tpu.memory_space<vmem>>, vector<1x32x64xbf16>
    %263 = vector.shape_cast %262 : vector<1x32x64xbf16> to vector<32x64xbf16>
    %cst_92 = arith.constant dense<0.000000e+00> : vector<8x64xf32>
    %264 = tpu.matmul %261, %263, %cst_92 {dimension_numbers = #tpu.dot_dimension_numbers<[1], [0], [0], [1], [0, 0, 1, 1], [], []>} : vector<8x32xbf16>, vector<32x64xbf16>, vector<8x64xf32> -> vector<8x64xf32>
    %c0_93 = arith.constant 0 : index
    %c0_94 = arith.constant 0 : index
    %c0_95 = arith.constant 0 : index
    %265 = vector.load %arg13[%c0_93, %c0_94, %c0_95] : memref<1x1x64xf32, #tpu.memory_space<vmem>>, vector<1x1x64xf32>
    %266 = vector.shape_cast %265 : vector<1x1x64xf32> to vector<1x64xf32>
    %267 = vector.broadcast %266 : vector<1x64xf32> to vector<8x64xf32>
    %268 = arith.addf %264, %267 : vector<8x64xf32>
    %cst_96 = arith.constant 0.000000e+00 : f32
    %269 = vector.broadcast %cst_96 : f32 to vector<8x64xf32>
    %270 = arith.maximumf %268, %269 : vector<8x64xf32>
    %271 = arith.truncf %270 : vector<8x64xf32> to vector<8x64xbf16>
    %c0_97 = arith.constant 0 : index
    %c0_98 = arith.constant 0 : index
    %c0_99 = arith.constant 0 : index
    %272 = vector.load %arg14[%c0_97, %c0_98, %c0_99] : memref<1x64x32xbf16, #tpu.memory_space<vmem>>, vector<1x64x32xbf16>
    %273 = vector.shape_cast %272 : vector<1x64x32xbf16> to vector<64x32xbf16>
    %cst_100 = arith.constant dense<0.000000e+00> : vector<8x32xf32>
    %274 = tpu.matmul %271, %273, %cst_100 {dimension_numbers = #tpu.dot_dimension_numbers<[1], [0], [0], [1], [0, 0, 1, 1], [], []>} : vector<8x64xbf16>, vector<64x32xbf16>, vector<8x32xf32> -> vector<8x32xf32>
    %275 = vector.broadcast %19 : vector<1x32xf32> to vector<8x32xf32>
    %276 = arith.addf %274, %275 : vector<8x32xf32>
    %277 = arith.addf %276, %260 : vector<8x32xf32>
    %cst_101 = arith.constant dense<0.000000e+00> : vector<8xf32>
    %278 = vector.multi_reduction <add>, %277, %cst_101 [1] : vector<8x32xf32> to vector<8xf32>
    %279 = vector.shape_cast %278 : vector<8xf32> to vector<8x1xf32>
    %cst_102 = arith.constant 3.200000e+01 : f32
    %280 = vector.broadcast %cst_102 : f32 to vector<8x1xf32>
    %281 = arith.divf %279, %280 : vector<8x1xf32>
    %282 = vector.broadcast %281 : vector<8x1xf32> to vector<8x32xf32>
    %283 = arith.subf %277, %282 : vector<8x32xf32>
    %284 = arith.mulf %283, %283 : vector<8x32xf32>
    %cst_103 = arith.constant dense<0.000000e+00> : vector<8xf32>
    %285 = vector.multi_reduction <add>, %284, %cst_103 [1] : vector<8x32xf32> to vector<8xf32>
    %286 = vector.shape_cast %285 : vector<8xf32> to vector<8x1xf32>
    %cst_104 = arith.constant 3.200000e+01 : f32
    %287 = vector.broadcast %cst_104 : f32 to vector<8x1xf32>
    %288 = arith.divf %286, %287 : vector<8x1xf32>
    %289 = vector.broadcast %281 : vector<8x1xf32> to vector<8x32xf32>
    %290 = arith.subf %277, %289 : vector<8x32xf32>
    %cst_105 = arith.constant 9.99999974E-6 : f32
    %291 = vector.broadcast %cst_105 : f32 to vector<8x1xf32>
    %292 = arith.addf %288, %291 : vector<8x1xf32>
    %293 = math.rsqrt %292 : vector<8x1xf32>
    %294 = vector.broadcast %293 : vector<8x1xf32> to vector<8x32xf32>
    %295 = arith.mulf %290, %294 : vector<8x32xf32>
    %296 = vector.broadcast %17 : vector<1x32xf32> to vector<8x32xf32>
    %297 = arith.mulf %295, %296 : vector<8x32xf32>
    %298 = vector.broadcast %18 : vector<1x32xf32> to vector<8x32xf32>
    %299 = arith.addf %297, %298 : vector<8x32xf32>
    %c0_106 = arith.constant 0 : index
    %c0_107 = arith.constant 0 : index
    %c0_108 = arith.constant 0 : index
    %300 = vector.load %arg16[%c0_106, %c0_107, %c0_108] : memref<1x8x32xf32, #tpu.memory_space<vmem>>, vector<1x8x32xf32>
    %301 = vector.shape_cast %300 : vector<1x8x32xf32> to vector<8x32xf32>
    %302 = vector.shape_cast %299 : vector<8x32xf32> to vector<1x8x32xf32>
    tpu.vector_store %arg16[%c0_106, %c0_107, %c0_108], %302 {strides = array<i32>} : memref<1x8x32xf32, #tpu.memory_space<vmem>>, vector<1x8x32xf32>,
    return
  }
  func.func @transform_0(%arg0: i32, %arg1: i32) -> (i32, i32, i32) {
    %c0_i32 = arith.constant 0 : i32
    %c0_i32_0 = arith.constant 0 : i32
    %c0_i32_1 = arith.constant 0 : i32
    return %arg0, %c0_i32, %c0_i32_0 : i32, i32, i32
  }
  func.func @transform_1(%arg0: i32, %arg1: i32) -> (i32, i32, i32) {
    %c0_i32 = arith.constant 0 : i32
    %c0_i32_0 = arith.constant 0 : i32
    %c0_i32_1 = arith.constant 0 : i32
    return %arg0, %c0_i32, %c0_i32_0 : i32, i32, i32
  }
  func.func @transform_2(%arg0: i32, %arg1: i32) -> (i32, i32, i32) {
    %c0_i32 = arith.constant 0 : i32
    %c0_i32_0 = arith.constant 0 : i32
    %c0_i32_1 = arith.constant 0 : i32
    return %arg0, %c0_i32, %c0_i32_0 : i32, i32, i32
  }
  func.func @transform_3(%arg0: i32, %arg1: i32) -> (i32, i32, i32) {
    %c0_i32 = arith.constant 0 : i32
    %c0_i32_0 = arith.constant 0 : i32
    %c0_i32_1 = arith.constant 0 : i32
    return %arg0, %c0_i32, %c0_i32_0 : i32, i32, i32
  }
  func.func @transform_4(%arg0: i32, %arg1: i32) -> (i32, i32, i32) {
    %c0_i32 = arith.constant 0 : i32
    %c0_i32_0 = arith.constant 0 : i32
    %c0_i32_1 = arith.constant 0 : i32
    return %arg1, %c0_i32, %c0_i32_0 : i32, i32, i32
  }
  func.func @transform_5(%arg0: i32, %arg1: i32) -> (i32, i32, i32) {
    %c0_i32 = arith.constant 0 : i32
    %c0_i32_0 = arith.constant 0 : i32
    %c0_i32_1 = arith.constant 0 : i32
    return %arg1, %c0_i32, %c0_i32_0 : i32, i32, i32
  }
  func.func @transform_6(%arg0: i32, %arg1: i32) -> (i32, i32, i32) {
    %c0_i32 = arith.constant 0 : i32
    %c0_i32_0 = arith.constant 0 : i32
    %c0_i32_1 = arith.constant 0 : i32
    return %arg1, %c0_i32, %c0_i32_0 : i32, i32, i32
  }
  func.func @transform_7(%arg0: i32, %arg1: i32) -> (i32, i32, i32) {
    %c0_i32 = arith.constant 0 : i32
    %c0_i32_0 = arith.constant 0 : i32
    %c0_i32_1 = arith.constant 0 : i32
    return %arg1, %c0_i32, %c0_i32_0 : i32, i32, i32
  }
  func.func @transform_8(%arg0: i32, %arg1: i32) -> (i32, i32, i32) {
    %c0_i32 = arith.constant 0 : i32
    %c0_i32_0 = arith.constant 0 : i32
    %c0_i32_1 = arith.constant 0 : i32
    return %arg1, %c0_i32, %c0_i32_0 : i32, i32, i32
  }
  func.func @transform_9(%arg0: i32, %arg1: i32) -> (i32, i32, i32) {
    %c0_i32 = arith.constant 0 : i32
    %c0_i32_0 = arith.constant 0 : i32
    %c0_i32_1 = arith.constant 0 : i32
    return %arg1, %c0_i32, %c0_i32_0 : i32, i32, i32
  }
  func.func @transform_10(%arg0: i32, %arg1: i32) -> (i32, i32, i32) {
    %c0_i32 = arith.constant 0 : i32
    %c0_i32_0 = arith.constant 0 : i32
    %c0_i32_1 = arith.constant 0 : i32
    return %arg1, %c0_i32, %c0_i32_0 : i32, i32, i32
  }
  func.func @transform_11(%arg0: i32, %arg1: i32) -> (i32, i32, i32) {
    %c0_i32 = arith.constant 0 : i32
    %c0_i32_0 = arith.constant 0 : i32
    %c0_i32_1 = arith.constant 0 : i32
    return %arg1, %c0_i32, %c0_i32_0 : i32, i32, i32
  }
  func.func @transform_12(%arg0: i32, %arg1: i32) -> (i32, i32, i32) {
    %c0_i32 = arith.constant 0 : i32
    %c0_i32_0 = arith.constant 0 : i32
    %c0_i32_1 = arith.constant 0 : i32
    return %arg1, %c0_i32, %c0_i32_0 : i32, i32, i32
  }
  func.func @transform_13(%arg0: i32, %arg1: i32) -> (i32, i32, i32) {
    %c0_i32 = arith.constant 0 : i32
    %c0_i32_0 = arith.constant 0 : i32
    %c0_i32_1 = arith.constant 0 : i32
    return %arg1, %c0_i32, %c0_i32_0 : i32, i32, i32
  }
  func.func @transform_14(%arg0: i32, %arg1: i32) -> (i32, i32, i32) {
    %c0_i32 = arith.constant 0 : i32
    %c0_i32_0 = arith.constant 0 : i32
    %c0_i32_1 = arith.constant 0 : i32
    return %arg0, %c0_i32, %c0_i32_0 : i32, i32, i32
  }
}

</mosaic_0001>

<llo_original>
// kernel: tpu_custom_call.1
$region0: #{tpu_custom_call.1}
  #allocation0 [shape = 'u32[]', space=smem, size = 0x4, offset = 0x4, fixed_abs, tag = 'smem constant byte address 0x4 - core index']
  #allocation1 [shape = 'u32[144,128]{1,0:T(1,128)}', space=vmem, size = 0x12000, scoped, tag = 'internal scratch']
  %s0 = inlined_call_operand.hbm [shape: f32[2,8,32], index: 0, kind: input, shape index: {}]
  %s1 = inlined_call_operand.hbm [shape: f32[2,8,8], index: 1, kind: input, shape index: {}]
  %s2 = inlined_call_operand.hbm [shape: bf16[2,8,32], index: 2, kind: input, shape index: {}]
  %s3 = inlined_call_operand.hbm [shape: f32[2,8,8], index: 3, kind: input, shape index: {}]
  %s4 = inlined_call_operand.vmem [shape: bf16[2,32,32], index: 4, kind: input, shape index: {}]
  %s5 = inlined_call_operand.vmem [shape: bf16[2,32,32], index: 5, kind: input, shape index: {}]
  %s6 = inlined_call_operand.vmem [shape: bf16[2,32,32], index: 6, kind: input, shape index: {}]
  %s7 = inlined_call_operand.hbm [shape: bf16[2,32,32], index: 7, kind: input, shape index: {}]
  %s8 = inlined_call_operand.hbm [shape: bf16[2,32,32], index: 8, kind: input, shape index: {}]
  %s9 = inlined_call_operand.hbm [shape: bf16[2,32,32], index: 9, kind: input, shape index: {}]
  %s10 = inlined_call_operand.hbm [shape: bf16[2,32,64], index: 10, kind: input, shape index: {}]
  %s11 = inlined_call_operand.hbm [shape: f32[2,1,64], index: 11, kind: input, shape index: {}]
  %s12 = inlined_call_operand.vmem [shape: bf16[2,64,32], index: 12, kind: input, shape index: {}]
  %s13 = inlined_call_operand.vmem [shape: f32[2,8,32], index: 13, kind: input, shape index: {}]
  %s14 = inlined_call_operand.hbm [shape: f32[2,8,32], index: 14, kind: output, shape index: {}]
  %s15 = sld [smem:[#allocation0]]
  $region129: #{tpu_custom_call.1} parent=0
    _
  %s17 = ssub.s32 1, %s15
  %s18 = scalar_select 0, %s17, %s15
  $region1: #{tpu_custom_call.1} parent=0
    #allocation2 [shape = 'u8[8192]{0}', space=vmem, size = 0x2000, scoped, tag = 'input window, operand 0']
    #allocation3 [shape = 's32[2]{0}', space=sflag, size = 0x8, scoped, tag = 'scoped memory for tpu_custom_call.1']
    #allocation4 [shape = 's32[2]{0}', space=sflag, size = 0x8, scoped, tag = 'scoped memory for tpu_custom_call.1']
    #allocation5 [shape = 'u8[8192]{0}', space=vmem, size = 0x2000, scoped, tag = 'input window, operand 1']
    #allocation6 [shape = 's32[2]{0}', space=sflag, size = 0x8, scoped, tag = 'scoped memory for tpu_custom_call.1']
    #allocation7 [shape = 'u8[4096]{0}', space=vmem, size = 0x1000, scoped, tag = 'input window, operand 2']
    #allocation8 [shape = 'u8[8192]{0}', space=vmem, size = 0x2000, scoped, tag = 'input window, operand 3']
    #allocation9 [shape = 's32[2]{0}', space=sflag, size = 0x8, scoped, tag = 'scoped memory for tpu_custom_call.1']
    #allocation10 [shape = 'u8[16384]{0}', space=vmem, size = 0x4000, scoped, tag = 'input window, operand 7']
    #allocation11 [shape = 'u8[16384]{0}', space=vmem, size = 0x4000, scoped, tag = 'input window, operand 8']
    #allocation12 [shape = 's32[2]{0}', space=sflag, size = 0x8, scoped, tag = 'scoped memory for tpu_custom_call.1']
    #allocation13 [shape = 'u8[16384]{0}', space=vmem, size = 0x4000, scoped, tag = 'input window, operand 9']
    #allocation14 [shape = 'u8[16384]{0}', space=vmem, size = 0x4000, scoped, tag = 'input window, operand 10']
    #allocation15 [shape = 's32[2]{0}', space=sflag, size = 0x8, scoped, tag = 'scoped memory for tpu_custom_call.1']
    #allocation16 [shape = 'u8[1024]{0}', space=vmem, size = 0x400, scoped, tag = 'input window, operand 11']
    #allocation17 [shape = 'u8[8192]{0}', space=vmem, size = 0x2000, scoped, tag = 'output window, operand 0']
    %19 = vsyncpa [#allocation3], 0
    %s20 = scalar_lea.sflag [#allocation3], 1
    %21 = vsyncpa %s20, 0
    %22 = vsyncpa [#allocation6], 0
    %s23 = scalar_lea.sflag [#allocation6], 1
    %24 = vsyncpa %s23, 0
    %25 = vsyncpa [#allocation9], 0
    %s26 = scalar_lea.sflag [#allocation9], 1
    %27 = vsyncpa %s26, 0
    %28 = vsyncpa [#allocation12], 0
    %s29 = scalar_lea.sflag [#allocation12], 1
    %30 = vsyncpa %s29, 0
    %31 = vsyncpa [#allocation15], 0
    %s32 = scalar_lea.sflag [#allocation15], 1
    %33 = vsyncpa %s32, 0
    %34 = vsyncpa [#allocation4], 0
    %s35 = scalar_lea.sflag [#allocation4], 1
    %36 = vsyncpa %s35, 0
    loop: start=0, step=1, limit=6
    $region2: #{tpu_custom_call.1} parent=1 // loop_pre_header
      _
    $region3: #{tpu_custom_call.1} parent=1 // loop_header
      %s38 = sphi 0, %s42
      %p39 = scmp.ge.s32.totalorder %s38, 6
      %s45 = sphi 0, %s57
      %s46 = sphi 0, %s53
      %s47 = sphi 0, %s45
      %s48 = sphi 0, %s46
      %s49 = sphi 0, %s47
      %s50 = sphi 0, %s48
      %s60 = sphi 0, %s62
      %s63 = sphi 0, %s60
      %s64 = sphi 0, %s63
      %s80 = sphi 0, %s64
      %s86 = sphi 0, %s88
      %s89 = sphi 0, %s86
      %s90 = sphi 0, %s89
      %s106 = sphi 0, %s90
      %s112 = sphi 0, %s114
      %s115 = sphi 0, %s112
      %s116 = sphi 0, %s115
      %s132 = sphi 0, %s116
      %s138 = sphi 0, %s140
      %s141 = sphi 0, %s138
      %s142 = sphi 0, %s141
      %s158 = sphi 0, %s142
      %s164 = sphi 0, %s166
      %s167 = sphi 0, %s164
      %s168 = sphi 0, %s167
      %s184 = sphi 0, %s168
      %s190 = sphi 0, %s192
      %s193 = sphi 0, %s190
      %s194 = sphi 0, %s193
      %s210 = sphi 0, %s194
      %s216 = sphi 0, %s218
      %s219 = sphi 0, %s216
      %s220 = sphi 0, %s219
      %s236 = sphi 0, %s220
      %s242 = sphi 0, %s244
      %s245 = sphi 0, %s242
      %s246 = sphi 0, %s245
      %s262 = sphi 0, %s246
      %s268 = sphi 0, %s270
      %s271 = sphi 0, %s268
      %s272 = sphi 0, %s271
      %s288 = sphi 0, %s272
      %s294 = sphi 0, %s296
      %s297 = sphi 0, %s294
      %s298 = sphi 0, %s297
      %s314 = sphi 0, %s298
      %s320 = sphi 0, %s322
      %s323 = sphi 0, %s320
      %s324 = sphi 0, %s323
      %s340 = sphi 0, %s324
      %s346 = sphi 0, %s348
      %s349 = sphi 0, %s346
      %s350 = sphi 0, %s349
      %s366 = sphi 0, %s350
      %s372 = sphi 0, %s374
      %s375 = sphi 0, %s372
      %s376 = sphi 0, %s375
      %s392 = sphi 0, %s376
      %s398 = sphi 0, %s400
      %s401 = sphi 0, %s398
      %s402 = sphi 0, %s401
      %s418 = sphi 0, %s402
      %s424 = sphi 0, %s426
      %s427 = sphi 0, %s424
      %s428 = sphi 0, %s427
      %s444 = sphi 0, %s428
    $region4: #{tpu_custom_call.1} parent=1 // loop_header_branch
      %41 = sbr.rel (%p39) target = $region8
    $region5: #{tpu_custom_call.1} parent=1 // loop_body
      %s43 = ssub.s32 %s38, 1
      %s44 = ssub.s32 %s38, 2
      %s51 = sadd.s32 1, %s46
      %p52 = scmp.ge.s32.totalorder %s51, 2
      %s53 = scalar_select %p52, 0, %s51
      %s54 = sadd.s32 1, %s45
      %s55 = scalar_select %p52, %s54, %s45
      %p56 = scmp.ge.s32.totalorder %s55, 2
      %s57 = scalar_select %p56, 0, %s55
      %s58 = ssub.s32 %s45, %s57
      %p59 = scmp.eq.s32.totalorder %s58, 0
      %s61 = sadd.s32 %s60, 1
      %s62 = scalar_select %p59, %s60, %s61
      %p65 = pneg %p59
      %p66 = scmp.eq.s32.totalorder %s38, 3
      %p67 = por %p65, %p66
      %p68 = scmp.ne.s32.totalorder %s60, %s63
      %p69 = scmp.eq.s32.totalorder %s38, 0
      %p70 = por %p68, %p69
      %p71 = scmp.ne.s32.totalorder %s60, %s63
      %p72 = scmp.eq.s32.totalorder %s43, 3
      %p73 = por %p71, %p72
      %p74 = scmp.ne.s32.totalorder %s63, %s64
      %p75 = scmp.eq.s32.totalorder %s43, 0
      %p76 = por %p74, %p75
      %p77 = scmp.ne.s32.totalorder %s63, %s64
      %p78 = scmp.eq.s32.totalorder %s44, 3
      %p79 = por %p77, %p78
      %p81 = scmp.ne.s32.totalorder %s64, %s80
      %p82 = scmp.eq.s32.totalorder %s44, 0
      %p83 = por %p81, %p82
      %s84 = ssub.s32 %s45, %s57
      %p85 = scmp.eq.s32.totalorder %s84, 0
      %s87 = sadd.s32 %s86, 1
      %s88 = scalar_select %p85, %s86, %s87
      %p91 = pneg %p85
      %p92 = scmp.eq.s32.totalorder %s38, 3
      %p93 = por %p91, %p92
      %p94 = scmp.ne.s32.totalorder %s86, %s89
      %p95 = scmp.eq.s32.totalorder %s38, 0
      %p96 = por %p94, %p95
      %p97 = scmp.ne.s32.totalorder %s86, %s89
      %p98 = scmp.eq.s32.totalorder %s43, 3
      %p99 = por %p97, %p98
      %p100 = scmp.ne.s32.totalorder %s89, %s90
      %p101 = scmp.eq.s32.totalorder %s43, 0
      %p102 = por %p100, %p101
      %p103 = scmp.ne.s32.totalorder %s89, %s90
      %p104 = scmp.eq.s32.totalorder %s44, 3
      %p105 = por %p103, %p104
      %p107 = scmp.ne.s32.totalorder %s90, %s106
      %p108 = scmp.eq.s32.totalorder %s44, 0
      %p109 = por %p107, %p108
      %s110 = ssub.s32 %s45, %s57
      %p111 = scmp.eq.s32.totalorder %s110, 0
      %s113 = sadd.s32 %s112, 1
      %s114 = scalar_select %p111, %s112, %s113
      %p117 = pneg %p111
      %p118 = scmp.eq.s32.totalorder %s38, 3
      %p119 = por %p117, %p118
      %p120 = scmp.ne.s32.totalorder %s112, %s115
      %p121 = scmp.eq.s32.totalorder %s38, 0
      %p122 = por %p120, %p121
      %p123 = scmp.ne.s32.totalorder %s112, %s115
      %p124 = scmp.eq.s32.totalorder %s43, 3
      %p125 = por %p123, %p124
      %p126 = scmp.ne.s32.totalorder %s115, %s116
      %p127 = scmp.eq.s32.totalorder %s43, 0
      %p128 = por %p126, %p127
      %p129 = scmp.ne.s32.totalorder %s115, %s116
      %p130 = scmp.eq.s32.totalorder %s44, 3
      %p131 = por %p129, %p130
      %p133 = scmp.ne.s32.totalorder %s116, %s132
      %p134 = scmp.eq.s32.totalorder %s44, 0
      %p135 = por %p133, %p134
      %s136 = ssub.s32 %s45, %s57
      %p137 = scmp.eq.s32.totalorder %s136, 0
      %s139 = sadd.s32 %s138, 1
      %s140 = scalar_select %p137, %s138, %s139
      %p143 = pneg %p137
      %p144 = scmp.eq.s32.totalorder %s38, 3
      %p145 = por %p143, %p144
      %p146 = scmp.ne.s32.totalorder %s138, %s141
      %p147 = scmp.eq.s32.totalorder %s38, 0
      %p148 = por %p146, %p147
      %p149 = scmp.ne.s32.totalorder %s138, %s141
      %p150 = scmp.eq.s32.totalorder %s43, 3
      %p151 = por %p149, %p150
      %p152 = scmp.ne.s32.totalorder %s141, %s142
      %p153 = scmp.eq.s32.totalorder %s43, 0
      %p154 = por %p152, %p153
      %p155 = scmp.ne.s32.totalorder %s141, %s142
      %p156 = scmp.eq.s32.totalorder %s44, 3
      %p157 = por %p155, %p156
      %p159 = scmp.ne.s32.totalorder %s142, %s158
      %p160 = scmp.eq.s32.totalorder %s44, 0
      %p161 = por %p159, %p160
      %s162 = ssub.s32 %s46, %s53
      %p163 = scmp.eq.s32.totalorder %s162, 0
      %s165 = sadd.s32 %s164, 1
      %s166 = scalar_select %p163, %s164, %s165
      %p169 = pneg %p163
      %p170 = scmp.eq.s32.totalorder %s38, 3
      %p171 = por %p169, %p170
      %p172 = scmp.ne.s32.totalorder %s164, %s167
      %p173 = scmp.eq.s32.totalorder %s38, 0
      %p174 = por %p172, %p173
      %p175 = scmp.ne.s32.totalorder %s164, %s167
      %p176 = scmp.eq.s32.totalorder %s43, 3
      %p177 = por %p175, %p176
      %p178 = scmp.ne.s32.totalorder %s167, %s168
      %p179 = scmp.eq.s32.totalorder %s43, 0
      %p180 = por %p178, %p179
      %p181 = scmp.ne.s32.totalorder %s167, %s168
      %p182 = scmp.eq.s32.totalorder %s44, 3
      %p183 = por %p181, %p182
      %p185 = scmp.ne.s32.totalorder %s168, %s184
      %p186 = scmp.eq.s32.totalorder %s44, 0
      %p187 = por %p185, %p186
      %s188 = ssub.s32 %s46, %s53
      %p189 = scmp.eq.s32.totalorder %s188, 0
      %s191 = sadd.s32 %s190, 1
      %s192 = scalar_select %p189, %s190, %s191
      %p195 = pneg %p189
      %p196 = scmp.eq.s32.totalorder %s38, 3
      %p197 = por %p195, %p196
      %p198 = scmp.ne.s32.totalorder %s190, %s193
      %p199 = scmp.eq.s32.totalorder %s38, 0
      %p200 = por %p198, %p199
      %p201 = scmp.ne.s32.totalorder %s190, %s193
      %p202 = scmp.eq.s32.totalorder %s43, 3
      %p203 = por %p201, %p202
      %p204 = scmp.ne.s32.totalorder %s193, %s194
      %p205 = scmp.eq.s32.totalorder %s43, 0
      %p206 = por %p204, %p205
      %p207 = scmp.ne.s32.totalorder %s193, %s194
      %p208 = scmp.eq.s32.totalorder %s44, 3
      %p209 = por %p207, %p208
      %p211 = scmp.ne.s32.totalorder %s194, %s210
      %p212 = scmp.eq.s32.totalorder %s44, 0
      %p213 = por %p211, %p212
      %s214 = ssub.s32 %s46, %s53
      %p215 = scmp.eq.s32.totalorder %s214, 0
      %s217 = sadd.s32 %s216, 1
      %s218 = scalar_select %p215, %s216, %s217
      %p221 = pneg %p215
      %p222 = scmp.eq.s32.totalorder %s38, 3
      %p223 = por %p221, %p222
      %p224 = scmp.ne.s32.totalorder %s216, %s219
      %p225 = scmp.eq.s32.totalorder %s38, 0
      %p226 = por %p224, %p225
      %p227 = scmp.ne.s32.totalorder %s216, %s219
      %p228 = scmp.eq.s32.totalorder %s43, 3
      %p229 = por %p227, %p228
      %p230 = scmp.ne.s32.totalorder %s219, %s220
      %p231 = scmp.eq.s32.totalorder %s43, 0
      %p232 = por %p230, %p231
      %p233 = scmp.ne.s32.totalorder %s219, %s220
      %p234 = scmp.eq.s32.totalorder %s44, 3
      %p235 = por %p233, %p234
      %p237 = scmp.ne.s32.totalorder %s220, %s236
      %p238 = scmp.eq.s32.totalorder %s44, 0
      %p239 = por %p237, %p238
      %s240 = ssub.s32 %s46, %s53
      %p241 = scmp.eq.s32.totalorder %s240, 0
      %s243 = sadd.s32 %s242, 1
      %s244 = scalar_select %p241, %s242, %s243
      %p247 = pneg %p241
      %p248 = scmp.eq.s32.totalorder %s38, 3
      %p249 = por %p247, %p248
      %p250 = scmp.ne.s32.totalorder %s242, %s245
      %p251 = scmp.eq.s32.totalorder %s38, 0
      %p252 = por %p250, %p251
      %p253 = scmp.ne.s32.totalorder %s242, %s245
      %p254 = scmp.eq.s32.totalorder %s43, 3
      %p255 = por %p253, %p254
      %p256 = scmp.ne.s32.totalorder %s245, %s246
      %p257 = scmp.eq.s32.totalorder %s43, 0
      %p258 = por %p256, %p257
      %p259 = scmp.ne.s32.totalorder %s245, %s246
      %p260 = scmp.eq.s32.totalorder %s44, 3
      %p261 = por %p259, %p260
      %p263 = scmp.ne.s32.totalorder %s246, %s262
      %p264 = scmp.eq.s32.totalorder %s44, 0
      %p265 = por %p263, %p264
      %s266 = ssub.s32 %s46, %s53
      %p267 = scmp.eq.s32.totalorder %s266, 0
      %s269 = sadd.s32 %s268, 1
      %s270 = scalar_select %p267, %s268, %s269
      %p273 = pneg %p267
      %p274 = scmp.eq.s32.totalorder %s38, 3
      %p275 = por %p273, %p274
      %p276 = scmp.ne.s32.totalorder %s268, %s271
      %p277 = scmp.eq.s32.totalorder %s38, 0
      %p278 = por %p276, %p277
      %p279 = scmp.ne.s32.totalorder %s268, %s271
      %p280 = scmp.eq.s32.totalorder %s43, 3
      %p281 = por %p279, %p280
      %p282 = scmp.ne.s32.totalorder %s271, %s272
      %p283 = scmp.eq.s32.totalorder %s43, 0
      %p284 = por %p282, %p283
      %p285 = scmp.ne.s32.totalorder %s271, %s272
      %p286 = scmp.eq.s32.totalorder %s44, 3
      %p287 = por %p285, %p286
      %p289 = scmp.ne.s32.totalorder %s272, %s288
      %p290 = scmp.eq.s32.totalorder %s44, 0
      %p291 = por %p289, %p290
      %s292 = ssub.s32 %s46, %s53
      %p293 = scmp.eq.s32.totalorder %s292, 0
      %s295 = sadd.s32 %s294, 1
      %s296 = scalar_select %p293, %s294, %s295
      %p299 = pneg %p293
      %p300 = scmp.eq.s32.totalorder %s38, 3
      %p301 = por %p299, %p300
      %p302 = scmp.ne.s32.totalorder %s294, %s297
      %p303 = scmp.eq.s32.totalorder %s38, 0
      %p304 = por %p302, %p303
      %p305 = scmp.ne.s32.totalorder %s294, %s297
      %p306 = scmp.eq.s32.totalorder %s43, 3
      %p307 = por %p305, %p306
      %p308 = scmp.ne.s32.totalorder %s297, %s298
      %p309 = scmp.eq.s32.totalorder %s43, 0
      %p310 = por %p308, %p309
      %p311 = scmp.ne.s32.totalorder %s297, %s298
      %p312 = scmp.eq.s32.totalorder %s44, 3
      %p313 = por %p311, %p312
      %p315 = scmp.ne.s32.totalorder %s298, %s314
      %p316 = scmp.eq.s32.totalorder %s44, 0
      %p317 = por %p315, %p316
      %s318 = ssub.s32 %s46, %s53
      %p319 = scmp.eq.s32.totalorder %s318, 0
      %s321 = sadd.s32 %s320, 1
      %s322 = scalar_select %p319, %s320, %s321
      %p325 = pneg %p319
      %p326 = scmp.eq.s32.totalorder %s38, 3
      %p327 = por %p325, %p326
      %p328 = scmp.ne.s32.totalorder %s320, %s323
      %p329 = scmp.eq.s32.totalorder %s38, 0
      %p330 = por %p328, %p329
      %p331 = scmp.ne.s32.totalorder %s320, %s323
      %p332 = scmp.eq.s32.totalorder %s43, 3
      %p333 = por %p331, %p332
      %p334 = scmp.ne.s32.totalorder %s323, %s324
      %p335 = scmp.eq.s32.totalorder %s43, 0
      %p336 = por %p334, %p335
      %p337 = scmp.ne.s32.totalorder %s323, %s324
      %p338 = scmp.eq.s32.totalorder %s44, 3
      %p339 = por %p337, %p338
      %p341 = scmp.ne.s32.totalorder %s324, %s340
      %p342 = scmp.eq.s32.totalorder %s44, 0
      %p343 = por %p341, %p342
      %s344 = ssub.s32 %s46, %s53
      %p345 = scmp.eq.s32.totalorder %s344, 0
      %s347 = sadd.s32 %s346, 1
      %s348 = scalar_select %p345, %s346, %s347
      %p351 = pneg %p345
      %p352 = scmp.eq.s32.totalorder %s38, 3
      %p353 = por %p351, %p352
      %p354 = scmp.ne.s32.totalorder %s346, %s349
      %p355 = scmp.eq.s32.totalorder %s38, 0
      %p356 = por %p354, %p355
      %p357 = scmp.ne.s32.totalorder %s346, %s349
      %p358 = scmp.eq.s32.totalorder %s43, 3
      %p359 = por %p357, %p358
      %p360 = scmp.ne.s32.totalorder %s349, %s350
      %p361 = scmp.eq.s32.totalorder %s43, 0
      %p362 = por %p360, %p361
      %p363 = scmp.ne.s32.totalorder %s349, %s350
      %p364 = scmp.eq.s32.totalorder %s44, 3
      %p365 = por %p363, %p364
      %p367 = scmp.ne.s32.totalorder %s350, %s366
      %p368 = scmp.eq.s32.totalorder %s44, 0
      %p369 = por %p367, %p368
      %s370 = ssub.s32 %s46, %s53
      %p371 = scmp.eq.s32.totalorder %s370, 0
      %s373 = sadd.s32 %s372, 1
      %s374 = scalar_select %p371, %s372, %s373
      %p377 = pneg %p371
      %p378 = scmp.eq.s32.totalorder %s38, 3
      %p379 = por %p377, %p378
      %p380 = scmp.ne.s32.totalorder %s372, %s375
      %p381 = scmp.eq.s32.totalorder %s38, 0
      %p382 = por %p380, %p381
      %p383 = scmp.ne.s32.totalorder %s372, %s375
      %p384 = scmp.eq.s32.totalorder %s43, 3
      %p385 = por %p383, %p384
      %p386 = scmp.ne.s32.totalorder %s375, %s376
      %p387 = scmp.eq.s32.totalorder %s43, 0
      %p388 = por %p386, %p387
      %p389 = scmp.ne.s32.totalorder %s375, %s376
      %p390 = scmp.eq.s32.totalorder %s44, 3
      %p391 = por %p389, %p390
      %p393 = scmp.ne.s32.totalorder %s376, %s392
      %p394 = scmp.eq.s32.totalorder %s44, 0
      %p395 = por %p393, %p394
      %s396 = ssub.s32 %s46, %s53
      %p397 = scmp.eq.s32.totalorder %s396, 0
      %s399 = sadd.s32 %s398, 1
      %s400 = scalar_select %p397, %s398, %s399
      %p403 = pneg %p397
      %p404 = scmp.eq.s32.totalorder %s38, 3
      %p405 = por %p403, %p404
      %p406 = scmp.ne.s32.totalorder %s398, %s401
      %p407 = scmp.eq.s32.totalorder %s38, 0
      %p408 = por %p406, %p407
      %p409 = scmp.ne.s32.totalorder %s398, %s401
      %p410 = scmp.eq.s32.totalorder %s43, 3
      %p411 = por %p409, %p410
      %p412 = scmp.ne.s32.totalorder %s401, %s402
      %p413 = scmp.eq.s32.totalorder %s43, 0
      %p414 = por %p412, %p413
      %p415 = scmp.ne.s32.totalorder %s401, %s402
      %p416 = scmp.eq.s32.totalorder %s44, 3
      %p417 = por %p415, %p416
      %p419 = scmp.ne.s32.totalorder %s402, %s418
      %p420 = scmp.eq.s32.totalorder %s44, 0
      %p421 = por %p419, %p420
      %s422 = ssub.s32 %s45, %s57
      %p423 = scmp.eq.s32.totalorder %s422, 0
      %s425 = sadd.s32 %s424, 1
      %s426 = scalar_select %p423, %s424, %s425
      %p429 = pneg %p423
      %p430 = scmp.eq.s32.totalorder %s38, 3
      %p431 = por %p429, %p430
      %p432 = scmp.ne.s32.totalorder %s424, %s427
      %p433 = scmp.eq.s32.totalorder %s38, 0
      %p434 = por %p432, %p433
      %p435 = scmp.ne.s32.totalorder %s424, %s427
      %p436 = scmp.eq.s32.totalorder %s43, 3
      %p437 = por %p435, %p436
      %p438 = scmp.ne.s32.totalorder %s427, %s428
      %p439 = scmp.eq.s32.totalorder %s43, 0
      %p440 = por %p438, %p439
      %p441 = scmp.ne.s32.totalorder %s427, %s428
      %p442 = scmp.eq.s32.totalorder %s44, 3
      %p443 = por %p441, %p442
      %p445 = scmp.ne.s32.totalorder %s428, %s444
      %p446 = scmp.eq.s32.totalorder %s44, 0
      %p447 = por %p445, %p446
      %p448 = scmp.le.s32.totalorder 1, %s38
      %p449 = scmp.lt.s32.totalorder %s38, 5
      %p450 = pnand %p448, %p449
      %p451 = pneg %p450
      // Predicated region
      $region9: #{tpu_custom_call.1} parent=5 // pred_check
        _
      $region10: #{tpu_custom_call.1} parent=5 // pred_check_branch
        %453 = sbr.rel (%p450) target = $region12
      $region11: #{tpu_custom_call.1} parent=5 // pred_region
        %s454 = ssub.s32 %s38, 1
      $region12: #{tpu_custom_call.1} parent=5 // pred_fallthru
        _
      %p455 = scmp.lt.s32.totalorder %s38, 4
      // Predicated region
      $region13: #{tpu_custom_call.1} parent=5 // pred_check
        %p456 = pneg %p455
      $region14: #{tpu_custom_call.1} parent=5 // pred_check_branch
        %458 = sbr.rel (%p456) target = $region16
      $region15: #{tpu_custom_call.1} parent=5 // pred_region
        // Predicated region
        $region17: #{tpu_custom_call.1} parent=15 // pred_check
          %p459 = pneg %p70
        $region18: #{tpu_custom_call.1} parent=15 // pred_check_branch
          %461 = sbr.rel (%p459) target = $region20
        $region19: #{tpu_custom_call.1} parent=15 // pred_region
          %s462 = sand.u32 %s60, 1
          %s463 = scalar_lea.sflag [#allocation3], %s462
          %s464 = sand.u32 %s60, 1
          %s465 = smul.addr %s464, 8
          %s466 = scalar_lea.vmem [#allocation2], %s465
          %s468 = ssub.s32 128, 128
          %469 = vsyncadd %s463, %s468
          %s470 = smul.addr %s45, 128
          %s471 = scalar_lea.hbm %s0, %s470
          %s473 = sshll.u32 %s466, 4
          %s474 = int_to_ptr.vmem [resolvable:$true] %s473
          %476 = dma.hbm_to_vmem [thread:$0]  %s471, 128, %s474, %s463
        $region20: #{tpu_custom_call.1} parent=15 // pred_fallthru
          _
        // Predicated region
        $region21: #{tpu_custom_call.1} parent=15 // pred_check
          %p477 = pneg %p96
        $region22: #{tpu_custom_call.1} parent=15 // pred_check_branch
          %479 = sbr.rel (%p477) target = $region24
        $region23: #{tpu_custom_call.1} parent=15 // pred_region
          %s480 = sand.u32 %s38, 1
          %s481 = scalar_lea.sflag [#allocation6], %s480
          %s482 = sand.u32 %s86, 1
          %s483 = smul.addr %s482, 8
          %s484 = scalar_lea.vmem [#allocation5], %s483
          %s486 = ssub.s32 128, 128
          %487 = vsyncadd %s481, %s486
          %s488 = smul.addr %s45, 128
          %s489 = scalar_lea.hbm %s1, %s488
          %s491 = sshll.u32 %s484, 4
          %s492 = int_to_ptr.vmem [resolvable:$true] %s491
          %494 = dma.hbm_to_vmem [thread:$0]  %s489, 128, %s492, %s481
        $region24: #{tpu_custom_call.1} parent=15 // pred_fallthru
          _
        // Predicated region
        $region25: #{tpu_custom_call.1} parent=15 // pred_check
          %p495 = pneg %p122
        $region26: #{tpu_custom_call.1} parent=15 // pred_check_branch
          %497 = sbr.rel (%p495) target = $region28
        $region27: #{tpu_custom_call.1} parent=15 // pred_region
          %s498 = sand.u32 %s38, 1
          %s499 = scalar_lea.sflag [#allocation6], %s498
          %s500 = sand.u32 %s112, 1
          %s501 = smul.addr %s500, 4
          %s502 = scalar_lea.vmem [#allocation7], %s501
          %s504 = ssub.s32 64, 64
          %505 = vsyncadd %s499, %s504
          %s506 = smul.addr %s45, 64
          %s507 = scalar_lea.hbm %s2, %s506
          %s509 = sshll.u32 %s502, 4
          %s510 = int_to_ptr.vmem [resolvable:$true] %s509
          %512 = dma.hbm_to_vmem [thread:$0]  %s507, 64, %s510, %s499
        $region28: #{tpu_custom_call.1} parent=15 // pred_fallthru
          _
        // Predicated region
        $region29: #{tpu_custom_call.1} parent=15 // pred_check
          %p513 = pneg %p148
        $region30: #{tpu_custom_call.1} parent=15 // pred_check_branch
          %515 = sbr.rel (%p513) target = $region32
        $region31: #{tpu_custom_call.1} parent=15 // pred_region
          %s516 = sand.u32 %s38, 1
          %s517 = scalar_lea.sflag [#allocation9], %s516
          %s518 = sand.u32 %s138, 1
          %s519 = smul.addr %s518, 8
          %s520 = scalar_lea.vmem [#allocation8], %s519
          %s522 = ssub.s32 128, 128
          %523 = vsyncadd %s517, %s522
          %s524 = smul.addr %s45, 128
          %s525 = scalar_lea.hbm %s3, %s524
          %s527 = sshll.u32 %s520, 4
          %s528 = int_to_ptr.vmem [resolvable:$true] %s527
          %530 = dma.hbm_to_vmem [thread:$0]  %s525, 128, %s528, %s517
        $region32: #{tpu_custom_call.1} parent=15 // pred_fallthru
          _
        // Predicated region
        $region33: #{tpu_custom_call.1} parent=15 // pred_check
          %p531 = pneg %p174
        $region34: #{tpu_custom_call.1} parent=15 // pred_check_branch
          %533 = sbr.rel (%p531) target = $region36
        $region35: #{tpu_custom_call.1} parent=15 // pred_region
          %p534 = scmp.lt.s32.totalorder %s46, 1
          %s535 = scalar_select %p534, %s46, 1
          %s536 = smul.addr %s535, 4
          %s537 = smul.addr %s536, 4
          %s538 = scalar_lea.vmem %s4, %s537
        $region36: #{tpu_custom_call.1} parent=15 // pred_fallthru
          _
        // Predicated region
        $region37: #{tpu_custom_call.1} parent=15 // pred_check
          %p539 = pneg %p200
        $region38: #{tpu_custom_call.1} parent=15 // pred_check_branch
          %541 = sbr.rel (%p539) target = $region40
        $region39: #{tpu_custom_call.1} parent=15 // pred_region
          %p542 = scmp.lt.s32.totalorder %s46, 1
          %s543 = scalar_select %p542, %s46, 1
          %s544 = smul.addr %s543, 4
          %s545 = smul.addr %s544, 4
          %s546 = scalar_lea.vmem %s5, %s545
        $region40: #{tpu_custom_call.1} parent=15 // pred_fallthru
          _
        // Predicated region
        $region41: #{tpu_custom_call.1} parent=15 // pred_check
          %p547 = pneg %p226
        $region42: #{tpu_custom_call.1} parent=15 // pred_check_branch
          %549 = sbr.rel (%p547) target = $region44
        $region43: #{tpu_custom_call.1} parent=15 // pred_region
          %p550 = scmp.lt.s32.totalorder %s46, 1
          %s551 = scalar_select %p550, %s46, 1
          %s552 = smul.addr %s551, 4
          %s553 = smul.addr %s552, 4
          %s554 = scalar_lea.vmem %s6, %s553
        $region44: #{tpu_custom_call.1} parent=15 // pred_fallthru
          _
        // Predicated region
        $region45: #{tpu_custom_call.1} parent=15 // pred_check
          %p555 = pneg %p252
        $region46: #{tpu_custom_call.1} parent=15 // pred_check_branch
          %557 = sbr.rel (%p555) target = $region48
        $region47: #{tpu_custom_call.1} parent=15 // pred_region
          %s558 = sand.u32 %s38, 1
          %s559 = scalar_lea.sflag [#allocation9], %s558
          %s560 = sand.u32 %s242, 1
          %s561 = smul.addr %s560, 16
          %s562 = scalar_lea.vmem [#allocation10], %s561
          %s564 = ssub.s32 256, 256
          %565 = vsyncadd %s559, %s564
          %s566 = smul.addr %s46, 4
          %s567 = smul.addr %s566, 64
          %s568 = scalar_lea.hbm %s7, %s567
          %s569 = sshll.u32 %s562, 4
          %s570 = int_to_ptr.vmem [resolvable:$true] %s569
          %575 = dma.hbm_to_vmem [thread:$0]  %s568, 256, %s570, %s559, 64, 64, 4
        $region48: #{tpu_custom_call.1} parent=15 // pred_fallthru
          _
        // Predicated region
        $region49: #{tpu_custom_call.1} parent=15 // pred_check
          %p576 = pneg %p278
        $region50: #{tpu_custom_call.1} parent=15 // pred_check_branch
          %578 = sbr.rel (%p576) target = $region52
        $region51: #{tpu_custom_call.1} parent=15 // pred_region
          %s579 = sand.u32 %s38, 1
          %s580 = scalar_lea.sflag [#allocation12], %s579
          %s581 = sand.u32 %s268, 1
          %s582 = smul.addr %s581, 16
          %s583 = scalar_lea.vmem [#allocation11], %s582
          %s585 = ssub.s32 256, 256
          %586 = vsyncadd %s580, %s585
          %s587 = smul.addr %s46, 4
          %s588 = smul.addr %s587, 64
          %s589 = scalar_lea.hbm %s8, %s588
          %s590 = sshll.u32 %s583, 4
          %s591 = int_to_ptr.vmem [resolvable:$true] %s590
          %596 = dma.hbm_to_vmem [thread:$0]  %s589, 256, %s591, %s580, 64, 64, 4
        $region52: #{tpu_custom_call.1} parent=15 // pred_fallthru
          _
        // Predicated region
        $region53: #{tpu_custom_call.1} parent=15 // pred_check
          %p597 = pneg %p304
        $region54: #{tpu_custom_call.1} parent=15 // pred_check_branch
          %599 = sbr.rel (%p597) target = $region56
        $region55: #{tpu_custom_call.1} parent=15 // pred_region
          %s600 = sand.u32 %s38, 1
          %s601 = scalar_lea.sflag [#allocation12], %s600
          %s602 = sand.u32 %s294, 1
          %s603 = smul.addr %s602, 16
          %s604 = scalar_lea.vmem [#allocation13], %s603
          %s606 = ssub.s32 256, 256
          %607 = vsyncadd %s601, %s606
          %s608 = smul.addr %s46, 4
          %s609 = smul.addr %s608, 64
          %s610 = scalar_lea.hbm %s9, %s609
          %s611 = sshll.u32 %s604, 4
          %s612 = int_to_ptr.vmem [resolvable:$true] %s611
          %617 = dma.hbm_to_vmem [thread:$0]  %s610, 256, %s612, %s601, 64, 64, 4
        $region56: #{tpu_custom_call.1} parent=15 // pred_fallthru
          _
        // Predicated region
        $region57: #{tpu_custom_call.1} parent=15 // pred_check
          %p618 = pneg %p330
        $region58: #{tpu_custom_call.1} parent=15 // pred_check_branch
          %620 = sbr.rel (%p618) target = $region60
        $region59: #{tpu_custom_call.1} parent=15 // pred_region
          %s621 = sand.u32 %s38, 1
          %s622 = scalar_lea.sflag [#allocation15], %s621
          %s623 = sand.u32 %s320, 1
          %s624 = smul.addr %s623, 16
          %s625 = scalar_lea.vmem [#allocation14], %s624
          %s627 = ssub.s32 256, 256
          %628 = vsyncadd %s622, %s627
          %s629 = smul.addr %s46, 4
          %s630 = smul.addr %s629, 64
          %s631 = scalar_lea.hbm %s10, %s630
          %s632 = sshll.u32 %s625, 4
          %s633 = int_to_ptr.vmem [resolvable:$true] %s632
          %638 = dma.hbm_to_vmem [thread:$0]  %s631, 256, %s633, %s622, 64, 64, 4
        $region60: #{tpu_custom_call.1} parent=15 // pred_fallthru
          _
        // Predicated region
        $region61: #{tpu_custom_call.1} parent=15 // pred_check
          %p639 = pneg %p356
        $region62: #{tpu_custom_call.1} parent=15 // pred_check_branch
          %641 = sbr.rel (%p639) target = $region64
        $region63: #{tpu_custom_call.1} parent=15 // pred_region
          %s642 = sand.u32 %s38, 1
          %s643 = scalar_lea.sflag [#allocation15], %s642
          %s644 = sand.u32 %s346, 1
          %s645 = scalar_lea.vmem [#allocation16], %s644
          %s647 = ssub.s32 16, 16
          %648 = vsyncadd %s643, %s647
          %s649 = smul.addr %s46, 16
          %s650 = scalar_lea.hbm %s11, %s649
          %s652 = sshll.u32 %s645, 4
          %s653 = int_to_ptr.vmem [resolvable:$true] %s652
          %655 = dma.hbm_to_vmem [thread:$0]  %s650, 16, %s653, %s643
        $region64: #{tpu_custom_call.1} parent=15 // pred_fallthru
          _
        // Predicated region
        $region65: #{tpu_custom_call.1} parent=15 // pred_check
          %p656 = pneg %p382
        $region66: #{tpu_custom_call.1} parent=15 // pred_check_branch
          %658 = sbr.rel (%p656) target = $region68
        $region67: #{tpu_custom_call.1} parent=15 // pred_region
          %p659 = scmp.lt.s32.totalorder %s46, 1
          %s660 = scalar_select %p659, %s46, 1
          %s661 = smul.addr %s660, 8
          %s662 = smul.addr %s661, 4
          %s663 = scalar_lea.vmem %s12, %s662
        $region68: #{tpu_custom_call.1} parent=15 // pred_fallthru
          _
        // Predicated region
        $region69: #{tpu_custom_call.1} parent=15 // pred_check
          %p664 = pneg %p408
        $region70: #{tpu_custom_call.1} parent=15 // pred_check_branch
          %666 = sbr.rel (%p664) target = $region72
        $region71: #{tpu_custom_call.1} parent=15 // pred_region
          %p667 = scmp.lt.s32.totalorder %s46, 1
          %s668 = scalar_select %p667, %s46, 1
          %s669 = smul.addr %s668, 8
          %s670 = scalar_lea.vmem %s13, %s669
        $region72: #{tpu_custom_call.1} parent=15 // pred_fallthru
          _
      $region16: #{tpu_custom_call.1} parent=5 // pred_fallthru
        _
      %p671 = scmp.le.s32.totalorder 1, %s38
      %p672 = scmp.lt.s32.totalorder %s38, 5
      %p673 = pnand %p671, %p672
      %p674 = pneg %p673
      // Predicated region
      $region73: #{tpu_custom_call.1} parent=5 // pred_check
        _
      $region74: #{tpu_custom_call.1} parent=5 // pred_check_branch
        %676 = sbr.rel (%p673) target = $region76
      $region75: #{tpu_custom_call.1} parent=5 // pred_region
        %s677 = ssub.s32 %s38, 1
        %s678 = sand.u32 %s63, 1
        %s679 = scalar_lea.sflag [#allocation3], %s678
        %s680 = sand.u32 %s63, 1
        %s681 = smul.addr %s680, 8
        %s682 = scalar_lea.vmem [#allocation2], %s681
        // Predicated region
        $region77: #{tpu_custom_call.1} parent=75 // pred_check
          %p683 = pneg %p76
        $region78: #{tpu_custom_call.1} parent=75 // pred_check_branch
          %685 = sbr.rel (%p683) target = $region80
        $region79: #{tpu_custom_call.1} parent=75 // pred_region
          %686 = dma.done %s679, 128
        $region80: #{tpu_custom_call.1} parent=75 // pred_fallthru
          _
        %s687 = sand.u32 %s43, 1
        %s688 = scalar_lea.sflag [#allocation6], %s687
        %s689 = sand.u32 %s89, 1
        %s690 = smul.addr %s689, 8
        %s691 = scalar_lea.vmem [#allocation5], %s690
        // Predicated region
        $region81: #{tpu_custom_call.1} parent=75 // pred_check
          %p692 = pneg %p102
        $region82: #{tpu_custom_call.1} parent=75 // pred_check_branch
          %694 = sbr.rel (%p692) target = $region84
        $region83: #{tpu_custom_call.1} parent=75 // pred_region
          %695 = dma.done %s688, 128
        $region84: #{tpu_custom_call.1} parent=75 // pred_fallthru
          _
        %s696 = sand.u32 %s43, 1
        %s697 = scalar_lea.sflag [#allocation6], %s696
        %s698 = sand.u32 %s115, 1
        %s699 = smul.addr %s698, 4
        %s700 = scalar_lea.vmem [#allocation7], %s699
        // Predicated region
        $region85: #{tpu_custom_call.1} parent=75 // pred_check
          %p701 = pneg %p128
        $region86: #{tpu_custom_call.1} parent=75 // pred_check_branch
          %703 = sbr.rel (%p701) target = $region88
        $region87: #{tpu_custom_call.1} parent=75 // pred_region
          %704 = dma.done %s697, 64
        $region88: #{tpu_custom_call.1} parent=75 // pred_fallthru
          _
        %s705 = sand.u32 %s43, 1
        %s706 = scalar_lea.sflag [#allocation9], %s705
        %s707 = sand.u32 %s141, 1
        %s708 = smul.addr %s707, 8
        %s709 = scalar_lea.vmem [#allocation8], %s708
        // Predicated region
        $region89: #{tpu_custom_call.1} parent=75 // pred_check
          %p710 = pneg %p154
        $region90: #{tpu_custom_call.1} parent=75 // pred_check_branch
          %712 = sbr.rel (%p710) target = $region92
        $region91: #{tpu_custom_call.1} parent=75 // pred_region
          %713 = dma.done %s706, 128
        $region92: #{tpu_custom_call.1} parent=75 // pred_fallthru
          _
        %s714 = sand.u32 %s43, 1
        %s715 = scalar_lea.sflag [#allocation9], %s714
        %s716 = sand.u32 %s245, 1
        %s717 = smul.addr %s716, 16
        %s718 = scalar_lea.vmem [#allocation10], %s717
        // Predicated region
        $region93: #{tpu_custom_call.1} parent=75 // pred_check
          %p719 = pneg %p258
        $region94: #{tpu_custom_call.1} parent=75 // pred_check_branch
          %721 = sbr.rel (%p719) target = $region96
        $region95: #{tpu_custom_call.1} parent=75 // pred_region
          %722 = dma.done %s715, 256
        $region96: #{tpu_custom_call.1} parent=75 // pred_fallthru
          _
        %s723 = sand.u32 %s43, 1
        %s724 = scalar_lea.sflag [#allocation12], %s723
        %s725 = sand.u32 %s271, 1
        %s726 = smul.addr %s725, 16
        %s727 = scalar_lea.vmem [#allocation11], %s726
        // Predicated region
        $region97: #{tpu_custom_call.1} parent=75 // pred_check
          %p728 = pneg %p284
        $region98: #{tpu_custom_call.1} parent=75 // pred_check_branch
          %730 = sbr.rel (%p728) target = $region100
        $region99: #{tpu_custom_call.1} parent=75 // pred_region
          %731 = dma.done %s724, 256
        $region100: #{tpu_custom_call.1} parent=75 // pred_fallthru
          _
        %s732 = sand.u32 %s43, 1
        %s733 = scalar_lea.sflag [#allocation12], %s732
        %s734 = sand.u32 %s297, 1
        %s735 = smul.addr %s734, 16
        %s736 = scalar_lea.vmem [#allocation13], %s735
        // Predicated region
        $region101: #{tpu_custom_call.1} parent=75 // pred_check
          %p737 = pneg %p310
        $region102: #{tpu_custom_call.1} parent=75 // pred_check_branch
          %739 = sbr.rel (%p737) target = $region104
        $region103: #{tpu_custom_call.1} parent=75 // pred_region
          %740 = dma.done %s733, 256
        $region104: #{tpu_custom_call.1} parent=75 // pred_fallthru
          _
        %s741 = sand.u32 %s43, 1
        %s742 = scalar_lea.sflag [#allocation15], %s741
        %s743 = sand.u32 %s323, 1
        %s744 = smul.addr %s743, 16
        %s745 = scalar_lea.vmem [#allocation14], %s744
        // Predicated region
        $region105: #{tpu_custom_call.1} parent=75 // pred_check
          %p746 = pneg %p336
        $region106: #{tpu_custom_call.1} parent=75 // pred_check_branch
          %748 = sbr.rel (%p746) target = $region108
        $region107: #{tpu_custom_call.1} parent=75 // pred_region
          %749 = dma.done %s742, 256
        $region108: #{tpu_custom_call.1} parent=75 // pred_fallthru
          _
        %s750 = sand.u32 %s43, 1
        %s751 = scalar_lea.sflag [#allocation15], %s750
        %s752 = sand.u32 %s349, 1
        %s753 = scalar_lea.vmem [#allocation16], %s752
        // Predicated region
        $region109: #{tpu_custom_call.1} parent=75 // pred_check
          %p754 = pneg %p362
        $region110: #{tpu_custom_call.1} parent=75 // pred_check_branch
          %756 = sbr.rel (%p754) target = $region112
        $region111: #{tpu_custom_call.1} parent=75 // pred_region
          %757 = dma.done %s751, 16
        $region112: #{tpu_custom_call.1} parent=75 // pred_fallthru
          _
        %s758 = sand.u32 %s63, 1
        %s759 = scalar_lea.sflag [#allocation3], %s758
        %s760 = sand.u32 %s63, 1
        %s761 = smul.addr %s760, 8
        %s762 = scalar_lea.vmem [#allocation2], %s761
        %p763 = pneg %p76
        %p764 = pneg %p73
        %s765 = sand.u32 %s43, 1
        %s766 = scalar_lea.sflag [#allocation6], %s765
        %s767 = sand.u32 %s89, 1
        %s768 = smul.addr %s767, 8
        %s769 = scalar_lea.vmem [#allocation5], %s768
        %p770 = pneg %p102
        %p771 = pneg %p99
        %s772 = sand.u32 %s43, 1
        %s773 = scalar_lea.sflag [#allocation6], %s772
        %s774 = sand.u32 %s115, 1
        %s775 = smul.addr %s774, 4
        %s776 = scalar_lea.vmem [#allocation7], %s775
        %p777 = pneg %p128
        %p778 = pneg %p125
        %s779 = sand.u32 %s43, 1
        %s780 = scalar_lea.sflag [#allocation9], %s779
        %s781 = sand.u32 %s141, 1
        %s782 = smul.addr %s781, 8
        %s783 = scalar_lea.vmem [#allocation8], %s782
        %p784 = pneg %p154
        %p785 = pneg %p151
        %p786 = scmp.lt.s32.totalorder %s48, 1
        %s787 = scalar_select %p786, %s48, 1
        %s788 = smul.addr %s787, 4
        %s789 = smul.addr %s788, 4
        %s790 = scalar_lea.vmem %s4, %s789
        %p791 = pneg %p180
        %p792 = pneg %p177
        %p793 = scmp.lt.s32.totalorder %s48, 1
        %s794 = scalar_select %p793, %s48, 1
        %s795 = smul.addr %s794, 4
        %s796 = smul.addr %s795, 4
        %s797 = scalar_lea.vmem %s5, %s796
        %p798 = pneg %p206
        %p799 = pneg %p203
        %p800 = scmp.lt.s32.totalorder %s48, 1
        %s801 = scalar_select %p800, %s48, 1
        %s802 = smul.addr %s801, 4
        %s803 = smul.addr %s802, 4
        %s804 = scalar_lea.vmem %s6, %s803
        %p805 = pneg %p232
        %p806 = pneg %p229
        %s807 = sand.u32 %s43, 1
        %s808 = scalar_lea.sflag [#allocation9], %s807
        %s809 = sand.u32 %s245, 1
        %s810 = smul.addr %s809, 16
        %s811 = scalar_lea.vmem [#allocation10], %s810
        %p812 = pneg %p258
        %p813 = pneg %p255
        %s814 = sand.u32 %s43, 1
        %s815 = scalar_lea.sflag [#allocation12], %s814
        %s816 = sand.u32 %s271, 1
        %s817 = smul.addr %s816, 16
        %s818 = scalar_lea.vmem [#allocation11], %s817
        %p819 = pneg %p284
        %p820 = pneg %p281
        %s821 = sand.u32 %s43, 1
        %s822 = scalar_lea.sflag [#allocation12], %s821
        %s823 = sand.u32 %s297, 1
        %s824 = smul.addr %s823, 16
        %s825 = scalar_lea.vmem [#allocation13], %s824
        %p826 = pneg %p310
        %p827 = pneg %p307
        %s828 = sand.u32 %s43, 1
        %s829 = scalar_lea.sflag [#allocation15], %s828
        %s830 = sand.u32 %s323, 1
        %s831 = smul.addr %s830, 16
        %s832 = scalar_lea.vmem [#allocation14], %s831
        %p833 = pneg %p336
        %p834 = pneg %p333
        %s835 = sand.u32 %s43, 1
        %s836 = scalar_lea.sflag [#allocation15], %s835
        %s837 = sand.u32 %s349, 1
        %s838 = scalar_lea.vmem [#allocation16], %s837
        %p839 = pneg %p362
        %p840 = pneg %p359
        %p841 = scmp.lt.s32.totalorder %s48, 1
        %s842 = scalar_select %p841, %s48, 1
        %s843 = smul.addr %s842, 8
        %s844 = smul.addr %s843, 4
        %s845 = scalar_lea.vmem %s12, %s844
        %p846 = pneg %p388
        %p847 = pneg %p385
        %p848 = scmp.lt.s32.totalorder %s48, 1
        %s849 = scalar_select %p848, %s48, 1
        %s850 = smul.addr %s849, 8
        %s851 = scalar_lea.vmem %s13, %s850
        %p852 = pneg %p414
        %p853 = pneg %p411
        %p854 = pneg %p440
        %p855 = pneg %p437
        %s856 = sand.u32 %s427, 1
        %s857 = scalar_lea.sflag [#allocation4], %s856
        %s858 = sand.u32 %s427, 1
        %s859 = smul.addr %s858, 8
        %s860 = scalar_lea.vmem [#allocation17], %s859
        %p861 = scmp.lt.s32.totalorder %s48, 1
        %s862 = scalar_select %p861, %s48, 1
        %s863 = smul.addr %s862, 4
        %s864 = smul.addr %s863, 4
        %s865 = scalar_lea.vmem %s4, %s864
        %p866 = scmp.lt.s32.totalorder %s48, 1
        %s867 = scalar_select %p866, %s48, 1
        %s868 = smul.addr %s867, 4
        %s869 = smul.addr %s868, 4
        %s870 = scalar_lea.vmem %s5, %s869
        %p871 = scmp.lt.s32.totalorder %s48, 1
        %s872 = scalar_select %p871, %s48, 1
        %s873 = smul.addr %s872, 4
        %s874 = smul.addr %s873, 4
        %s875 = scalar_lea.vmem %s6, %s874
        %p876 = scmp.lt.s32.totalorder %s48, 1
        %s877 = scalar_select %p876, %s48, 1
        %s878 = smul.addr %s877, 8
        %s879 = smul.addr %s878, 4
        %s880 = scalar_lea.vmem %s12, %s879
        %p881 = scmp.lt.s32.totalorder %s48, 1
        %s882 = scalar_select %p881, %s48, 1
        %s883 = smul.addr %s882, 8
        %s884 = scalar_lea.vmem %s13, %s883
        %p886 = scmp.eq.s32.totalorder %s48, 0
        // Predicated region
        $region113: #{tpu_custom_call.1} parent=75 // pred_check
          %p887 = pneg %p886
        $region114: #{tpu_custom_call.1} parent=75 // pred_check_branch
          %889 = sbr.rel (%p887) target = $region116
        $region115: #{tpu_custom_call.1} parent=75 // pred_region
          %v890 = vld [vmem:[%s682] sm:$0xff]
          %vm891 = vcmask 261120
          %892 = vst.msk [vmem:[%s860] sm:$0xff] %vm891, %v890
        $region116: #{tpu_custom_call.1} parent=75 // pred_fallthru
          _
        %v893 = vld [vmem:[%s860] sm:$0xff]
        %v894 = vld [vmem:[%s700] sm:$0xf]
        %v895 = vld [vmem:[%s691] sm:$0xff]
        %v896 = vld [vmem:[%s709] sm:$0xff]
        %v897 = vld [vmem:[%s884] sm:$0xff]
        %v898 = vld [vmem:[%s865] sm:$0xf]
        %v899 = vld [vmem:[%s865 + $0x4] sm:$0xf]
        %v900 = vld [vmem:[%s865 + $0x8] sm:$0xf]
        %v901 = vld [vmem:[%s865 + $0xc] sm:$0xf]
        %v902 = vld [vmem:[%s870] sm:$0xf]
        %v903 = vld [vmem:[%s870 + $0x4] sm:$0xf]
        %v904 = vld [vmem:[%s870 + $0x8] sm:$0xf]
        %v905 = vld [vmem:[%s870 + $0xc] sm:$0xf]
        %v906 = vld [vmem:[%s875] sm:$0xf]
        %v907 = vld [vmem:[%s875 + $0x4] sm:$0xf]
        %v908 = vld [vmem:[%s875 + $0x8] sm:$0xf]
        %v909 = vld [vmem:[%s875 + $0xc] sm:$0xf]
        %v910 = vpack.c.bf16 %v893, %v893
        %v915 = vunpack.c.l.b16 %v898
        %v916 = vunpack.c.l.b16 %v899
        %v917 = vunpack.c.l.b16 %v900
        %v918 = vunpack.c.l.b16 %v901
        %v919 = vpack.c.b16 %v916, %v915
        %v920 = vpack.c.b16 %v918, %v917
        %vm923 = vcmask 261120
        %v925 = vsel %vm923, %v910, 0
        %927 = vmatprep.subr.bf16.mxu0 0
        %928 = vmatpush1.bf16.msra.mxu0 %v919
        %929 = vmatprep.subr.bf16.mxu0 0
        %930 = vmatpush1.bf16.msra.mxu0 %v920
        %931 = vmatprep.subr.bf16.mxu0 0
        %932 = vmatpush1.bf16.msra.mxu0 0
        %933 = vmatprep.subr.bf16.mxu0 0
        %934 = vmatpush1.bf16.msra.mxu0 0
        %935 = vmatprep.subr.bf16.mxu0 0
        %936 = vmatpush1.bf16.msra.mxu0 0
        %937 = vmatprep.subr.bf16.mxu0 0
        %938 = vmatpush1.bf16.msra.mxu0 0
        %939 = vmatprep.subr.bf16.mxu0 0
        %940 = vmatpush1.bf16.msra.mxu0 0
        %941 = vmatprep.subr.bf16.mxu0 0
        %942 = vmatpush1.bf16.msra.mxu0 0
        %943 = vmatprep.subr.bf16.mxu0 0
        %944 = vmatpush1.bf16.msra.mxu0 0
        %945 = vmatprep.subr.bf16.mxu0 0
        %946 = vmatpush1.bf16.msra.mxu0 0
        %947 = vmatprep.subr.bf16.mxu0 0
        %948 = vmatpush1.bf16.msra.mxu0 0
        %949 = vmatprep.subr.bf16.mxu0 0
        %950 = vmatpush1.bf16.msra.mxu0 0
        %951 = vmatprep.subr.bf16.mxu0 0
        %952 = vmatpush1.bf16.msra.mxu0 0
        %953 = vmatprep.subr.bf16.mxu0 0
        %954 = vmatpush1.bf16.msra.mxu0 0
        %955 = vmatprep.subr.bf16.mxu0 0
        %956 = vmatpush1.bf16.msra.mxu0 0
        %957 = vmatprep.subr.bf16.mxu0 0
        %958 = vmatpush1.bf16.msra.mxu0 0
        %959 = vmatprep.mubr.bf16.mxu0 0
        %960 = vmatmul.mubr.bf16.gmra.mrb[0].mxu0 %v925
        %v961 = vpop.f32.mrb[0].mxu0
        %v962 = vadd.f32 0.0, %v961
        %v963 = vpop.f32.mrb[0].mxu0
        %v964 = vpop.f32.mrb[0].mxu0
        %v965 = vpop.f32.mrb[0].mxu0
        %966 = vdwg.mxu0
        %v971 = vunpack.c.l.b16 %v902
        %v972 = vunpack.c.l.b16 %v903
        %v973 = vunpack.c.l.b16 %v904
        %v974 = vunpack.c.l.b16 %v905
        %v975 = vpack.c.b16 %v972, %v971
        %v976 = vpack.c.b16 %v974, %v973
        %979 = vmatprep.subr.bf16.mxu0 0
        %980 = vmatpush1.bf16.msra.mxu0 %v975
        %981 = vmatprep.subr.bf16.mxu0 0
        %982 = vmatpush1.bf16.msra.mxu0 %v976
        %983 = vmatprep.subr.bf16.mxu0 0
        %984 = vmatpush1.bf16.msra.mxu0 0
        %985 = vmatprep.subr.bf16.mxu0 0
        %986 = vmatpush1.bf16.msra.mxu0 0
        %987 = vmatprep.subr.bf16.mxu0 0
        %988 = vmatpush1.bf16.msra.mxu0 0
        %989 = vmatprep.subr.bf16.mxu0 0
        %990 = vmatpush1.bf16.msra.mxu0 0
        %991 = vmatprep.subr.bf16.mxu0 0
        %992 = vmatpush1.bf16.msra.mxu0 0
        %993 = vmatprep.subr.bf16.mxu0 0
        %994 = vmatpush1.bf16.msra.mxu0 0
        %995 = vmatprep.subr.bf16.mxu0 0
        %996 = vmatpush1.bf16.msra.mxu0 0
        %997 = vmatprep.subr.bf16.mxu0 0
        %998 = vmatpush1.bf16.msra.mxu0 0
        %999 = vmatprep.subr.bf16.mxu0 0
        %1000 = vmatpush1.bf16.msra.mxu0 0
        %1001 = vmatprep.subr.bf16.mxu0 0
        %1002 = vmatpush1.bf16.msra.mxu0 0
        %1003 = vmatprep.subr.bf16.mxu0 0
        %1004 = vmatpush1.bf16.msra.mxu0 0
        %1005 = vmatprep.subr.bf16.mxu0 0
        %1006 = vmatpush1.bf16.msra.mxu0 0
        %1007 = vmatprep.subr.bf16.mxu0 0
        %1008 = vmatpush1.bf16.msra.mxu0 0
        %1009 = vmatprep.subr.bf16.mxu0 0
        %1010 = vmatpush1.bf16.msra.mxu0 0
        %1011 = vmatprep.mubr.bf16.mxu0 0
        %1012 = vmatmul.mubr.bf16.gmra.mrb[0].mxu0 %v925
        %v1013 = vpop.f32.mrb[0].mxu0
        %v1014 = vadd.f32 0.0, %v1013
        %v1015 = vpop.f32.mrb[0].mxu0
        %v1016 = vpop.f32.mrb[0].mxu0
        %v1017 = vpop.f32.mrb[0].mxu0
        %1018 = vdwg.mxu0
        %v1019 = vpack.c.bf16 %v962, %v962
        %v1020 = vpack.c.bf16 %v1014, %v1014
        %vm1021 = vcmask 64512
        %v1023 = vsel %vm1021, %v1019, 0
        %v1026 = vsel %vm1021, %v1020, 0
        %1028 = vmatprep.subr.bf16.mxu0 0
        %1029 = vmatpush1.bf16.xpose.msra.mxu0 %v1026
        %1030 = vmatprep.subr.bf16.mxu0 0
        %1031 = vmatpush1.bf16.xpose.msra.mxu0 0
        %1032 = vmatprep.subr.bf16.mxu0 0
        %1033 = vmatpush1.bf16.xpose.msra.mxu0 0
        %1034 = vmatprep.subr.bf16.mxu0 0
        %1035 = vmatpush1.bf16.xpose.msra.mxu0 0
        %1036 = vmatprep.subr.bf16.mxu0 0
        %1037 = vmatpush1.bf16.xpose.msra.mxu0 0
        %1038 = vmatprep.subr.bf16.mxu0 0
        %1039 = vmatpush1.bf16.xpose.msra.mxu0 0
        %1040 = vmatprep.subr.bf16.mxu0 0
        %1041 = vmatpush1.bf16.xpose.msra.mxu0 0
        %1042 = vmatprep.subr.bf16.mxu0 0
        %1043 = vmatpush1.bf16.xpose.msra.mxu0 0
        %1044 = vmatprep.subr.bf16.mxu0 0
        %1045 = vmatpush1.bf16.xpose.msra.mxu0 0
        %1046 = vmatprep.subr.bf16.mxu0 0
        %1047 = vmatpush1.bf16.xpose.msra.mxu0 0
        %1048 = vmatprep.subr.bf16.mxu0 0
        %1049 = vmatpush1.bf16.xpose.msra.mxu0 0
        %1050 = vmatprep.subr.bf16.mxu0 0
        %1051 = vmatpush1.bf16.xpose.msra.mxu0 0
        %1052 = vmatprep.subr.bf16.mxu0 0
        %1053 = vmatpush1.bf16.xpose.msra.mxu0 0
        %1054 = vmatprep.subr.bf16.mxu0 0
        %1055 = vmatpush1.bf16.xpose.msra.mxu0 0
        %1056 = vmatprep.subr.bf16.mxu0 0
        %1057 = vmatpush1.bf16.xpose.msra.mxu0 0
        %1058 = vmatprep.subr.bf16.mxu0 0
        %1059 = vmatpush1.bf16.xpose.msra.mxu0 0
        %1060 = vmatprep.mubr.bf16.mxu0 0
        %1061 = vmatmul.mubr.bf16.gmra.mrb[0].mxu0 %v1023
        %v1062 = vpop.f32.mrb[0].mxu0
        %v1063 = vadd.f32 %v895, %v1062
        %v1064 = vpop.f32.mrb[0].mxu0
        %v1065 = vpop.f32.mrb[0].mxu0
        %v1066 = vpop.f32.mrb[0].mxu0
        %1067 = vdwg.mxu0
        %v1068 = vsel %vm1021, %v1063, -inf
        %1069 = vmax.xlane.f32.xlu0 %v1068
        %v1070 = vpop.xlane.xlu0 %1069
        %v1071 = vsub.f32 %v1063, %v1070
        %v1072 = vmul.f32 %v1071, 1.442695
        %v1073 = vpow.pop %v1072
        %v1074 = vsel %vm1021, %v1073, 0.0
        %1075 = vadd.xlane.f32.xlu0 %v1074
        %v1076 = vpop.xlane.xlu0 %1075
        %v1077 = vrcp.pop %v1076
        %v1078 = vmul.f32 %v1073, %v1077
        %v1079 = vpack.c.bf16 %v1078, %v1078
        %v1081 = vsel %vm1021, %v1079, 0
        %vm1083 = vcmask 1043456
        %v1084 = vsel %vm1083, %v1019, 0
        %1086 = vmatprep.subr.bf16.mxu0 0
        %1087 = vmatpush1.bf16.msra.mxu0 %v1084
        %1088 = vmatprep.subr.bf16.mxu0 0
        %1089 = vmatpush1.bf16.msra.mxu0 0
        %1090 = vmatprep.subr.bf16.mxu0 0
        %1091 = vmatpush1.bf16.msra.mxu0 0
        %1092 = vmatprep.subr.bf16.mxu0 0
        %1093 = vmatpush1.bf16.msra.mxu0 0
        %1094 = vmatprep.subr.bf16.mxu0 0
        %1095 = vmatpush1.bf16.msra.mxu0 0
        %1096 = vmatprep.subr.bf16.mxu0 0
        %1097 = vmatpush1.bf16.msra.mxu0 0
        %1098 = vmatprep.subr.bf16.mxu0 0
        %1099 = vmatpush1.bf16.msra.mxu0 0
        %1100 = vmatprep.subr.bf16.mxu0 0
        %1101 = vmatpush1.bf16.msra.mxu0 0
        %1102 = vmatprep.subr.bf16.mxu0 0
        %1103 = vmatpush1.bf16.msra.mxu0 0
        %1104 = vmatprep.subr.bf16.mxu0 0
        %1105 = vmatpush1.bf16.msra.mxu0 0
        %1106 = vmatprep.subr.bf16.mxu0 0
        %1107 = vmatpush1.bf16.msra.mxu0 0
        %1108 = vmatprep.subr.bf16.mxu0 0
        %1109 = vmatpush1.bf16.msra.mxu0 0
        %1110 = vmatprep.subr.bf16.mxu0 0
        %1111 = vmatpush1.bf16.msra.mxu0 0
        %1112 = vmatprep.subr.bf16.mxu0 0
        %1113 = vmatpush1.bf16.msra.mxu0 0
        %1114 = vmatprep.subr.bf16.mxu0 0
        %1115 = vmatpush1.bf16.msra.mxu0 0
        %1116 = vmatprep.subr.bf16.mxu0 0
        %1117 = vmatpush1.bf16.msra.mxu0 0
        %1118 = vmatprep.mubr.bf16.mxu0 0
        %1119 = vmatmul.mubr.bf16.gmra.mrb[0].mxu0 %v1081
        %v1120 = vpop.f32.mrb[0].mxu0
        %v1121 = vadd.f32 0.0, %v1120
        %v1122 = vpop.f32.mrb[0].mxu0
        %v1123 = vpop.f32.mrb[0].mxu0
        %v1124 = vpop.f32.mrb[0].mxu0
        %1125 = vdwg.mxu0
        %v1126 = vpack.c.bf16 %v1121, %v1121
        %1128 = vrot.lane.b32.xlu0 %v1019, 120
        %v1129 = vpop.permute.xlu0 %1128
        %1131 = vrot.lane.b32.xlu0 %v1020, 120
        %v1132 = vpop.permute.xlu0 %1131
        %v1134 = vsel %vm1021, %v1129, 0
        %v1137 = vsel %vm1021, %v1132, 0
        %1139 = vmatprep.subr.bf16.mxu0 0
        %1140 = vmatpush1.bf16.xpose.msra.mxu0 %v1137
        %1141 = vmatprep.subr.bf16.mxu0 0
        %1142 = vmatpush1.bf16.xpose.msra.mxu0 0
        %1143 = vmatprep.subr.bf16.mxu0 0
        %1144 = vmatpush1.bf16.xpose.msra.mxu0 0
        %1145 = vmatprep.subr.bf16.mxu0 0
        %1146 = vmatpush1.bf16.xpose.msra.mxu0 0
        %1147 = vmatprep.subr.bf16.mxu0 0
        %1148 = vmatpush1.bf16.xpose.msra.mxu0 0
        %1149 = vmatprep.subr.bf16.mxu0 0
        %1150 = vmatpush1.bf16.xpose.msra.mxu0 0
        %1151 = vmatprep.subr.bf16.mxu0 0
        %1152 = vmatpush1.bf16.xpose.msra.mxu0 0
        %1153 = vmatprep.subr.bf16.mxu0 0
        %1154 = vmatpush1.bf16.xpose.msra.mxu0 0
        %1155 = vmatprep.subr.bf16.mxu0 0
        %1156 = vmatpush1.bf16.xpose.msra.mxu0 0
        %1157 = vmatprep.subr.bf16.mxu0 0
        %1158 = vmatpush1.bf16.xpose.msra.mxu0 0
        %1159 = vmatprep.subr.bf16.mxu0 0
        %1160 = vmatpush1.bf16.xpose.msra.mxu0 0
        %1161 = vmatprep.subr.bf16.mxu0 0
        %1162 = vmatpush1.bf16.xpose.msra.mxu0 0
        %1163 = vmatprep.subr.bf16.mxu0 0
        %1164 = vmatpush1.bf16.xpose.msra.mxu0 0
        %1165 = vmatprep.subr.bf16.mxu0 0
        %1166 = vmatpush1.bf16.xpose.msra.mxu0 0
        %1167 = vmatprep.subr.bf16.mxu0 0
        %1168 = vmatpush1.bf16.xpose.msra.mxu0 0
        %1169 = vmatprep.subr.bf16.mxu0 0
        %1170 = vmatpush1.bf16.xpose.msra.mxu0 0
        %1171 = vmatprep.mubr.bf16.mxu0 0
        %1172 = vmatmul.mubr.bf16.gmra.mrb[0].mxu0 %v1134
        %v1173 = vpop.f32.mrb[0].mxu0
        %v1174 = vadd.f32 %v895, %v1173
        %v1175 = vpop.f32.mrb[0].mxu0
        %v1176 = vpop.f32.mrb[0].mxu0
        %v1177 = vpop.f32.mrb[0].mxu0
        %1178 = vdwg.mxu0
        %v1179 = vsel %vm1021, %v1174, -inf
        %1180 = vmax.xlane.f32.xlu0 %v1179
        %v1181 = vpop.xlane.xlu0 %1180
        %v1182 = vsub.f32 %v1174, %v1181
        %v1183 = vmul.f32 %v1182, 1.442695
        %v1184 = vpow.pop %v1183
        %v1185 = vsel %vm1021, %v1184, 0.0
        %1186 = vadd.xlane.f32.xlu0 %v1185
        %v1187 = vpop.xlane.xlu0 %1186
        %v1188 = vrcp.pop %v1187
        %v1189 = vmul.f32 %v1184, %v1188
        %v1190 = vpack.c.bf16 %v1189, %v1189
        %v1192 = vsel %vm1021, %v1190, 0
        %v1194 = vsel %vm1083, %v1129, 0
        %1196 = vmatprep.subr.bf16.mxu0 0
        %1197 = vmatpush1.bf16.msra.mxu0 %v1194
        %1198 = vmatprep.subr.bf16.mxu0 0
        %1199 = vmatpush1.bf16.msra.mxu0 0
        %1200 = vmatprep.subr.bf16.mxu0 0
        %1201 = vmatpush1.bf16.msra.mxu0 0
        %1202 = vmatprep.subr.bf16.mxu0 0
        %1203 = vmatpush1.bf16.msra.mxu0 0
        %1204 = vmatprep.subr.bf16.mxu0 0
        %1205 = vmatpush1.bf16.msra.mxu0 0
        %1206 = vmatprep.subr.bf16.mxu0 0
        %1207 = vmatpush1.bf16.msra.mxu0 0
        %1208 = vmatprep.subr.bf16.mxu0 0
        %1209 = vmatpush1.bf16.msra.mxu0 0
        %1210 = vmatprep.subr.bf16.mxu0 0
        %1211 = vmatpush1.bf16.msra.mxu0 0
        %1212 = vmatprep.subr.bf16.mxu0 0
        %1213 = vmatpush1.bf16.msra.mxu0 0
        %1214 = vmatprep.subr.bf16.mxu0 0
        %1215 = vmatpush1.bf16.msra.mxu0 0
        %1216 = vmatprep.subr.bf16.mxu0 0
        %1217 = vmatpush1.bf16.msra.mxu0 0
        %1218 = vmatprep.subr.bf16.mxu0 0
        %1219 = vmatpush1.bf16.msra.mxu0 0
        %1220 = vmatprep.subr.bf16.mxu0 0
        %1221 = vmatpush1.bf16.msra.mxu0 0
        %1222 = vmatprep.subr.bf16.mxu0 0
        %1223 = vmatpush1.bf16.msra.mxu0 0
        %1224 = vmatprep.subr.bf16.mxu0 0
        %1225 = vmatpush1.bf16.msra.mxu0 0
        %1226 = vmatprep.subr.bf16.mxu0 0
        %1227 = vmatpush1.bf16.msra.mxu0 0
        %1228 = vmatprep.mubr.bf16.mxu0 0
        %1229 = vmatmul.mubr.bf16.gmra.mrb[0].mxu0 %v1192
        %v1230 = vpop.f32.mrb[0].mxu0
        %v1231 = vadd.f32 0.0, %v1230
        %v1232 = vpop.f32.mrb[0].mxu0
        %v1233 = vpop.f32.mrb[0].mxu0
        %v1234 = vpop.f32.mrb[0].mxu0
        %1235 = vdwg.mxu0
        %v1236 = vpack.c.bf16 %v1231, %v1231
        %v1238 = vsel %vm1021, %v1236, 0
        %v1241 = vsel %vm1083, %v907, 0
        %1243 = vmatprep.subr.bf16.mxu0 0
        %1244 = vmatpush1.bf16.msra.mxu0 %v1241
        %1245 = vmatprep.subr.bf16.mxu0 0
        %1246 = vmatpush1.bf16.msra.mxu0 0
        %1247 = vmatprep.subr.bf16.mxu0 0
        %1248 = vmatpush1.bf16.msra.mxu0 0
        %1249 = vmatprep.subr.bf16.mxu0 0
        %1250 = vmatpush1.bf16.msra.mxu0 0
        %1251 = vmatprep.subr.bf16.mxu0 0
        %1252 = vmatpush1.bf16.msra.mxu0 0
        %1253 = vmatprep.subr.bf16.mxu0 0
        %1254 = vmatpush1.bf16.msra.mxu0 0
        %1255 = vmatprep.subr.bf16.mxu0 0
        %1256 = vmatpush1.bf16.msra.mxu0 0
        %1257 = vmatprep.subr.bf16.mxu0 0
        %1258 = vmatpush1.bf16.msra.mxu0 0
        %1259 = vmatprep.subr.bf16.mxu0 0
        %1260 = vmatpush1.bf16.msra.mxu0 0
        %1261 = vmatprep.subr.bf16.mxu0 0
        %1262 = vmatpush1.bf16.msra.mxu0 0
        %1263 = vmatprep.subr.bf16.mxu0 0
        %1264 = vmatpush1.bf16.msra.mxu0 0
        %1265 = vmatprep.subr.bf16.mxu0 0
        %1266 = vmatpush1.bf16.msra.mxu0 0
        %1267 = vmatprep.subr.bf16.mxu0 0
        %1268 = vmatpush1.bf16.msra.mxu0 0
        %1269 = vmatprep.subr.bf16.mxu0 0
        %1270 = vmatpush1.bf16.msra.mxu0 0
        %1271 = vmatprep.subr.bf16.mxu0 0
        %1272 = vmatpush1.bf16.msra.mxu0 0
        %1273 = vmatprep.subr.bf16.mxu0 0
        %1274 = vmatpush1.bf16.msra.mxu0 0
        %1275 = vmatprep.mubr.bf16.mxu0 0
        %1276 = vmatmul.mubr.bf16.gmra.mrb[0].mxu0 %v1238
        %v1277 = vpop.f32.mrb[0].mxu0
        %v1278 = vadd.f32 0.0, %v1277
        %v1279 = vpop.f32.mrb[0].mxu0
        %v1280 = vpop.f32.mrb[0].mxu0
        %v1281 = vpop.f32.mrb[0].mxu0
        %1282 = vdwg.mxu0
        %v1284 = vsel %vm1021, %v1126, 0
        %v1287 = vsel %vm1083, %v906, 0
        %1289 = vmatprep.subr.bf16.mxu0 0
        %1290 = vmatpush1.bf16.msra.mxu0 %v1287
        %1291 = vmatprep.subr.bf16.mxu0 0
        %1292 = vmatpush1.bf16.msra.mxu0 0
        %1293 = vmatprep.subr.bf16.mxu0 0
        %1294 = vmatpush1.bf16.msra.mxu0 0
        %1295 = vmatprep.subr.bf16.mxu0 0
        %1296 = vmatpush1.bf16.msra.mxu0 0
        %1297 = vmatprep.subr.bf16.mxu0 0
        %1298 = vmatpush1.bf16.msra.mxu0 0
        %1299 = vmatprep.subr.bf16.mxu0 0
        %1300 = vmatpush1.bf16.msra.mxu0 0
        %1301 = vmatprep.subr.bf16.mxu0 0
        %1302 = vmatpush1.bf16.msra.mxu0 0
        %1303 = vmatprep.subr.bf16.mxu0 0
        %1304 = vmatpush1.bf16.msra.mxu0 0
        %1305 = vmatprep.subr.bf16.mxu0 0
        %1306 = vmatpush1.bf16.msra.mxu0 0
        %1307 = vmatprep.subr.bf16.mxu0 0
        %1308 = vmatpush1.bf16.msra.mxu0 0
        %1309 = vmatprep.subr.bf16.mxu0 0
        %1310 = vmatpush1.bf16.msra.mxu0 0
        %1311 = vmatprep.subr.bf16.mxu0 0
        %1312 = vmatpush1.bf16.msra.mxu0 0
        %1313 = vmatprep.subr.bf16.mxu0 0
        %1314 = vmatpush1.bf16.msra.mxu0 0
        %1315 = vmatprep.subr.bf16.mxu0 0
        %1316 = vmatpush1.bf16.msra.mxu0 0
        %1317 = vmatprep.subr.bf16.mxu0 0
        %1318 = vmatpush1.bf16.msra.mxu0 0
        %1319 = vmatprep.subr.bf16.mxu0 0
        %1320 = vmatpush1.bf16.msra.mxu0 0
        %1321 = vmatprep.mubr.bf16.mxu0 0
        %1322 = vmatmul.mubr.bf16.gmra.mrb[0].mxu0 %v1284
        %v1323 = vpop.f32.mrb[0].mxu0
        %v1324 = vadd.f32 %v1278, %v1323
        %v1325 = vpop.f32.mrb[0].mxu0
        %v1326 = vpop.f32.mrb[0].mxu0
        %v1327 = vpop.f32.mrb[0].mxu0
        %1328 = vdwg.mxu0
        %1329 = vrot.lane.b32.xlu0 %v1019, 112
        %v1330 = vpop.permute.xlu0 %1329
        %1331 = vrot.lane.b32.xlu0 %v1020, 112
        %v1332 = vpop.permute.xlu0 %1331
        %v1334 = vsel %vm1021, %v1330, 0
        %v1337 = vsel %vm1021, %v1332, 0
        %1339 = vmatprep.subr.bf16.mxu0 0
        %1340 = vmatpush1.bf16.xpose.msra.mxu0 %v1337
        %1341 = vmatprep.subr.bf16.mxu0 0
        %1342 = vmatpush1.bf16.xpose.msra.mxu0 0
        %1343 = vmatprep.subr.bf16.mxu0 0
        %1344 = vmatpush1.bf16.xpose.msra.mxu0 0
        %1345 = vmatprep.subr.bf16.mxu0 0
        %1346 = vmatpush1.bf16.xpose.msra.mxu0 0
        %1347 = vmatprep.subr.bf16.mxu0 0
        %1348 = vmatpush1.bf16.xpose.msra.mxu0 0
        %1349 = vmatprep.subr.bf16.mxu0 0
        %1350 = vmatpush1.bf16.xpose.msra.mxu0 0
        %1351 = vmatprep.subr.bf16.mxu0 0
        %1352 = vmatpush1.bf16.xpose.msra.mxu0 0
        %1353 = vmatprep.subr.bf16.mxu0 0
        %1354 = vmatpush1.bf16.xpose.msra.mxu0 0
        %1355 = vmatprep.subr.bf16.mxu0 0
        %1356 = vmatpush1.bf16.xpose.msra.mxu0 0
        %1357 = vmatprep.subr.bf16.mxu0 0
        %1358 = vmatpush1.bf16.xpose.msra.mxu0 0
        %1359 = vmatprep.subr.bf16.mxu0 0
        %1360 = vmatpush1.bf16.xpose.msra.mxu0 0
        %1361 = vmatprep.subr.bf16.mxu0 0
        %1362 = vmatpush1.bf16.xpose.msra.mxu0 0
        %1363 = vmatprep.subr.bf16.mxu0 0
        %1364 = vmatpush1.bf16.xpose.msra.mxu0 0
        %1365 = vmatprep.subr.bf16.mxu0 0
        %1366 = vmatpush1.bf16.xpose.msra.mxu0 0
        %1367 = vmatprep.subr.bf16.mxu0 0
        %1368 = vmatpush1.bf16.xpose.msra.mxu0 0
        %1369 = vmatprep.subr.bf16.mxu0 0
        %1370 = vmatpush1.bf16.xpose.msra.mxu0 0
        %1371 = vmatprep.mubr.bf16.mxu0 0
        %1372 = vmatmul.mubr.bf16.gmra.mrb[0].mxu0 %v1334
        %v1373 = vpop.f32.mrb[0].mxu0
        %v1374 = vadd.f32 %v895, %v1373
        %v1375 = vpop.f32.mrb[0].mxu0
        %v1376 = vpop.f32.mrb[0].mxu0
        %v1377 = vpop.f32.mrb[0].mxu0
        %1378 = vdwg.mxu0
        %v1379 = vsel %vm1021, %v1374, -inf
        %1380 = vmax.xlane.f32.xlu0 %v1379
        %v1381 = vpop.xlane.xlu0 %1380
        %v1382 = vsub.f32 %v1374, %v1381
        %v1383 = vmul.f32 %v1382, 1.442695
        %v1384 = vpow.pop %v1383
        %v1385 = vsel %vm1021, %v1384, 0.0
        %1386 = vadd.xlane.f32.xlu0 %v1385
        %v1387 = vpop.xlane.xlu0 %1386
        %v1388 = vrcp.pop %v1387
        %v1389 = vmul.f32 %v1384, %v1388
        %v1390 = vpack.c.bf16 %v1389, %v1389
        %v1392 = vsel %vm1021, %v1390, 0
        %v1394 = vsel %vm1083, %v1330, 0
        %1396 = vmatprep.subr.bf16.mxu0 0
        %1397 = vmatpush1.bf16.msra.mxu0 %v1394
        %1398 = vmatprep.subr.bf16.mxu0 0
        %1399 = vmatpush1.bf16.msra.mxu0 0
        %1400 = vmatprep.subr.bf16.mxu0 0
        %1401 = vmatpush1.bf16.msra.mxu0 0
        %1402 = vmatprep.subr.bf16.mxu0 0
        %1403 = vmatpush1.bf16.msra.mxu0 0
        %1404 = vmatprep.subr.bf16.mxu0 0
        %1405 = vmatpush1.bf16.msra.mxu0 0
        %1406 = vmatprep.subr.bf16.mxu0 0
        %1407 = vmatpush1.bf16.msra.mxu0 0
        %1408 = vmatprep.subr.bf16.mxu0 0
        %1409 = vmatpush1.bf16.msra.mxu0 0
        %1410 = vmatprep.subr.bf16.mxu0 0
        %1411 = vmatpush1.bf16.msra.mxu0 0
        %1412 = vmatprep.subr.bf16.mxu0 0
        %1413 = vmatpush1.bf16.msra.mxu0 0
        %1414 = vmatprep.subr.bf16.mxu0 0
        %1415 = vmatpush1.bf16.msra.mxu0 0
        %1416 = vmatprep.subr.bf16.mxu0 0
        %1417 = vmatpush1.bf16.msra.mxu0 0
        %1418 = vmatprep.subr.bf16.mxu0 0
        %1419 = vmatpush1.bf16.msra.mxu0 0
        %1420 = vmatprep.subr.bf16.mxu0 0
        %1421 = vmatpush1.bf16.msra.mxu0 0
        %1422 = vmatprep.subr.bf16.mxu0 0
        %1423 = vmatpush1.bf16.msra.mxu0 0
        %1424 = vmatprep.subr.bf16.mxu0 0
        %1425 = vmatpush1.bf16.msra.mxu0 0
        %1426 = vmatprep.subr.bf16.mxu0 0
        %1427 = vmatpush1.bf16.msra.mxu0 0
        %1428 = vmatprep.mubr.bf16.mxu0 0
        %1429 = vmatmul.mubr.bf16.gmra.mrb[0].mxu0 %v1392
        %v1430 = vpop.f32.mrb[0].mxu0
        %v1431 = vadd.f32 0.0, %v1430
        %v1432 = vpop.f32.mrb[0].mxu0
        %v1433 = vpop.f32.mrb[0].mxu0
        %v1434 = vpop.f32.mrb[0].mxu0
        %1435 = vdwg.mxu0
        %v1436 = vpack.c.bf16 %v1431, %v1431
        %v1438 = vsel %vm1021, %v1436, 0
        %v1441 = vsel %vm1083, %v908, 0
        %1443 = vmatprep.subr.bf16.mxu0 0
        %1444 = vmatpush1.bf16.msra.mxu0 %v1441
        %1445 = vmatprep.subr.bf16.mxu0 0
        %1446 = vmatpush1.bf16.msra.mxu0 0
        %1447 = vmatprep.subr.bf16.mxu0 0
        %1448 = vmatpush1.bf16.msra.mxu0 0
        %1449 = vmatprep.subr.bf16.mxu0 0
        %1450 = vmatpush1.bf16.msra.mxu0 0
        %1451 = vmatprep.subr.bf16.mxu0 0
        %1452 = vmatpush1.bf16.msra.mxu0 0
        %1453 = vmatprep.subr.bf16.mxu0 0
        %1454 = vmatpush1.bf16.msra.mxu0 0
        %1455 = vmatprep.subr.bf16.mxu0 0
        %1456 = vmatpush1.bf16.msra.mxu0 0
        %1457 = vmatprep.subr.bf16.mxu0 0
        %1458 = vmatpush1.bf16.msra.mxu0 0
        %1459 = vmatprep.subr.bf16.mxu0 0
        %1460 = vmatpush1.bf16.msra.mxu0 0
        %1461 = vmatprep.subr.bf16.mxu0 0
        %1462 = vmatpush1.bf16.msra.mxu0 0
        %1463 = vmatprep.subr.bf16.mxu0 0
        %1464 = vmatpush1.bf16.msra.mxu0 0
        %1465 = vmatprep.subr.bf16.mxu0 0
        %1466 = vmatpush1.bf16.msra.mxu0 0
        %1467 = vmatprep.subr.bf16.mxu0 0
        %1468 = vmatpush1.bf16.msra.mxu0 0
        %1469 = vmatprep.subr.bf16.mxu0 0
        %1470 = vmatpush1.bf16.msra.mxu0 0
        %1471 = vmatprep.subr.bf16.mxu0 0
        %1472 = vmatpush1.bf16.msra.mxu0 0
        %1473 = vmatprep.subr.bf16.mxu0 0
        %1474 = vmatpush1.bf16.msra.mxu0 0
        %1475 = vmatprep.mubr.bf16.mxu0 0
        %1476 = vmatmul.mubr.bf16.gmra.mrb[0].mxu0 %v1438
        %v1477 = vpop.f32.mrb[0].mxu0
        %v1478 = vadd.f32 0.0, %v1477
        %v1479 = vpop.f32.mrb[0].mxu0
        %v1480 = vpop.f32.mrb[0].mxu0
        %v1481 = vpop.f32.mrb[0].mxu0
        %1482 = vdwg.mxu0
        %v1483 = vadd.f32 %v1324, %v1478
        %1484 = vrot.lane.b32.xlu0 %v1019, 104
        %v1485 = vpop.permute.xlu0 %1484
        %1486 = vrot.lane.b32.xlu0 %v1020, 104
        %v1487 = vpop.permute.xlu0 %1486
        %v1489 = vsel %vm1021, %v1485, 0
        %v1492 = vsel %vm1021, %v1487, 0
        %1494 = vmatprep.subr.bf16.mxu0 0
        %1495 = vmatpush1.bf16.xpose.msra.mxu0 %v1492
        %1496 = vmatprep.subr.bf16.mxu0 0
        %1497 = vmatpush1.bf16.xpose.msra.mxu0 0
        %1498 = vmatprep.subr.bf16.mxu0 0
        %1499 = vmatpush1.bf16.xpose.msra.mxu0 0
        %1500 = vmatprep.subr.bf16.mxu0 0
        %1501 = vmatpush1.bf16.xpose.msra.mxu0 0
        %1502 = vmatprep.subr.bf16.mxu0 0
        %1503 = vmatpush1.bf16.xpose.msra.mxu0 0
        %1504 = vmatprep.subr.bf16.mxu0 0
        %1505 = vmatpush1.bf16.xpose.msra.mxu0 0
        %1506 = vmatprep.subr.bf16.mxu0 0
        %1507 = vmatpush1.bf16.xpose.msra.mxu0 0
        %1508 = vmatprep.subr.bf16.mxu0 0
        %1509 = vmatpush1.bf16.xpose.msra.mxu0 0
        %1510 = vmatprep.subr.bf16.mxu0 0
        %1511 = vmatpush1.bf16.xpose.msra.mxu0 0
        %1512 = vmatprep.subr.bf16.mxu0 0
        %1513 = vmatpush1.bf16.xpose.msra.mxu0 0
        %1514 = vmatprep.subr.bf16.mxu0 0
        %1515 = vmatpush1.bf16.xpose.msra.mxu0 0
        %1516 = vmatprep.subr.bf16.mxu0 0
        %1517 = vmatpush1.bf16.xpose.msra.mxu0 0
        %1518 = vmatprep.subr.bf16.mxu0 0
        %1519 = vmatpush1.bf16.xpose.msra.mxu0 0
        %1520 = vmatprep.subr.bf16.mxu0 0
        %1521 = vmatpush1.bf16.xpose.msra.mxu0 0
        %1522 = vmatprep.subr.bf16.mxu0 0
        %1523 = vmatpush1.bf16.xpose.msra.mxu0 0
        %1524 = vmatprep.subr.bf16.mxu0 0
        %1525 = vmatpush1.bf16.xpose.msra.mxu0 0
        %1526 = vmatprep.mubr.bf16.mxu0 0
        %1527 = vmatmul.mubr.bf16.gmra.mrb[0].mxu0 %v1489
        %v1528 = vpop.f32.mrb[0].mxu0
        %v1529 = vadd.f32 %v895, %v1528
        %v1530 = vpop.f32.mrb[0].mxu0
        %v1531 = vpop.f32.mrb[0].mxu0
        %v1532 = vpop.f32.mrb[0].mxu0
        %1533 = vdwg.mxu0
        %v1534 = vsel %vm1021, %v1529, -inf
        %1535 = vmax.xlane.f32.xlu0 %v1534
        %v1536 = vpop.xlane.xlu0 %1535
        %v1537 = vsub.f32 %v1529, %v1536
        %v1538 = vmul.f32 %v1537, 1.442695
        %v1539 = vpow.pop %v1538
        %v1540 = vsel %vm1021, %v1539, 0.0
        %1541 = vadd.xlane.f32.xlu0 %v1540
        %v1542 = vpop.xlane.xlu0 %1541
        %v1543 = vrcp.pop %v1542
        %v1544 = vmul.f32 %v1539, %v1543
        %v1545 = vpack.c.bf16 %v1544, %v1544
        %v1547 = vsel %vm1021, %v1545, 0
        %v1549 = vsel %vm1083, %v1485, 0
        %1551 = vmatprep.subr.bf16.mxu0 0
        %1552 = vmatpush1.bf16.msra.mxu0 %v1549
        %1553 = vmatprep.subr.bf16.mxu0 0
        %1554 = vmatpush1.bf16.msra.mxu0 0
        %1555 = vmatprep.subr.bf16.mxu0 0
        %1556 = vmatpush1.bf16.msra.mxu0 0
        %1557 = vmatprep.subr.bf16.mxu0 0
        %1558 = vmatpush1.bf16.msra.mxu0 0
        %1559 = vmatprep.subr.bf16.mxu0 0
        %1560 = vmatpush1.bf16.msra.mxu0 0
        %1561 = vmatprep.subr.bf16.mxu0 0
        %1562 = vmatpush1.bf16.msra.mxu0 0
        %1563 = vmatprep.subr.bf16.mxu0 0
        %1564 = vmatpush1.bf16.msra.mxu0 0
        %1565 = vmatprep.subr.bf16.mxu0 0
        %1566 = vmatpush1.bf16.msra.mxu0 0
        %1567 = vmatprep.subr.bf16.mxu0 0
        %1568 = vmatpush1.bf16.msra.mxu0 0
        %1569 = vmatprep.subr.bf16.mxu0 0
        %1570 = vmatpush1.bf16.msra.mxu0 0
        %1571 = vmatprep.subr.bf16.mxu0 0
        %1572 = vmatpush1.bf16.msra.mxu0 0
        %1573 = vmatprep.subr.bf16.mxu0 0
        %1574 = vmatpush1.bf16.msra.mxu0 0
        %1575 = vmatprep.subr.bf16.mxu0 0
        %1576 = vmatpush1.bf16.msra.mxu0 0
        %1577 = vmatprep.subr.bf16.mxu0 0
        %1578 = vmatpush1.bf16.msra.mxu0 0
        %1579 = vmatprep.subr.bf16.mxu0 0
        %1580 = vmatpush1.bf16.msra.mxu0 0
        %1581 = vmatprep.subr.bf16.mxu0 0
        %1582 = vmatpush1.bf16.msra.mxu0 0
        %1583 = vmatprep.mubr.bf16.mxu0 0
        %1584 = vmatmul.mubr.bf16.gmra.mrb[0].mxu0 %v1547
        %v1585 = vpop.f32.mrb[0].mxu0
        %v1586 = vadd.f32 0.0, %v1585
        %v1587 = vpop.f32.mrb[0].mxu0
        %v1588 = vpop.f32.mrb[0].mxu0
        %v1589 = vpop.f32.mrb[0].mxu0
        %1590 = vdwg.mxu0
        %v1591 = vpack.c.bf16 %v1586, %v1586
        %v1593 = vsel %vm1021, %v1591, 0
        %v1596 = vsel %vm1083, %v909, 0
        %1598 = vmatprep.subr.bf16.mxu0 0
        %1599 = vmatpush1.bf16.msra.mxu0 %v1596
        %1600 = vmatprep.subr.bf16.mxu0 0
        %1601 = vmatpush1.bf16.msra.mxu0 0
        %1602 = vmatprep.subr.bf16.mxu0 0
        %1603 = vmatpush1.bf16.msra.mxu0 0
        %1604 = vmatprep.subr.bf16.mxu0 0
        %1605 = vmatpush1.bf16.msra.mxu0 0
        %1606 = vmatprep.subr.bf16.mxu0 0
        %1607 = vmatpush1.bf16.msra.mxu0 0
        %1608 = vmatprep.subr.bf16.mxu0 0
        %1609 = vmatpush1.bf16.msra.mxu0 0
        %1610 = vmatprep.subr.bf16.mxu0 0
        %1611 = vmatpush1.bf16.msra.mxu0 0
        %1612 = vmatprep.subr.bf16.mxu0 0
        %1613 = vmatpush1.bf16.msra.mxu0 0
        %1614 = vmatprep.subr.bf16.mxu0 0
        %1615 = vmatpush1.bf16.msra.mxu0 0
        %1616 = vmatprep.subr.bf16.mxu0 0
        %1617 = vmatpush1.bf16.msra.mxu0 0
        %1618 = vmatprep.subr.bf16.mxu0 0
        %1619 = vmatpush1.bf16.msra.mxu0 0
        %1620 = vmatprep.subr.bf16.mxu0 0
        %1621 = vmatpush1.bf16.msra.mxu0 0
        %1622 = vmatprep.subr.bf16.mxu0 0
        %1623 = vmatpush1.bf16.msra.mxu0 0
        %1624 = vmatprep.subr.bf16.mxu0 0
        %1625 = vmatpush1.bf16.msra.mxu0 0
        %1626 = vmatprep.subr.bf16.mxu0 0
        %1627 = vmatpush1.bf16.msra.mxu0 0
        %1628 = vmatprep.subr.bf16.mxu0 0
        %1629 = vmatpush1.bf16.msra.mxu0 0
        %1630 = vmatprep.mubr.bf16.mxu0 0
        %1631 = vmatmul.mubr.bf16.gmra.mrb[0].mxu0 %v1593
        %v1632 = vpop.f32.mrb[0].mxu0
        %v1633 = vadd.f32 0.0, %v1632
        %v1634 = vpop.f32.mrb[0].mxu0
        %v1635 = vpop.f32.mrb[0].mxu0
        %v1636 = vpop.f32.mrb[0].mxu0
        %1637 = vdwg.mxu0
        %v1638 = vadd.f32 %v1483, %v1633
        %v1639 = vadd.f32 %v1638, %v893
        %v1640 = vsel %vm923, %v1639, 0.0
        %1641 = vadd.xlane.f32.xlu0 %v1640
        %v1642 = vpop.xlane.xlu0 %1641
        %v1643 = vrcp.pop 32.0
        %v1644 = vmul.f32 %v1642, %v1643
        %v1645 = vsub.f32 %v1639, %v1644
        %v1646 = vmul.f32 %v1645, %v1645
        %v1647 = vsel %vm923, %v1646, 0.0
        %1648 = vadd.xlane.f32.xlu0 %v1647
        %v1649 = vpop.xlane.xlu0 %1648
        %v1650 = vmul.f32 %v1649, %v1643
        %v1651 = vadd.f32 %v1650, 1e-05
        %v1652 = vrsqrt.pop %v1651
        %v1653 = vmul.f32 %v1645, %v1652
        %v1654 = vlaneseq
        %v1655 = vshrl.u32 %v1654, 7
        %v1656 = vsub.s32 0, %v1655
        %v1657 = vrot.slane %v897, %v1656
        %v1658 = vmul.f32 %v1653, %v1657
        %v1659 = vlaneseq
        %v1660 = vshrl.u32 %v1659, 7
        %v1661 = vsub.s32 1, %v1660
        %v1662 = vrot.slane %v897, %v1661
        %v1663 = vadd.f32 %v1658, %v1662
        %v1664 = vld [vmem:[%s718] sm:$0xf]
        %v1665 = vld [vmem:[%s718 + $0x4] sm:$0xf]
        %v1666 = vld [vmem:[%s718 + $0x8] sm:$0xf]
        %v1667 = vld [vmem:[%s718 + $0xc] sm:$0xf]
        %v1668 = vld [vmem:[%s727] sm:$0xf]
        %v1669 = vld [vmem:[%s727 + $0x4] sm:$0xf]
        %v1670 = vld [vmem:[%s727 + $0x8] sm:$0xf]
        %v1671 = vld [vmem:[%s727 + $0xc] sm:$0xf]
        %v1672 = vld [vmem:[%s736] sm:$0xf]
        %v1673 = vld [vmem:[%s736 + $0x4] sm:$0xf]
        %v1674 = vld [vmem:[%s736 + $0x8] sm:$0xf]
        %v1675 = vld [vmem:[%s736 + $0xc] sm:$0xf]
        %v1676 = vpack.c.bf16 %v1663, %v1663
        %v1681 = vunpack.c.l.b16 %v1664
        %v1682 = vunpack.c.l.b16 %v1665
        %v1683 = vunpack.c.l.b16 %v1666
        %v1684 = vunpack.c.l.b16 %v1667
        %v1685 = vpack.c.b16 %v1682, %v1681
        %v1686 = vpack.c.b16 %v1684, %v1683
        %v1690 = vsel %vm923, %v1676, 0
        %1692 = vmatprep.subr.bf16.mxu0 0
        %1693 = vmatpush1.bf16.msra.mxu0 %v1685
        %1694 = vmatprep.subr.bf16.mxu0 0
        %1695 = vmatpush1.bf16.msra.mxu0 %v1686
        %1696 = vmatprep.subr.bf16.mxu0 0
        %1697 = vmatpush1.bf16.msra.mxu0 0
        %1698 = vmatprep.subr.bf16.mxu0 0
        %1699 = vmatpush1.bf16.msra.mxu0 0
        %1700 = vmatprep.subr.bf16.mxu0 0
        %1701 = vmatpush1.bf16.msra.mxu0 0
        %1702 = vmatprep.subr.bf16.mxu0 0
        %1703 = vmatpush1.bf16.msra.mxu0 0
        %1704 = vmatprep.subr.bf16.mxu0 0
        %1705 = vmatpush1.bf16.msra.mxu0 0
        %1706 = vmatprep.subr.bf16.mxu0 0
        %1707 = vmatpush1.bf16.msra.mxu0 0
        %1708 = vmatprep.subr.bf16.mxu0 0
        %1709 = vmatpush1.bf16.msra.mxu0 0
        %1710 = vmatprep.subr.bf16.mxu0 0
        %1711 = vmatpush1.bf16.msra.mxu0 0
        %1712 = vmatprep.subr.bf16.mxu0 0
        %1713 = vmatpush1.bf16.msra.mxu0 0
        %1714 = vmatprep.subr.bf16.mxu0 0
        %1715 = vmatpush1.bf16.msra.mxu0 0
        %1716 = vmatprep.subr.bf16.mxu0 0
        %1717 = vmatpush1.bf16.msra.mxu0 0
        %1718 = vmatprep.subr.bf16.mxu0 0
        %1719 = vmatpush1.bf16.msra.mxu0 0
        %1720 = vmatprep.subr.bf16.mxu0 0
        %1721 = vmatpush1.bf16.msra.mxu0 0
        %1722 = vmatprep.subr.bf16.mxu0 0
        %1723 = vmatpush1.bf16.msra.mxu0 0
        %1724 = vmatprep.mubr.bf16.mxu0 0
        %1725 = vmatmul.mubr.bf16.gmra.mrb[0].mxu0 %v1690
        %v1726 = vpop.f32.mrb[0].mxu0
        %v1727 = vadd.f32 0.0, %v1726
        %v1728 = vpop.f32.mrb[0].mxu0
        %v1729 = vpop.f32.mrb[0].mxu0
        %v1730 = vpop.f32.mrb[0].mxu0
        %1731 = vdwg.mxu0
        %v1736 = vunpack.c.l.b16 %v1668
        %v1737 = vunpack.c.l.b16 %v1669
        %v1738 = vunpack.c.l.b16 %v1670
        %v1739 = vunpack.c.l.b16 %v1671
        %v1740 = vpack.c.b16 %v1737, %v1736
        %v1741 = vpack.c.b16 %v1739, %v1738
        %v1745 = vsel %vm923, %v894, 0
        %1747 = vmatprep.subr.bf16.mxu0 0
        %1748 = vmatpush1.bf16.msra.mxu0 %v1740
        %1749 = vmatprep.subr.bf16.mxu0 0
        %1750 = vmatpush1.bf16.msra.mxu0 %v1741
        %1751 = vmatprep.subr.bf16.mxu0 0
        %1752 = vmatpush1.bf16.msra.mxu0 0
        %1753 = vmatprep.subr.bf16.mxu0 0
        %1754 = vmatpush1.bf16.msra.mxu0 0
        %1755 = vmatprep.subr.bf16.mxu0 0
        %1756 = vmatpush1.bf16.msra.mxu0 0
        %1757 = vmatprep.subr.bf16.mxu0 0
        %1758 = vmatpush1.bf16.msra.mxu0 0
        %1759 = vmatprep.subr.bf16.mxu0 0
        %1760 = vmatpush1.bf16.msra.mxu0 0
        %1761 = vmatprep.subr.bf16.mxu0 0
        %1762 = vmatpush1.bf16.msra.mxu0 0
        %1763 = vmatprep.subr.bf16.mxu0 0
        %1764 = vmatpush1.bf16.msra.mxu0 0
        %1765 = vmatprep.subr.bf16.mxu0 0
        %1766 = vmatpush1.bf16.msra.mxu0 0
        %1767 = vmatprep.subr.bf16.mxu0 0
        %1768 = vmatpush1.bf16.msra.mxu0 0
        %1769 = vmatprep.subr.bf16.mxu0 0
        %1770 = vmatpush1.bf16.msra.mxu0 0
        %1771 = vmatprep.subr.bf16.mxu0 0
        %1772 = vmatpush1.bf16.msra.mxu0 0
        %1773 = vmatprep.subr.bf16.mxu0 0
        %1774 = vmatpush1.bf16.msra.mxu0 0
        %1775 = vmatprep.subr.bf16.mxu0 0
        %1776 = vmatpush1.bf16.msra.mxu0 0
        %1777 = vmatprep.subr.bf16.mxu0 0
        %1778 = vmatpush1.bf16.msra.mxu0 0
        %1779 = vmatprep.mubr.bf16.mxu0 0
        %1780 = vmatmul.mubr.bf16.gmra.mrb[0].mxu0 %v1745
        %v1781 = vpop.f32.mrb[0].mxu0
        %v1782 = vadd.f32 0.0, %v1781
        %v1783 = vpop.f32.mrb[0].mxu0
        %v1784 = vpop.f32.mrb[0].mxu0
        %v1785 = vpop.f32.mrb[0].mxu0
        %1786 = vdwg.mxu0
        %1787 = vmatprep.subr.bf16.mxu0 0
        %1788 = vmatpush1.bf16.msra.mxu0 %v1685
        %1789 = vmatprep.subr.bf16.mxu0 0
        %1790 = vmatpush1.bf16.msra.mxu0 %v1686
        %1791 = vmatprep.subr.bf16.mxu0 0
        %1792 = vmatpush1.bf16.msra.mxu0 0
        %1793 = vmatprep.subr.bf16.mxu0 0
        %1794 = vmatpush1.bf16.msra.mxu0 0
        %1795 = vmatprep.subr.bf16.mxu0 0
        %1796 = vmatpush1.bf16.msra.mxu0 0
        %1797 = vmatprep.subr.bf16.mxu0 0
        %1798 = vmatpush1.bf16.msra.mxu0 0
        %1799 = vmatprep.subr.bf16.mxu0 0
        %1800 = vmatpush1.bf16.msra.mxu0 0
        %1801 = vmatprep.subr.bf16.mxu0 0
        %1802 = vmatpush1.bf16.msra.mxu0 0
        %1803 = vmatprep.subr.bf16.mxu0 0
        %1804 = vmatpush1.bf16.msra.mxu0 0
        %1805 = vmatprep.subr.bf16.mxu0 0
        %1806 = vmatpush1.bf16.msra.mxu0 0
        %1807 = vmatprep.subr.bf16.mxu0 0
        %1808 = vmatpush1.bf16.msra.mxu0 0
        %1809 = vmatprep.subr.bf16.mxu0 0
        %1810 = vmatpush1.bf16.msra.mxu0 0
        %1811 = vmatprep.subr.bf16.mxu0 0
        %1812 = vmatpush1.bf16.msra.mxu0 0
        %1813 = vmatprep.subr.bf16.mxu0 0
        %1814 = vmatpush1.bf16.msra.mxu0 0
        %1815 = vmatprep.subr.bf16.mxu0 0
        %1816 = vmatpush1.bf16.msra.mxu0 0
        %1817 = vmatprep.subr.bf16.mxu0 0
        %1818 = vmatpush1.bf16.msra.mxu0 0
        %1819 = vmatprep.mubr.bf16.mxu0 0
        %1820 = vmatmul.mubr.bf16.gmra.mrb[0].mxu0 %v1745
        %v1821 = vpop.f32.mrb[0].mxu0
        %v1822 = vadd.f32 0.0, %v1821
        %v1823 = vpop.f32.mrb[0].mxu0
        %v1824 = vpop.f32.mrb[0].mxu0
        %v1825 = vpop.f32.mrb[0].mxu0
        %1826 = vdwg.mxu0
        %v1827 = vpack.c.bf16 %v1727, %v1727
        %v1828 = vpack.c.bf16 %v1782, %v1782
        %v1829 = vpack.c.bf16 %v1822, %v1822
        %v1831 = vsel %vm1021, %v1827, 0
        %v1834 = vsel %vm1021, %v1828, 0
        %1836 = vmatprep.subr.bf16.mxu0 0
        %1837 = vmatpush1.bf16.xpose.msra.mxu0 %v1834
        %1838 = vmatprep.subr.bf16.mxu0 0
        %1839 = vmatpush1.bf16.xpose.msra.mxu0 0
        %1840 = vmatprep.subr.bf16.mxu0 0
        %1841 = vmatpush1.bf16.xpose.msra.mxu0 0
        %1842 = vmatprep.subr.bf16.mxu0 0
        %1843 = vmatpush1.bf16.xpose.msra.mxu0 0
        %1844 = vmatprep.subr.bf16.mxu0 0
        %1845 = vmatpush1.bf16.xpose.msra.mxu0 0
        %1846 = vmatprep.subr.bf16.mxu0 0
        %1847 = vmatpush1.bf16.xpose.msra.mxu0 0
        %1848 = vmatprep.subr.bf16.mxu0 0
        %1849 = vmatpush1.bf16.xpose.msra.mxu0 0
        %1850 = vmatprep.subr.bf16.mxu0 0
        %1851 = vmatpush1.bf16.xpose.msra.mxu0 0
        %1852 = vmatprep.subr.bf16.mxu0 0
        %1853 = vmatpush1.bf16.xpose.msra.mxu0 0
        %1854 = vmatprep.subr.bf16.mxu0 0
        %1855 = vmatpush1.bf16.xpose.msra.mxu0 0
        %1856 = vmatprep.subr.bf16.mxu0 0
        %1857 = vmatpush1.bf16.xpose.msra.mxu0 0
        %1858 = vmatprep.subr.bf16.mxu0 0
        %1859 = vmatpush1.bf16.xpose.msra.mxu0 0
        %1860 = vmatprep.subr.bf16.mxu0 0
        %1861 = vmatpush1.bf16.xpose.msra.mxu0 0
        %1862 = vmatprep.subr.bf16.mxu0 0
        %1863 = vmatpush1.bf16.xpose.msra.mxu0 0
        %1864 = vmatprep.subr.bf16.mxu0 0
        %1865 = vmatpush1.bf16.xpose.msra.mxu0 0
        %1866 = vmatprep.subr.bf16.mxu0 0
        %1867 = vmatpush1.bf16.xpose.msra.mxu0 0
        %1868 = vmatprep.mubr.bf16.mxu0 0
        %1869 = vmatmul.mubr.bf16.gmra.mrb[0].mxu0 %v1831
        %v1870 = vpop.f32.mrb[0].mxu0
        %v1871 = vadd.f32 %v896, %v1870
        %v1872 = vpop.f32.mrb[0].mxu0
        %v1873 = vpop.f32.mrb[0].mxu0
        %v1874 = vpop.f32.mrb[0].mxu0
        %1875 = vdwg.mxu0
        %v1876 = vsel %vm1021, %v1871, -inf
        %1877 = vmax.xlane.f32.xlu0 %v1876
        %v1878 = vpop.xlane.xlu0 %1877
        %v1879 = vsub.f32 %v1871, %v1878
        %v1880 = vmul.f32 %v1879, 1.442695
        %v1881 = vpow.pop %v1880
        %v1882 = vsel %vm1021, %v1881, 0.0
        %1883 = vadd.xlane.f32.xlu0 %v1882
        %v1884 = vpop.xlane.xlu0 %1883
        %v1885 = vrcp.pop %v1884
        %v1886 = vmul.f32 %v1881, %v1885
        %v1887 = vpack.c.bf16 %v1886, %v1886
        %v1889 = vsel %vm1021, %v1887, 0
        %v1892 = vsel %vm1083, %v1829, 0
        %1894 = vmatprep.subr.bf16.mxu0 0
        %1895 = vmatpush1.bf16.msra.mxu0 %v1892
        %1896 = vmatprep.subr.bf16.mxu0 0
        %1897 = vmatpush1.bf16.msra.mxu0 0
        %1898 = vmatprep.subr.bf16.mxu0 0
        %1899 = vmatpush1.bf16.msra.mxu0 0
        %1900 = vmatprep.subr.bf16.mxu0 0
        %1901 = vmatpush1.bf16.msra.mxu0 0
        %1902 = vmatprep.subr.bf16.mxu0 0
        %1903 = vmatpush1.bf16.msra.mxu0 0
        %1904 = vmatprep.subr.bf16.mxu0 0
        %1905 = vmatpush1.bf16.msra.mxu0 0
        %1906 = vmatprep.subr.bf16.mxu0 0
        %1907 = vmatpush1.bf16.msra.mxu0 0
        %1908 = vmatprep.subr.bf16.mxu0 0
        %1909 = vmatpush1.bf16.msra.mxu0 0
        %1910 = vmatprep.subr.bf16.mxu0 0
        %1911 = vmatpush1.bf16.msra.mxu0 0
        %1912 = vmatprep.subr.bf16.mxu0 0
        %1913 = vmatpush1.bf16.msra.mxu0 0
        %1914 = vmatprep.subr.bf16.mxu0 0
        %1915 = vmatpush1.bf16.msra.mxu0 0
        %1916 = vmatprep.subr.bf16.mxu0 0
        %1917 = vmatpush1.bf16.msra.mxu0 0
        %1918 = vmatprep.subr.bf16.mxu0 0
        %1919 = vmatpush1.bf16.msra.mxu0 0
        %1920 = vmatprep.subr.bf16.mxu0 0
        %1921 = vmatpush1.bf16.msra.mxu0 0
        %1922 = vmatprep.subr.bf16.mxu0 0
        %1923 = vmatpush1.bf16.msra.mxu0 0
        %1924 = vmatprep.subr.bf16.mxu0 0
        %1925 = vmatpush1.bf16.msra.mxu0 0
        %1926 = vmatprep.mubr.bf16.mxu0 0
        %1927 = vmatmul.mubr.bf16.gmra.mrb[0].mxu0 %v1889
        %v1928 = vpop.f32.mrb[0].mxu0
        %v1929 = vadd.f32 0.0, %v1928
        %v1930 = vpop.f32.mrb[0].mxu0
        %v1931 = vpop.f32.mrb[0].mxu0
        %v1932 = vpop.f32.mrb[0].mxu0
        %1933 = vdwg.mxu0
        %v1934 = vpack.c.bf16 %v1929, %v1929
        %1936 = vrot.lane.b32.xlu0 %v1827, 120
        %v1937 = vpop.permute.xlu0 %1936
        %1939 = vrot.lane.b32.xlu0 %v1828, 120
        %v1940 = vpop.permute.xlu0 %1939
        %v1942 = vsel %vm1021, %v1937, 0
        %v1945 = vsel %vm1021, %v1940, 0
        %1947 = vmatprep.subr.bf16.mxu0 0
        %1948 = vmatpush1.bf16.xpose.msra.mxu0 %v1945
        %1949 = vmatprep.subr.bf16.mxu0 0
        %1950 = vmatpush1.bf16.xpose.msra.mxu0 0
        %1951 = vmatprep.subr.bf16.mxu0 0
        %1952 = vmatpush1.bf16.xpose.msra.mxu0 0
        %1953 = vmatprep.subr.bf16.mxu0 0
        %1954 = vmatpush1.bf16.xpose.msra.mxu0 0
        %1955 = vmatprep.subr.bf16.mxu0 0
        %1956 = vmatpush1.bf16.xpose.msra.mxu0 0
        %1957 = vmatprep.subr.bf16.mxu0 0
        %1958 = vmatpush1.bf16.xpose.msra.mxu0 0
        %1959 = vmatprep.subr.bf16.mxu0 0
        %1960 = vmatpush1.bf16.xpose.msra.mxu0 0
        %1961 = vmatprep.subr.bf16.mxu0 0
        %1962 = vmatpush1.bf16.xpose.msra.mxu0 0
        %1963 = vmatprep.subr.bf16.mxu0 0
        %1964 = vmatpush1.bf16.xpose.msra.mxu0 0
        %1965 = vmatprep.subr.bf16.mxu0 0
        %1966 = vmatpush1.bf16.xpose.msra.mxu0 0
        %1967 = vmatprep.subr.bf16.mxu0 0
        %1968 = vmatpush1.bf16.xpose.msra.mxu0 0
        %1969 = vmatprep.subr.bf16.mxu0 0
        %1970 = vmatpush1.bf16.xpose.msra.mxu0 0
        %1971 = vmatprep.subr.bf16.mxu0 0
        %1972 = vmatpush1.bf16.xpose.msra.mxu0 0
        %1973 = vmatprep.subr.bf16.mxu0 0
        %1974 = vmatpush1.bf16.xpose.msra.mxu0 0
        %1975 = vmatprep.subr.bf16.mxu0 0
        %1976 = vmatpush1.bf16.xpose.msra.mxu0 0
        %1977 = vmatprep.subr.bf16.mxu0 0
        %1978 = vmatpush1.bf16.xpose.msra.mxu0 0
        %1979 = vmatprep.mubr.bf16.mxu0 0
        %1980 = vmatmul.mubr.bf16.gmra.mrb[0].mxu0 %v1942
        %v1981 = vpop.f32.mrb[0].mxu0
        %v1982 = vadd.f32 %v896, %v1981
        %v1983 = vpop.f32.mrb[0].mxu0
        %v1984 = vpop.f32.mrb[0].mxu0
        %v1985 = vpop.f32.mrb[0].mxu0
        %1986 = vdwg.mxu0
        %v1987 = vsel %vm1021, %v1982, -inf
        %1988 = vmax.xlane.f32.xlu0 %v1987
        %v1989 = vpop.xlane.xlu0 %1988
        %v1990 = vsub.f32 %v1982, %v1989
        %v1991 = vmul.f32 %v1990, 1.442695
        %v1992 = vpow.pop %v1991
        %v1993 = vsel %vm1021, %v1992, 0.0
        %1994 = vadd.xlane.f32.xlu0 %v1993
        %v1995 = vpop.xlane.xlu0 %1994
        %v1996 = vrcp.pop %v1995
        %v1997 = vmul.f32 %v1992, %v1996
        %v1998 = vpack.c.bf16 %v1997, %v1997
        %2000 = vrot.lane.b32.xlu0 %v1829, 120
        %v2001 = vpop.permute.xlu0 %2000
        %v2003 = vsel %vm1021, %v1998, 0
        %v2006 = vsel %vm1083, %v2001, 0
        %2008 = vmatprep.subr.bf16.mxu0 0
        %2009 = vmatpush1.bf16.msra.mxu0 %v2006
        %2010 = vmatprep.subr.bf16.mxu0 0
        %2011 = vmatpush1.bf16.msra.mxu0 0
        %2012 = vmatprep.subr.bf16.mxu0 0
        %2013 = vmatpush1.bf16.msra.mxu0 0
        %2014 = vmatprep.subr.bf16.mxu0 0
        %2015 = vmatpush1.bf16.msra.mxu0 0
        %2016 = vmatprep.subr.bf16.mxu0 0
        %2017 = vmatpush1.bf16.msra.mxu0 0
        %2018 = vmatprep.subr.bf16.mxu0 0
        %2019 = vmatpush1.bf16.msra.mxu0 0
        %2020 = vmatprep.subr.bf16.mxu0 0
        %2021 = vmatpush1.bf16.msra.mxu0 0
        %2022 = vmatprep.subr.bf16.mxu0 0
        %2023 = vmatpush1.bf16.msra.mxu0 0
        %2024 = vmatprep.subr.bf16.mxu0 0
        %2025 = vmatpush1.bf16.msra.mxu0 0
        %2026 = vmatprep.subr.bf16.mxu0 0
        %2027 = vmatpush1.bf16.msra.mxu0 0
        %2028 = vmatprep.subr.bf16.mxu0 0
        %2029 = vmatpush1.bf16.msra.mxu0 0
        %2030 = vmatprep.subr.bf16.mxu0 0
        %2031 = vmatpush1.bf16.msra.mxu0 0
        %2032 = vmatprep.subr.bf16.mxu0 0
        %2033 = vmatpush1.bf16.msra.mxu0 0
        %2034 = vmatprep.subr.bf16.mxu0 0
        %2035 = vmatpush1.bf16.msra.mxu0 0
        %2036 = vmatprep.subr.bf16.mxu0 0
        %2037 = vmatpush1.bf16.msra.mxu0 0
        %2038 = vmatprep.subr.bf16.mxu0 0
        %2039 = vmatpush1.bf16.msra.mxu0 0
        %2040 = vmatprep.mubr.bf16.mxu0 0
        %2041 = vmatmul.mubr.bf16.gmra.mrb[0].mxu0 %v2003
        %v2042 = vpop.f32.mrb[0].mxu0
        %v2043 = vadd.f32 0.0, %v2042
        %v2044 = vpop.f32.mrb[0].mxu0
        %v2045 = vpop.f32.mrb[0].mxu0
        %v2046 = vpop.f32.mrb[0].mxu0
        %2047 = vdwg.mxu0
        %v2048 = vpack.c.bf16 %v2043, %v2043
        %v2050 = vsel %vm1021, %v2048, 0
        %v2053 = vsel %vm1083, %v1673, 0
        %2055 = vmatprep.subr.bf16.mxu0 0
        %2056 = vmatpush1.bf16.msra.mxu0 %v2053
        %2057 = vmatprep.subr.bf16.mxu0 0
        %2058 = vmatpush1.bf16.msra.mxu0 0
        %2059 = vmatprep.subr.bf16.mxu0 0
        %2060 = vmatpush1.bf16.msra.mxu0 0
        %2061 = vmatprep.subr.bf16.mxu0 0
        %2062 = vmatpush1.bf16.msra.mxu0 0
        %2063 = vmatprep.subr.bf16.mxu0 0
        %2064 = vmatpush1.bf16.msra.mxu0 0
        %2065 = vmatprep.subr.bf16.mxu0 0
        %2066 = vmatpush1.bf16.msra.mxu0 0
        %2067 = vmatprep.subr.bf16.mxu0 0
        %2068 = vmatpush1.bf16.msra.mxu0 0
        %2069 = vmatprep.subr.bf16.mxu0 0
        %2070 = vmatpush1.bf16.msra.mxu0 0
        %2071 = vmatprep.subr.bf16.mxu0 0
        %2072 = vmatpush1.bf16.msra.mxu0 0
        %2073 = vmatprep.subr.bf16.mxu0 0
        %2074 = vmatpush1.bf16.msra.mxu0 0
        %2075 = vmatprep.subr.bf16.mxu0 0
        %2076 = vmatpush1.bf16.msra.mxu0 0
        %2077 = vmatprep.subr.bf16.mxu0 0
        %2078 = vmatpush1.bf16.msra.mxu0 0
        %2079 = vmatprep.subr.bf16.mxu0 0
        %2080 = vmatpush1.bf16.msra.mxu0 0
        %2081 = vmatprep.subr.bf16.mxu0 0
        %2082 = vmatpush1.bf16.msra.mxu0 0
        %2083 = vmatprep.subr.bf16.mxu0 0
        %2084 = vmatpush1.bf16.msra.mxu0 0
        %2085 = vmatprep.subr.bf16.mxu0 0
        %2086 = vmatpush1.bf16.msra.mxu0 0
        %2087 = vmatprep.mubr.bf16.mxu0 0
        %2088 = vmatmul.mubr.bf16.gmra.mrb[0].mxu0 %v2050
        %v2089 = vpop.f32.mrb[0].mxu0
        %v2090 = vadd.f32 0.0, %v2089
        %v2091 = vpop.f32.mrb[0].mxu0
        %v2092 = vpop.f32.mrb[0].mxu0
        %v2093 = vpop.f32.mrb[0].mxu0
        %2094 = vdwg.mxu0
        %v2096 = vsel %vm1021, %v1934, 0
        %v2099 = vsel %vm1083, %v1672, 0
        %2101 = vmatprep.subr.bf16.mxu0 0
        %2102 = vmatpush1.bf16.msra.mxu0 %v2099
        %2103 = vmatprep.subr.bf16.mxu0 0
        %2104 = vmatpush1.bf16.msra.mxu0 0
        %2105 = vmatprep.subr.bf16.mxu0 0
        %2106 = vmatpush1.bf16.msra.mxu0 0
        %2107 = vmatprep.subr.bf16.mxu0 0
        %2108 = vmatpush1.bf16.msra.mxu0 0
        %2109 = vmatprep.subr.bf16.mxu0 0
        %2110 = vmatpush1.bf16.msra.mxu0 0
        %2111 = vmatprep.subr.bf16.mxu0 0
        %2112 = vmatpush1.bf16.msra.mxu0 0
        %2113 = vmatprep.subr.bf16.mxu0 0
        %2114 = vmatpush1.bf16.msra.mxu0 0
        %2115 = vmatprep.subr.bf16.mxu0 0
        %2116 = vmatpush1.bf16.msra.mxu0 0
        %2117 = vmatprep.subr.bf16.mxu0 0
        %2118 = vmatpush1.bf16.msra.mxu0 0
        %2119 = vmatprep.subr.bf16.mxu0 0
        %2120 = vmatpush1.bf16.msra.mxu0 0
        %2121 = vmatprep.subr.bf16.mxu0 0
        %2122 = vmatpush1.bf16.msra.mxu0 0
        %2123 = vmatprep.subr.bf16.mxu0 0
        %2124 = vmatpush1.bf16.msra.mxu0 0
        %2125 = vmatprep.subr.bf16.mxu0 0
        %2126 = vmatpush1.bf16.msra.mxu0 0
        %2127 = vmatprep.subr.bf16.mxu0 0
        %2128 = vmatpush1.bf16.msra.mxu0 0
        %2129 = vmatprep.subr.bf16.mxu0 0
        %2130 = vmatpush1.bf16.msra.mxu0 0
        %2131 = vmatprep.subr.bf16.mxu0 0
        %2132 = vmatpush1.bf16.msra.mxu0 0
        %2133 = vmatprep.mubr.bf16.mxu0 0
        %2134 = vmatmul.mubr.bf16.gmra.mrb[0].mxu0 %v2096
        %v2135 = vpop.f32.mrb[0].mxu0
        %v2136 = vadd.f32 %v2090, %v2135
        %v2137 = vpop.f32.mrb[0].mxu0
        %v2138 = vpop.f32.mrb[0].mxu0
        %v2139 = vpop.f32.mrb[0].mxu0
        %2140 = vdwg.mxu0
        %2141 = vrot.lane.b32.xlu0 %v1827, 112
        %v2142 = vpop.permute.xlu0 %2141
        %2143 = vrot.lane.b32.xlu0 %v1828, 112
        %v2144 = vpop.permute.xlu0 %2143
        %v2146 = vsel %vm1021, %v2142, 0
        %v2149 = vsel %vm1021, %v2144, 0
        %2151 = vmatprep.subr.bf16.mxu0 0
        %2152 = vmatpush1.bf16.xpose.msra.mxu0 %v2149
        %2153 = vmatprep.subr.bf16.mxu0 0
        %2154 = vmatpush1.bf16.xpose.msra.mxu0 0
        %2155 = vmatprep.subr.bf16.mxu0 0
        %2156 = vmatpush1.bf16.xpose.msra.mxu0 0
        %2157 = vmatprep.subr.bf16.mxu0 0
        %2158 = vmatpush1.bf16.xpose.msra.mxu0 0
        %2159 = vmatprep.subr.bf16.mxu0 0
        %2160 = vmatpush1.bf16.xpose.msra.mxu0 0
        %2161 = vmatprep.subr.bf16.mxu0 0
        %2162 = vmatpush1.bf16.xpose.msra.mxu0 0
        %2163 = vmatprep.subr.bf16.mxu0 0
        %2164 = vmatpush1.bf16.xpose.msra.mxu0 0
        %2165 = vmatprep.subr.bf16.mxu0 0
        %2166 = vmatpush1.bf16.xpose.msra.mxu0 0
        %2167 = vmatprep.subr.bf16.mxu0 0
        %2168 = vmatpush1.bf16.xpose.msra.mxu0 0
        %2169 = vmatprep.subr.bf16.mxu0 0
        %2170 = vmatpush1.bf16.xpose.msra.mxu0 0
        %2171 = vmatprep.subr.bf16.mxu0 0
        %2172 = vmatpush1.bf16.xpose.msra.mxu0 0
        %2173 = vmatprep.subr.bf16.mxu0 0
        %2174 = vmatpush1.bf16.xpose.msra.mxu0 0
        %2175 = vmatprep.subr.bf16.mxu0 0
        %2176 = vmatpush1.bf16.xpose.msra.mxu0 0
        %2177 = vmatprep.subr.bf16.mxu0 0
        %2178 = vmatpush1.bf16.xpose.msra.mxu0 0
        %2179 = vmatprep.subr.bf16.mxu0 0
        %2180 = vmatpush1.bf16.xpose.msra.mxu0 0
        %2181 = vmatprep.subr.bf16.mxu0 0
        %2182 = vmatpush1.bf16.xpose.msra.mxu0 0
        %2183 = vmatprep.mubr.bf16.mxu0 0
        %2184 = vmatmul.mubr.bf16.gmra.mrb[0].mxu0 %v2146
        %v2185 = vpop.f32.mrb[0].mxu0
        %v2186 = vadd.f32 %v896, %v2185
        %v2187 = vpop.f32.mrb[0].mxu0
        %v2188 = vpop.f32.mrb[0].mxu0
        %v2189 = vpop.f32.mrb[0].mxu0
        %2190 = vdwg.mxu0
        %v2191 = vsel %vm1021, %v2186, -inf
        %2192 = vmax.xlane.f32.xlu0 %v2191
        %v2193 = vpop.xlane.xlu0 %2192
        %v2194 = vsub.f32 %v2186, %v2193
        %v2195 = vmul.f32 %v2194, 1.442695
        %v2196 = vpow.pop %v2195
        %v2197 = vsel %vm1021, %v2196, 0.0
        %2198 = vadd.xlane.f32.xlu0 %v2197
        %v2199 = vpop.xlane.xlu0 %2198
        %v2200 = vrcp.pop %v2199
        %v2201 = vmul.f32 %v2196, %v2200
        %v2202 = vpack.c.bf16 %v2201, %v2201
        %2203 = vrot.lane.b32.xlu0 %v1829, 112
        %v2204 = vpop.permute.xlu0 %2203
        %v2206 = vsel %vm1021, %v2202, 0
        %v2209 = vsel %vm1083, %v2204, 0
        %2211 = vmatprep.subr.bf16.mxu0 0
        %2212 = vmatpush1.bf16.msra.mxu0 %v2209
        %2213 = vmatprep.subr.bf16.mxu0 0
        %2214 = vmatpush1.bf16.msra.mxu0 0
        %2215 = vmatprep.subr.bf16.mxu0 0
        %2216 = vmatpush1.bf16.msra.mxu0 0
        %2217 = vmatprep.subr.bf16.mxu0 0
        %2218 = vmatpush1.bf16.msra.mxu0 0
        %2219 = vmatprep.subr.bf16.mxu0 0
        %2220 = vmatpush1.bf16.msra.mxu0 0
        %2221 = vmatprep.subr.bf16.mxu0 0
        %2222 = vmatpush1.bf16.msra.mxu0 0
        %2223 = vmatprep.subr.bf16.mxu0 0
        %2224 = vmatpush1.bf16.msra.mxu0 0
        %2225 = vmatprep.subr.bf16.mxu0 0
        %2226 = vmatpush1.bf16.msra.mxu0 0
        %2227 = vmatprep.subr.bf16.mxu0 0
        %2228 = vmatpush1.bf16.msra.mxu0 0
        %2229 = vmatprep.subr.bf16.mxu0 0
        %2230 = vmatpush1.bf16.msra.mxu0 0
        %2231 = vmatprep.subr.bf16.mxu0 0
        %2232 = vmatpush1.bf16.msra.mxu0 0
        %2233 = vmatprep.subr.bf16.mxu0 0
        %2234 = vmatpush1.bf16.msra.mxu0 0
        %2235 = vmatprep.subr.bf16.mxu0 0
        %2236 = vmatpush1.bf16.msra.mxu0 0
        %2237 = vmatprep.subr.bf16.mxu0 0
        %2238 = vmatpush1.bf16.msra.mxu0 0
        %2239 = vmatprep.subr.bf16.mxu0 0
        %2240 = vmatpush1.bf16.msra.mxu0 0
        %2241 = vmatprep.subr.bf16.mxu0 0
        %2242 = vmatpush1.bf16.msra.mxu0 0
        %2243 = vmatprep.mubr.bf16.mxu0 0
        %2244 = vmatmul.mubr.bf16.gmra.mrb[0].mxu0 %v2206
        %v2245 = vpop.f32.mrb[0].mxu0
        %v2246 = vadd.f32 0.0, %v2245
        %v2247 = vpop.f32.mrb[0].mxu0
        %v2248 = vpop.f32.mrb[0].mxu0
        %v2249 = vpop.f32.mrb[0].mxu0
        %2250 = vdwg.mxu0
        %v2251 = vpack.c.bf16 %v2246, %v2246
        %v2253 = vsel %vm1021, %v2251, 0
        %v2256 = vsel %vm1083, %v1674, 0
        %2258 = vmatprep.subr.bf16.mxu0 0
        %2259 = vmatpush1.bf16.msra.mxu0 %v2256
        %2260 = vmatprep.subr.bf16.mxu0 0
        %2261 = vmatpush1.bf16.msra.mxu0 0
        %2262 = vmatprep.subr.bf16.mxu0 0
        %2263 = vmatpush1.bf16.msra.mxu0 0
        %2264 = vmatprep.subr.bf16.mxu0 0
        %2265 = vmatpush1.bf16.msra.mxu0 0
        %2266 = vmatprep.subr.bf16.mxu0 0
        %2267 = vmatpush1.bf16.msra.mxu0 0
        %2268 = vmatprep.subr.bf16.mxu0 0
        %2269 = vmatpush1.bf16.msra.mxu0 0
        %2270 = vmatprep.subr.bf16.mxu0 0
        %2271 = vmatpush1.bf16.msra.mxu0 0
        %2272 = vmatprep.subr.bf16.mxu0 0
        %2273 = vmatpush1.bf16.msra.mxu0 0
        %2274 = vmatprep.subr.bf16.mxu0 0
        %2275 = vmatpush1.bf16.msra.mxu0 0
        %2276 = vmatprep.subr.bf16.mxu0 0
        %2277 = vmatpush1.bf16.msra.mxu0 0
        %2278 = vmatprep.subr.bf16.mxu0 0
        %2279 = vmatpush1.bf16.msra.mxu0 0
        %2280 = vmatprep.subr.bf16.mxu0 0
        %2281 = vmatpush1.bf16.msra.mxu0 0
        %2282 = vmatprep.subr.bf16.mxu0 0
        %2283 = vmatpush1.bf16.msra.mxu0 0
        %2284 = vmatprep.subr.bf16.mxu0 0
        %2285 = vmatpush1.bf16.msra.mxu0 0
        %2286 = vmatprep.subr.bf16.mxu0 0
        %2287 = vmatpush1.bf16.msra.mxu0 0
        %2288 = vmatprep.subr.bf16.mxu0 0
        %2289 = vmatpush1.bf16.msra.mxu0 0
        %2290 = vmatprep.mubr.bf16.mxu0 0
        %2291 = vmatmul.mubr.bf16.gmra.mrb[0].mxu0 %v2253
        %v2292 = vpop.f32.mrb[0].mxu0
        %v2293 = vadd.f32 0.0, %v2292
        %v2294 = vpop.f32.mrb[0].mxu0
        %v2295 = vpop.f32.mrb[0].mxu0
        %v2296 = vpop.f32.mrb[0].mxu0
        %2297 = vdwg.mxu0
        %v2298 = vadd.f32 %v2136, %v2293
        %2299 = vrot.lane.b32.xlu0 %v1827, 104
        %v2300 = vpop.permute.xlu0 %2299
        %2301 = vrot.lane.b32.xlu0 %v1828, 104
        %v2302 = vpop.permute.xlu0 %2301
        %v2304 = vsel %vm1021, %v2300, 0
        %v2307 = vsel %vm1021, %v2302, 0
        %2309 = vmatprep.subr.bf16.mxu0 0
        %2310 = vmatpush1.bf16.xpose.msra.mxu0 %v2307
        %2311 = vmatprep.subr.bf16.mxu0 0
        %2312 = vmatpush1.bf16.xpose.msra.mxu0 0
        %2313 = vmatprep.subr.bf16.mxu0 0
        %2314 = vmatpush1.bf16.xpose.msra.mxu0 0
        %2315 = vmatprep.subr.bf16.mxu0 0
        %2316 = vmatpush1.bf16.xpose.msra.mxu0 0
        %2317 = vmatprep.subr.bf16.mxu0 0
        %2318 = vmatpush1.bf16.xpose.msra.mxu0 0
        %2319 = vmatprep.subr.bf16.mxu0 0
        %2320 = vmatpush1.bf16.xpose.msra.mxu0 0
        %2321 = vmatprep.subr.bf16.mxu0 0
        %2322 = vmatpush1.bf16.xpose.msra.mxu0 0
        %2323 = vmatprep.subr.bf16.mxu0 0
        %2324 = vmatpush1.bf16.xpose.msra.mxu0 0
        %2325 = vmatprep.subr.bf16.mxu0 0
        %2326 = vmatpush1.bf16.xpose.msra.mxu0 0
        %2327 = vmatprep.subr.bf16.mxu0 0
        %2328 = vmatpush1.bf16.xpose.msra.mxu0 0
        %2329 = vmatprep.subr.bf16.mxu0 0
        %2330 = vmatpush1.bf16.xpose.msra.mxu0 0
        %2331 = vmatprep.subr.bf16.mxu0 0
        %2332 = vmatpush1.bf16.xpose.msra.mxu0 0
        %2333 = vmatprep.subr.bf16.mxu0 0
        %2334 = vmatpush1.bf16.xpose.msra.mxu0 0
        %2335 = vmatprep.subr.bf16.mxu0 0
        %2336 = vmatpush1.bf16.xpose.msra.mxu0 0
        %2337 = vmatprep.subr.bf16.mxu0 0
        %2338 = vmatpush1.bf16.xpose.msra.mxu0 0
        %2339 = vmatprep.subr.bf16.mxu0 0
        %2340 = vmatpush1.bf16.xpose.msra.mxu0 0
        %2341 = vmatprep.mubr.bf16.mxu0 0
        %2342 = vmatmul.mubr.bf16.gmra.mrb[0].mxu0 %v2304
        %v2343 = vpop.f32.mrb[0].mxu0
        %v2344 = vadd.f32 %v896, %v2343
        %v2345 = vpop.f32.mrb[0].mxu0
        %v2346 = vpop.f32.mrb[0].mxu0
        %v2347 = vpop.f32.mrb[0].mxu0
        %2348 = vdwg.mxu0
        %v2349 = vsel %vm1021, %v2344, -inf
        %2350 = vmax.xlane.f32.xlu0 %v2349
        %v2351 = vpop.xlane.xlu0 %2350
        %v2352 = vsub.f32 %v2344, %v2351
        %v2353 = vmul.f32 %v2352, 1.442695
        %v2354 = vpow.pop %v2353
        %v2355 = vsel %vm1021, %v2354, 0.0
        %2356 = vadd.xlane.f32.xlu0 %v2355
        %v2357 = vpop.xlane.xlu0 %2356
        %v2358 = vrcp.pop %v2357
        %v2359 = vmul.f32 %v2354, %v2358
        %v2360 = vpack.c.bf16 %v2359, %v2359
        %2361 = vrot.lane.b32.xlu0 %v1829, 104
        %v2362 = vpop.permute.xlu0 %2361
        %v2364 = vsel %vm1021, %v2360, 0
        %v2367 = vsel %vm1083, %v2362, 0
        %2369 = vmatprep.subr.bf16.mxu0 0
        %2370 = vmatpush1.bf16.msra.mxu0 %v2367
        %2371 = vmatprep.subr.bf16.mxu0 0
        %2372 = vmatpush1.bf16.msra.mxu0 0
        %2373 = vmatprep.subr.bf16.mxu0 0
        %2374 = vmatpush1.bf16.msra.mxu0 0
        %2375 = vmatprep.subr.bf16.mxu0 0
        %2376 = vmatpush1.bf16.msra.mxu0 0
        %2377 = vmatprep.subr.bf16.mxu0 0
        %2378 = vmatpush1.bf16.msra.mxu0 0
        %2379 = vmatprep.subr.bf16.mxu0 0
        %2380 = vmatpush1.bf16.msra.mxu0 0
        %2381 = vmatprep.subr.bf16.mxu0 0
        %2382 = vmatpush1.bf16.msra.mxu0 0
        %2383 = vmatprep.subr.bf16.mxu0 0
        %2384 = vmatpush1.bf16.msra.mxu0 0
        %2385 = vmatprep.subr.bf16.mxu0 0
        %2386 = vmatpush1.bf16.msra.mxu0 0
        %2387 = vmatprep.subr.bf16.mxu0 0
        %2388 = vmatpush1.bf16.msra.mxu0 0
        %2389 = vmatprep.subr.bf16.mxu0 0
        %2390 = vmatpush1.bf16.msra.mxu0 0
        %2391 = vmatprep.subr.bf16.mxu0 0
        %2392 = vmatpush1.bf16.msra.mxu0 0
        %2393 = vmatprep.subr.bf16.mxu0 0
        %2394 = vmatpush1.bf16.msra.mxu0 0
        %2395 = vmatprep.subr.bf16.mxu0 0
        %2396 = vmatpush1.bf16.msra.mxu0 0
        %2397 = vmatprep.subr.bf16.mxu0 0
        %2398 = vmatpush1.bf16.msra.mxu0 0
        %2399 = vmatprep.subr.bf16.mxu0 0
        %2400 = vmatpush1.bf16.msra.mxu0 0
        %2401 = vmatprep.mubr.bf16.mxu0 0
        %2402 = vmatmul.mubr.bf16.gmra.mrb[0].mxu0 %v2364
        %v2403 = vpop.f32.mrb[0].mxu0
        %v2404 = vadd.f32 0.0, %v2403
        %v2405 = vpop.f32.mrb[0].mxu0
        %v2406 = vpop.f32.mrb[0].mxu0
        %v2407 = vpop.f32.mrb[0].mxu0
        %2408 = vdwg.mxu0
        %v2409 = vpack.c.bf16 %v2404, %v2404
        %v2411 = vsel %vm1021, %v2409, 0
        %v2414 = vsel %vm1083, %v1675, 0
        %2416 = vmatprep.subr.bf16.mxu0 0
        %2417 = vmatpush1.bf16.msra.mxu0 %v2414
        %2418 = vmatprep.subr.bf16.mxu0 0
        %2419 = vmatpush1.bf16.msra.mxu0 0
        %2420 = vmatprep.subr.bf16.mxu0 0
        %2421 = vmatpush1.bf16.msra.mxu0 0
        %2422 = vmatprep.subr.bf16.mxu0 0
        %2423 = vmatpush1.bf16.msra.mxu0 0
        %2424 = vmatprep.subr.bf16.mxu0 0
        %2425 = vmatpush1.bf16.msra.mxu0 0
        %2426 = vmatprep.subr.bf16.mxu0 0
        %2427 = vmatpush1.bf16.msra.mxu0 0
        %2428 = vmatprep.subr.bf16.mxu0 0
        %2429 = vmatpush1.bf16.msra.mxu0 0
        %2430 = vmatprep.subr.bf16.mxu0 0
        %2431 = vmatpush1.bf16.msra.mxu0 0
        %2432 = vmatprep.subr.bf16.mxu0 0
        %2433 = vmatpush1.bf16.msra.mxu0 0
        %2434 = vmatprep.subr.bf16.mxu0 0
        %2435 = vmatpush1.bf16.msra.mxu0 0
        %2436 = vmatprep.subr.bf16.mxu0 0
        %2437 = vmatpush1.bf16.msra.mxu0 0
        %2438 = vmatprep.subr.bf16.mxu0 0
        %2439 = vmatpush1.bf16.msra.mxu0 0
        %2440 = vmatprep.subr.bf16.mxu0 0
        %2441 = vmatpush1.bf16.msra.mxu0 0
        %2442 = vmatprep.subr.bf16.mxu0 0
        %2443 = vmatpush1.bf16.msra.mxu0 0
        %2444 = vmatprep.subr.bf16.mxu0 0
        %2445 = vmatpush1.bf16.msra.mxu0 0
        %2446 = vmatprep.subr.bf16.mxu0 0
        %2447 = vmatpush1.bf16.msra.mxu0 0
        %2448 = vmatprep.mubr.bf16.mxu0 0
        %2449 = vmatmul.mubr.bf16.gmra.mrb[0].mxu0 %v2411
        %v2450 = vpop.f32.mrb[0].mxu0
        %v2451 = vadd.f32 0.0, %v2450
        %v2452 = vpop.f32.mrb[0].mxu0
        %v2453 = vpop.f32.mrb[0].mxu0
        %v2454 = vpop.f32.mrb[0].mxu0
        %2455 = vdwg.mxu0
        %v2456 = vadd.f32 %v2298, %v2451
        %v2457 = vadd.f32 %v2456, %v1663
        %v2458 = vsel %vm923, %v2457, 0.0
        %2459 = vadd.xlane.f32.xlu0 %v2458
        %v2460 = vpop.xlane.xlu0 %2459
        %v2461 = vmul.f32 %v2460, %v1643
        %v2462 = vsub.f32 %v2457, %v2461
        %v2463 = vmul.f32 %v2462, %v2462
        %v2464 = vsel %vm923, %v2463, 0.0
        %2465 = vadd.xlane.f32.xlu0 %v2464
        %v2466 = vpop.xlane.xlu0 %2465
        %v2467 = vmul.f32 %v2466, %v1643
        %v2468 = vadd.f32 %v2467, 1e-05
        %v2469 = vrsqrt.pop %v2468
        %v2470 = vmul.f32 %v2462, %v2469
        %v2471 = vlaneseq
        %v2472 = vshrl.u32 %v2471, 7
        %v2473 = vsub.s32 2, %v2472
        %v2474 = vrot.slane %v897, %v2473
        %v2475 = vmul.f32 %v2470, %v2474
        %v2476 = vlaneseq
        %v2477 = vshrl.u32 %v2476, 7
        %v2478 = vsub.s32 3, %v2477
        %v2479 = vrot.slane %v897, %v2478
        %v2480 = vadd.f32 %v2475, %v2479
        %v2481 = vpack.c.bf16 %v2480, %v2480
        %v2482 = vld [vmem:[%s745] sm:$0xf]
        %v2483 = vld [vmem:[%s745 + $0x4] sm:$0xf]
        %v2484 = vld [vmem:[%s745 + $0x8] sm:$0xf]
        %v2485 = vld [vmem:[%s745 + $0xc] sm:$0xf]
        %v2486 = vld [vmem:[%s753] sm:$0x1]
        %v2488 = vlaneseq
        %v2489 = vshrl.u32 %v2488, 7
        %v2490 = vsub.s32 0, %v2489
        %v2491 = vrot.slane %v2486, %v2490
        %v2497 = vunpack.c.l.b16 %v2482
        %v2498 = vunpack.c.l.b16 %v2483
        %v2499 = vunpack.c.l.b16 %v2484
        %v2500 = vunpack.c.l.b16 %v2485
        %v2501 = vpack.c.b16 %v2498, %v2497
        %v2502 = vpack.c.b16 %v2500, %v2499
        %v2506 = vsel %vm923, %v2481, 0
        %2508 = vmatprep.subr.bf16.mxu0 0
        %2509 = vmatpush1.bf16.msra.mxu0 %v2501
        %2510 = vmatprep.subr.bf16.mxu0 0
        %2511 = vmatpush1.bf16.msra.mxu0 %v2502
        %2512 = vmatprep.subr.bf16.mxu0 0
        %2513 = vmatpush1.bf16.msra.mxu0 0
        %2514 = vmatprep.subr.bf16.mxu0 0
        %2515 = vmatpush1.bf16.msra.mxu0 0
        %2516 = vmatprep.subr.bf16.mxu0 0
        %2517 = vmatpush1.bf16.msra.mxu0 0
        %2518 = vmatprep.subr.bf16.mxu0 0
        %2519 = vmatpush1.bf16.msra.mxu0 0
        %2520 = vmatprep.subr.bf16.mxu0 0
        %2521 = vmatpush1.bf16.msra.mxu0 0
        %2522 = vmatprep.subr.bf16.mxu0 0
        %2523 = vmatpush1.bf16.msra.mxu0 0
        %2524 = vmatprep.subr.bf16.mxu0 0
        %2525 = vmatpush1.bf16.msra.mxu0 0
        %2526 = vmatprep.subr.bf16.mxu0 0
        %2527 = vmatpush1.bf16.msra.mxu0 0
        %2528 = vmatprep.subr.bf16.mxu0 0
        %2529 = vmatpush1.bf16.msra.mxu0 0
        %2530 = vmatprep.subr.bf16.mxu0 0
        %2531 = vmatpush1.bf16.msra.mxu0 0
        %2532 = vmatprep.subr.bf16.mxu0 0
        %2533 = vmatpush1.bf16.msra.mxu0 0
        %2534 = vmatprep.subr.bf16.mxu0 0
        %2535 = vmatpush1.bf16.msra.mxu0 0
        %2536 = vmatprep.subr.bf16.mxu0 0
        %2537 = vmatpush1.bf16.msra.mxu0 0
        %2538 = vmatprep.subr.bf16.mxu0 0
        %2539 = vmatpush1.bf16.msra.mxu0 0
        %2540 = vmatprep.mubr.bf16.mxu0 0
        %2541 = vmatmul.mubr.bf16.gmra.mrb[0].mxu0 %v2506
        %v2542 = vpop.f32.mrb[0].mxu0
        %v2543 = vadd.f32 %v2491, %v2542
        %v2544 = vpop.f32.mrb[0].mxu0
        %v2545 = vpop.f32.mrb[0].mxu0
        %v2546 = vpop.f32.mrb[0].mxu0
        %2547 = vdwg.mxu0
        %v2548 = vmax.f32 %v2543, 0.0
        %v2549 = vpack.c.bf16 %v2548, %v2548
        %v2550 = vld [vmem:[%s880] sm:$0xf]
        %v2551 = vld [vmem:[%s880 + $0x4] sm:$0xf]
        %v2552 = vld [vmem:[%s880 + $0x8] sm:$0xf]
        %v2553 = vld [vmem:[%s880 + $0xc] sm:$0xf]
        %v2554 = vld [vmem:[%s880 + $0x10] sm:$0xf]
        %v2555 = vld [vmem:[%s880 + $0x14] sm:$0xf]
        %v2556 = vld [vmem:[%s880 + $0x18] sm:$0xf]
        %v2557 = vld [vmem:[%s880 + $0x1c] sm:$0xf]
        %v2558 = vlaneseq
        %v2559 = vshrl.u32 %v2558, 7
        %v2560 = vsub.s32 6, %v2559
        %v2561 = vrot.slane %v897, %v2560
        %v2570 = vunpack.c.l.b16 %v2550
        %v2571 = vunpack.c.l.b16 %v2551
        %v2572 = vunpack.c.l.b16 %v2552
        %v2573 = vunpack.c.l.b16 %v2553
        %v2574 = vunpack.c.l.b16 %v2554
        %v2575 = vunpack.c.l.b16 %v2555
        %v2576 = vunpack.c.l.b16 %v2556
        %v2577 = vunpack.c.l.b16 %v2557
        %v2578 = vpack.c.b16 %v2571, %v2570
        %v2579 = vpack.c.b16 %v2573, %v2572
        %v2580 = vpack.c.b16 %v2575, %v2574
        %v2581 = vpack.c.b16 %v2577, %v2576
        %vm2586 = vcmask 523264
        %v2588 = vsel %vm2586, %v2549, 0
        %2590 = vmatprep.subr.bf16.mxu0 0
        %2591 = vmatpush1.bf16.msra.mxu0 %v2578
        %2592 = vmatprep.subr.bf16.mxu0 0
        %2593 = vmatpush1.bf16.msra.mxu0 %v2579
        %2594 = vmatprep.subr.bf16.mxu0 0
        %2595 = vmatpush1.bf16.msra.mxu0 %v2580
        %2596 = vmatprep.subr.bf16.mxu0 0
        %2597 = vmatpush1.bf16.msra.mxu0 %v2581
        %2598 = vmatprep.subr.bf16.mxu0 0
        %2599 = vmatpush1.bf16.msra.mxu0 0
        %2600 = vmatprep.subr.bf16.mxu0 0
        %2601 = vmatpush1.bf16.msra.mxu0 0
        %2602 = vmatprep.subr.bf16.mxu0 0
        %2603 = vmatpush1.bf16.msra.mxu0 0
        %2604 = vmatprep.subr.bf16.mxu0 0
        %2605 = vmatpush1.bf16.msra.mxu0 0
        %2606 = vmatprep.subr.bf16.mxu0 0
        %2607 = vmatpush1.bf16.msra.mxu0 0
        %2608 = vmatprep.subr.bf16.mxu0 0
        %2609 = vmatpush1.bf16.msra.mxu0 0
        %2610 = vmatprep.subr.bf16.mxu0 0
        %2611 = vmatpush1.bf16.msra.mxu0 0
        %2612 = vmatprep.subr.bf16.mxu0 0
        %2613 = vmatpush1.bf16.msra.mxu0 0
        %2614 = vmatprep.subr.bf16.mxu0 0
        %2615 = vmatpush1.bf16.msra.mxu0 0
        %2616 = vmatprep.subr.bf16.mxu0 0
        %2617 = vmatpush1.bf16.msra.mxu0 0
        %2618 = vmatprep.subr.bf16.mxu0 0
        %2619 = vmatpush1.bf16.msra.mxu0 0
        %2620 = vmatprep.subr.bf16.mxu0 0
        %2621 = vmatpush1.bf16.msra.mxu0 0
        %2622 = vmatprep.mubr.bf16.mxu0 0
        %2623 = vmatmul.mubr.bf16.gmra.mrb[0].mxu0 %v2588
        %v2624 = vpop.f32.mrb[0].mxu0
        %v2625 = vadd.f32 %v2561, %v2624
        %v2626 = vpop.f32.mrb[0].mxu0
        %v2627 = vpop.f32.mrb[0].mxu0
        %v2628 = vpop.f32.mrb[0].mxu0
        %2629 = vdwg.mxu0
        %v2630 = vadd.f32 %v2625, %v2480
        %v2631 = vsel %vm923, %v2630, 0.0
        %2632 = vadd.xlane.f32.xlu0 %v2631
        %v2633 = vpop.xlane.xlu0 %2632
        %v2634 = vmul.f32 %v2633, %v1643
        %v2635 = vsub.f32 %v2630, %v2634
        %v2636 = vmul.f32 %v2635, %v2635
        %v2637 = vsel %vm923, %v2636, 0.0
        %2638 = vadd.xlane.f32.xlu0 %v2637
        %v2639 = vpop.xlane.xlu0 %2638
        %v2640 = vmul.f32 %v2639, %v1643
        %v2641 = vadd.f32 %v2640, 1e-05
        %v2642 = vrsqrt.pop %v2641
        %v2643 = vmul.f32 %v2635, %v2642
        %v2644 = vlaneseq
        %v2645 = vshrl.u32 %v2644, 7
        %v2646 = vsub.s32 4, %v2645
        %v2647 = vrot.slane %v897, %v2646
        %v2648 = vmul.f32 %v2643, %v2647
        %v2649 = vlaneseq
        %v2650 = vshrl.u32 %v2649, 7
        %v2651 = vsub.s32 5, %v2650
        %v2652 = vrot.slane %v897, %v2651
        %v2653 = vadd.f32 %v2648, %v2652
        %2654 = vst.msk [vmem:[%s860] sm:$0xff] %vm923, %v2653
        %s2655 = sand.u32 %s427, 1
        %s2656 = scalar_lea.sflag [#allocation4], %s2655
        %s2657 = sand.u32 %s427, 1
        %s2658 = smul.addr %s2657, 8
        %s2659 = scalar_lea.vmem [#allocation17], %s2658
        // Predicated region
        $region117: #{tpu_custom_call.1} parent=75 // pred_check
          %p2660 = pneg %p437
        $region118: #{tpu_custom_call.1} parent=75 // pred_check_branch
          %2662 = sbr.rel (%p2660) target = $region120
        $region119: #{tpu_custom_call.1} parent=75 // pred_region
          %s2664 = ssub.s32 128, 128
          %2665 = vsyncadd %s2656, %s2664
          %s2666 = smul.addr %s47, 128
          %s2667 = scalar_lea.hbm %s14, %s2666
          %s2669 = sshll.u32 %s2659, 4
          %s2670 = int_to_ptr.vmem [resolvable:$true] %s2669
          %2672 = dma.vmem_to_hbm [thread:$0]  %s2670, 128, %s2667, %s2656
        $region120: #{tpu_custom_call.1} parent=75 // pred_fallthru
          _
      $region76: #{tpu_custom_call.1} parent=5 // pred_fallthru
        _
      %p2673 = scmp.le.s32.totalorder 2, %s38
      // Predicated region
      $region121: #{tpu_custom_call.1} parent=5 // pred_check
        %p2674 = pneg %p2673
      $region122: #{tpu_custom_call.1} parent=5 // pred_check_branch
        %2676 = sbr.rel (%p2674) target = $region124
      $region123: #{tpu_custom_call.1} parent=5 // pred_region
        %s2677 = ssub.s32 %s38, 2
        // Predicated region
        $region125: #{tpu_custom_call.1} parent=123 // pred_check
          %p2678 = pneg %p443
        $region126: #{tpu_custom_call.1} parent=123 // pred_check_branch
          %2680 = sbr.rel (%p2678) target = $region128
        $region127: #{tpu_custom_call.1} parent=123 // pred_region
          %s2681 = sand.u32 %s428, 1
          %s2682 = scalar_lea.sflag [#allocation4], %s2681
          %s2683 = sand.u32 %s428, 1
          %s2684 = smul.addr %s2683, 8
          %s2685 = scalar_lea.vmem [#allocation17], %s2684
          %2686 = dma.done %s2682, 128
        $region128: #{tpu_custom_call.1} parent=123 // pred_fallthru
          _
      $region124: #{tpu_custom_call.1} parent=5 // pred_fallthru
        _
    $region6: #{tpu_custom_call.1} parent=1 // loop_footer
      %s42 = sadd.s32 1, %s38
    $region7: #{tpu_custom_call.1} parent=1 // loop_footer_branch
      %37 = sbr.rel target = $region3
    $region8: #{tpu_custom_call.1} parent=1 // loop_exit
      _
    %2687 = vsyncpa [#allocation3], 1
    %s2688 = scalar_lea.sflag [#allocation3], 1
    %2689 = vsyncpa %s2688, 1
    %2690 = vsyncpa [#allocation6], 1
    %s2691 = scalar_lea.sflag [#allocation6], 1
    %2692 = vsyncpa %s2691, 1
    %2693 = vsyncpa [#allocation9], 1
    %s2694 = scalar_lea.sflag [#allocation9], 1
    %2695 = vsyncpa %s2694, 1
    %2696 = vsyncpa [#allocation12], 1
    %s2697 = scalar_lea.sflag [#allocation12], 1
    %2698 = vsyncpa %s2697, 1
    %2699 = vsyncpa [#allocation15], 1
    %s2700 = scalar_lea.sflag [#allocation15], 1
    %2701 = vsyncpa %s2700, 1
    %2702 = vsyncpa [#allocation4], 1
    %s2703 = scalar_lea.sflag [#allocation4], 1
    %2704 = vsyncpa %s2703, 1

</llo_original>
